<compile_context>
chip_gen: v7x
topology: tpu7x:2x2x1
jax: 0.10.0
libtpu: 0.0.40
codegen_flags: <defaults>
</compile_context>

<pallas_src>
import math

import jax
import jax.numpy as jnp
from jax import lax
from jax.experimental import pallas as pl
from jax.experimental.pallas import tpu as pltpu


# ----------------------------------------------------------------------------
# helpers
# ----------------------------------------------------------------------------
def _round_up(x, m):
    return ((x + m - 1) // m) * m


def _pick_chunk(L, target):
    """Largest multiple of 8 that divides L and is <= target."""
    cap = max(8, min(target, L))
    cap -= cap % 8
    for cand in range(cap, 7, -8):
        if L % cand == 0:
            return cand
    return 8


def _pick_dtile(D, d_tile):
    if d_tile is None:
        if D % 256 == 0:
            d_tile = 256
        elif D % 128 == 0:
            d_tile = 128
        else:
            d_tile = D
    assert D % d_tile == 0
    assert (d_tile % 128 == 0) or (d_tile == D)
    return d_tile


# ----------------------------------------------------------------------------
# Kernel 1: batched matmul  (G, M, K) @ (G, K, N) -> (G, M, N), f32 accumulate.
#   Operand dtype is chosen by the caller (bf16 casts happen in the wrapper).
#   M / K / N are padded in the wrapper (lane-dense output, no huge fallback
#   tile), both grid axes are 'parallel'.
# ----------------------------------------------------------------------------
def _bmm_kernel(a_ref, b_ref, o_ref):
    o_ref[0] = jnp.dot(a_ref[0], b_ref[0], preferred_element_type=jnp.float32)


def pallas_bmm(a, b, *, tm_target=256):
    G, M, Kd = a.shape
    _, _, N = b.shape
    Kp = _round_up(Kd, 16)
    Np = _round_up(N, 128)                    # lane-dense output stores
    if Kp != Kd:
        a = jnp.pad(a, ((0, 0), (0, 0), (0, Kp - Kd)))
        b = jnp.pad(b, ((0, 0), (0, Kp - Kd), (0, 0)))
    if Np != N:
        b = jnp.pad(b, ((0, 0), (0, 0), (0, Np - N)))
    tm = min(tm_target, _round_up(M, 8))
    Mp = _round_up(M, tm)                     # no single-huge-block fallback
    if Mp != M:
        a = jnp.pad(a, ((0, 0), (0, Mp - M), (0, 0)))
    out = pl.pallas_call(
        _bmm_kernel,
        out_shape=jax.ShapeDtypeStruct((G, Mp, Np), jnp.float32),
        grid=(G, Mp // tm),
        in_specs=[
            pl.BlockSpec((1, tm, Kp), lambda g, i: (g, i, 0)),
            pl.BlockSpec((1, Kp, Np), lambda g, i: (g, 0, 0)),
        ],
        out_specs=pl.BlockSpec((1, tm, Np), lambda g, i: (g, i, 0)),
        compiler_params=pltpu.CompilerParams(
            dimension_semantics=("parallel", "parallel")),
    )(a, b)
    if Mp != M or Np != N:
        out = out[:, :M, :N]
    return out


# ----------------------------------------------------------------------------
# Kernel 2: depthwise 3x3 conv (padding=1, groups=C) + SiLU, NHWC layout.
#   Taps are read as ref-level sub-window slices (no full-value relayout).
# ----------------------------------------------------------------------------
def _dwconv_silu_kernel(xp_ref, w_ref, b_ref, o_ref):
    H, W, C = o_ref.shape[1], o_ref.shape[2], o_ref.shape[3]
    w = w_ref[...]
    acc = jnp.broadcast_to(b_ref[...].reshape(1, 1, C), (H, W, C))
    for dh in range(3):
        for dw in range(3):
            tap = xp_ref[0, dh:dh + H, dw:dw + W, :]
            acc = acc + tap * w[dh, dw, :].reshape(1, 1, C)
    o_ref[0] = acc * (1.0 / (1.0 + jnp.exp(-acc)))  # SiLU


def pallas_dwconv_silu(x_pad, conv_w, conv_b, H, W):
    B, C = x_pad.shape[0], x_pad.shape[-1]
    return pl.pallas_call(
        _dwconv_silu_kernel,
        out_shape=jax.ShapeDtypeStruct((B, H, W, C), jnp.float32),
        grid=(B,),
        in_specs=[
            pl.BlockSpec((1, H + 2, W + 2, C), lambda b: (b, 0, 0, 0)),
            pl.BlockSpec((3, 3, C), lambda b: (0, 0, 0)),
            pl.BlockSpec((1, C), lambda b: (0, 0)),
        ],
        out_specs=pl.BlockSpec((1, H, W, C), lambda b: (b, 0, 0, 0)),
        compiler_params=pltpu.CompilerParams(dimension_semantics=("parallel",)),
    )(x_pad, conv_w, conv_b)


# ----------------------------------------------------------------------------
# Kernel 3: selective scan, all K=4 directions fused on the lane axis.
#   grid = (B, D-tiles, L-chunks); h persists in VMEM scratch across chunks
#   (chunk axis 'arbitrary'), B / D-tile axes 'parallel'.
#   Per 8-step group: softplus, delta*u, exp(delta*A) and the batched one-hot
#   B/C expansion are precomputed into double-buffered VMEM scratch; the
#   recurrence loop only does  h = dA*h + xB  plus an off-chain y reduction.
# ----------------------------------------------------------------------------
def _scan_kernel(u_ref, dt_ref, AT_ref, bc_ref, eb_ref, ec_ref, dskip_ref,
                 y_ref, h_ref, dA_scr, bexp_scr, cexp_scr, du_scr):
    Lc, Dt = u_ref.shape[1], u_ref.shape[2]
    N = AT_ref.shape[0]
    GN = 8 * N
    n_groups = Lc // 8

    @pl.when(pl.program_id(2) == 0)
    def _():
        h_ref[...] = jnp.zeros_like(h_ref)

    AT = AT_ref[...]            # (N, Dt)
    EB = eb_ref[...]            # (2K, Dt) one-hot group expansion for B
    EC = ec_ref[...]            # (2K, Dt) one-hot group expansion for C
    Dvec = dskip_ref[...]       # (1, Dt)

    def _mo(v, m):
        return v if isinstance(v, int) else pl.multiple_of(v, m)

    def precompute(g, slot):
        """h-independent per-group work (throughput bound, off the h-chain)."""
        base = _mo(g * 8, 8)
        off = _mo(slot * GN, 8)
        dt8 = dt_ref[0, pl.ds(base, 8), :]                    # (8, Dt), bias pre-added
        u8 = u_ref[0, pl.ds(base, 8), :]                      # (8, Dt)
        # softplus (torch threshold = 20)
        delta8 = jnp.where(dt8 > 20.0, dt8,
                           jnp.log(1.0 + jnp.exp(jnp.minimum(dt8, 20.0))))
        du_scr[pl.ds(_mo(slot * 8, 8), 8), :] = delta8 * u8
        rows = bc_ref[0, pl.ds(_mo(base * N, 8), GN), :]      # (8N, 2K) packed [B | C]
        bexp_scr[pl.ds(off, GN), :] = jnp.dot(
            rows, EB, preferred_element_type=jnp.float32)     # (8N, Dt)
        cexp_scr[pl.ds(off, GN), :] = jnp.dot(
            rows, EC, preferred_element_type=jnp.float32)     # (8N, Dt)
        for s in range(8):
            dA_scr[pl.ds(_mo(slot * GN + s * N, 8), N), :] = \
                jnp.exp(delta8[s:s + 1, :] * AT)              # (N, Dt)

    def recur(g, slot, h):
        """Serial recurrence: per step only  h = dA*h + du*Bexp  is carried."""
        base = _mo(g * 8, 8)
        u8 = u_ref[0, pl.ds(base, 8), :]
        du8 = du_scr[pl.ds(_mo(slot * 8, 8), 8), :]           # (8, Dt)
        ys = []
        for s in range(8):
            off = _mo(slot * GN + s * N, 8)
            dA_s = dA_scr[pl.ds(off, N), :]                   # (N, Dt)
            xB_s = du8[s:s + 1, :] * bexp_scr[pl.ds(off, N), :]
            h = dA_s * h + xB_s
            ys.append(jnp.sum(h * cexp_scr[pl.ds(off, N), :],
                              axis=0, keepdims=True))         # off the h-chain
        y8 = jnp.concatenate(ys, axis=0) + Dvec * u8          # (8, Dt)
        y_ref[0, pl.ds(base, 8), :] = y8                      # unmasked (8, Dt) store
        return h

    precompute(0, 0)                                          # prime slot 0

    def body(g, h):
        slot = lax.rem(g, 2)
        nxt = jnp.minimum(g + 1, n_groups - 1)
        precompute(nxt, 1 - slot)                             # overlaps recur(g)
        return recur(g, slot, h)

    h_ref[...] = lax.fori_loop(0, n_groups, body, h_ref[...])


def pallas_selective_scan(u, dt_b, A_T, bc, EB, EC, Ds, *, chunk=256,
                          d_tile=None):
    B, L, D = u.shape
    N = A_T.shape[0]
    KE = bc.shape[-1]                                 # 2K
    assert L % 8 == 0
    assert bc.shape == (B, L * N, KE)
    Lc = _pick_chunk(L, chunk)
    Dt = _pick_dtile(D, d_tile)
    grid = (B, D // Dt, L // Lc)
    return pl.pallas_call(
        _scan_kernel,
        out_shape=jax.ShapeDtypeStruct((B, L, D), jnp.float32),
        grid=grid,
        in_specs=[
            pl.BlockSpec((1, Lc, Dt), lambda b, d, c: (b, c, d)),      # u
            pl.BlockSpec((1, Lc, Dt), lambda b, d, c: (b, c, d)),      # dt (+bias)
            pl.BlockSpec((N, Dt), lambda b, d, c: (0, d)),             # A^T
            pl.BlockSpec((1, Lc * N, KE), lambda b, d, c: (b, c, 0)),  # packed B|C
            pl.BlockSpec((KE, Dt), lambda b, d, c: (0, d)),            # EB
            pl.BlockSpec((KE, Dt), lambda b, d, c: (0, d)),            # EC
            pl.BlockSpec((1, Dt), lambda b, d, c: (0, d)),             # D skip
        ],
        out_specs=pl.BlockSpec((1, Lc, Dt), lambda b, d, c: (b, c, d)),
        scratch_shapes=[
            pltpu.VMEM((N, Dt), jnp.float32),            # persistent h
            pltpu.VMEM((2 * 8 * N, Dt), jnp.float32),    # exp(delta*A), 2 slots
            pltpu.VMEM((2 * 8 * N, Dt), jnp.float32),    # expanded B, 2 slots
            pltpu.VMEM((2 * 8 * N, Dt), jnp.float32),    # expanded C, 2 slots
            pltpu.VMEM((2 * 8, Dt), jnp.float32),        # delta*u, 2 slots
        ],
        compiler_params=pltpu.CompilerParams(
            dimension_semantics=("parallel", "parallel", "arbitrary")),
    )(u, dt_b, A_T, bc, EB, EC, Ds)


# ----------------------------------------------------------------------------
# Kernel 4: fused LayerNorm + SiLU(z) gate + out_proj, row tiled,
#   lane-dense (128-padded) output columns.
# ----------------------------------------------------------------------------
def _norm_gate_proj_kernel(y_ref, z_ref, g_ref, b_ref, w_ref, o_ref):
    y = y_ref[...]
    mu = jnp.mean(y, axis=-1, keepdims=True)
    var = jnp.mean(jnp.square(y - mu), axis=-1, keepdims=True)
    yn = (y - mu) * lax.rsqrt(var + 1e-5) * g_ref[...] + b_ref[...]
    z = z_ref[...]
    gated = yn * (z / (1.0 + jnp.exp(-z)))                     # yn * silu(z), f32
    o_ref[...] = jnp.dot(gated.astype(w_ref.dtype), w_ref[...],
                         preferred_element_type=jnp.float32)


def pallas_norm_gate_proj(y, z, gamma, beta, w_T, *, tm_target=256):
    M, d_in = y.shape
    d_out = w_T.shape[1]
    d_out_p = _round_up(d_out, 128)                            # lane-dense stores
    if d_out_p != d_out:
        w_T = jnp.pad(w_T, ((0, 0), (0, d_out_p - d_out)))
    tm = min(tm_target, _round_up(M, 8))
    Mp = _round_up(M, tm)
    if Mp != M:
        y = jnp.pad(y, ((0, Mp - M), (0, 0)))
        z = jnp.pad(z, ((0, Mp - M), (0, 0)))
    out = pl.pallas_call(
        _norm_gate_proj_kernel,
        out_shape=jax.ShapeDtypeStruct((Mp, d_out_p), jnp.float32),
        grid=(Mp // tm,),
        in_specs=[
            pl.BlockSpec((tm, d_in), lambda i: (i, 0)),
            pl.BlockSpec((tm, d_in), lambda i: (i, 0)),
            pl.BlockSpec((1, d_in), lambda i: (0, 0)),
            pl.BlockSpec((1, d_in), lambda i: (0, 0)),
            pl.BlockSpec((d_in, d_out_p), lambda i: (0, 0)),
        ],
        out_specs=pl.BlockSpec((tm, d_out_p), lambda i: (i, 0)),
        compiler_params=pltpu.CompilerParams(dimension_semantics=("parallel",)),
    )(y, z, gamma, beta, w_T)
    return out[:M, :d_out]


# ----------------------------------------------------------------------------
# SS2D forward (glue + Pallas kernels)
# ----------------------------------------------------------------------------
def ss2d_forward(x, p, *, d_state=16, scan_chunk=256, scan_d_tile=None):
    B, H, W, d_model = x.shape
    L = H * W
    K = 4
    N = d_state
    d_inner = p["conv_w"].shape[-1]
    dt_rank = p["dt_projs_weight"].shape[-1]
    D_total = K * d_inner

    # ---- in_proj (Pallas bmm), bias=False; bf16 operands cast in wrapper ----
    in_w_t = p["in_proj_w"].T[None].astype(jnp.bfloat16)       # (1, d_model, 2*d_inner)
    xz = pallas_bmm(x.reshape(1, B * L, d_model).astype(jnp.bfloat16), in_w_t)
    xz = xz.reshape(B, H, W, 2 * d_inner)
    x_in, z = xz[..., :d_inner], xz[..., d_inner:]

    # ---- depthwise 3x3 conv + SiLU (Pallas), NHWC ----
    x_pad = jnp.pad(x_in, ((0, 0), (1, 1), (1, 1), (0, 0)))
    x_conv = pallas_dwconv_silu(x_pad, p["conv_w"], p["conv_b"], H, W)

    # ---- 4 scan directions (matches torch x_hwwh / flip construction) ----
    xs0 = x_conv.reshape(B, L, d_inner)                        # l = h*W + w
    xs1 = x_conv.transpose(0, 2, 1, 3).reshape(B, L, d_inner)  # l = w*H + h
    xs2 = xs0[:, ::-1, :]
    xs3 = xs1[:, ::-1, :]
    xs_k = jnp.stack([xs0, xs1, xs2, xs3], axis=0)             # (K, B, L, d_inner)

    # ---- fused (dt_proj ∘ x_proj): one bmm yields dt|B|C, kept in f32
    #      (delta path feeds softplus/exp; bf16 rounding amplifies there) ----
    w_dt = jnp.einsum('kdr,kri->kdi', p["dt_projs_weight"],
                      p["x_proj_weight"][:, :dt_rank, :])            # (K, d_inner, d_inner)
    w_fused = jnp.concatenate([w_dt, p["x_proj_weight"][:, dt_rank:, :]],
                              axis=1)                                # (K, d_inner+2N, d_inner)
    w_fused_t = w_fused.transpose(0, 2, 1)                           # (K, d_inner, d_inner+2N)
    c_out = d_inner + 2 * N
    c_pad = _round_up(c_out, 128)                                    # lane-dense output
    if c_pad != c_out:
        w_fused_t = jnp.pad(w_fused_t, ((0, 0), (0, 0), (0, c_pad - c_out)))

    x_full = pallas_bmm(xs_k.reshape(K, B * L, d_inner), w_fused_t)  # (K, B*L, c_pad) f32
    dts = x_full[..., :d_inner]
    Bs = x_full[..., d_inner:d_inner + N]
    Cs = x_full[..., d_inner + N:d_inner + 2 * N]

    # ---- assemble scan operands; D = K*d_inner with d = k*d_inner + c ----
    u = jnp.concatenate([xs0, xs1, xs2, xs3], axis=-1)               # (B, L, D)
    dt_b = (dts.reshape(K, B, L, d_inner).transpose(1, 2, 0, 3).reshape(B, L, D_total)
            + p["dt_projs_bias"].reshape(1, 1, D_total))             # bias hoisted here
    # pack B (cols 0..K-1) and C (cols K..2K-1) per (l, n): NO d_inner expansion;
    # HBM bytes of a chunk are contiguous, expansion happens on the MXU in-kernel.
    bc = jnp.concatenate([Bs.reshape(K, B, L, N).transpose(1, 2, 3, 0),
                          Cs.reshape(K, B, L, N).transpose(1, 2, 3, 0)],
                         axis=-1).reshape(B, L * N, 2 * K)

    A_T = (-jnp.exp(p["A_logs"])).T                                  # (N, D)
    Ds_ = p["Ds"].reshape(1, D_total)

    # one-hot group-expansion matrices (constants, folded by XLA)
    grp = jnp.arange(D_total) // d_inner
    EB = (grp[None, :] == jnp.arange(2 * K)[:, None]).astype(jnp.float32)
    EC = (grp[None, :] == (jnp.arange(2 * K)[:, None] - K)).astype(jnp.float32)

    # pad L to a multiple of 8 (odd H*W); padding sits at the end of every
    # direction's scan order so it never affects valid outputs.
    Lp = _round_up(L, 8)
    if Lp != L:
        pad = Lp - L
        u = jnp.pad(u, ((0, 0), (0, pad), (0, 0)))
        dt_b = jnp.pad(dt_b, ((0, 0), (0, pad), (0, 0)))
        bc = jnp.pad(bc, ((0, 0), (0, pad * N), (0, 0)))

    y_scan = pallas_selective_scan(u, dt_b, A_T, bc, EB, EC, Ds_,
                                   chunk=scan_chunk, d_tile=scan_d_tile)
    if Lp != L:
        y_scan = y_scan[:, :L, :]
    y_k = y_scan.reshape(B, L, K, d_inner)

    # ---- recombine the 4 directions (out_y / inv_y / wh_y / invwh_y) ----
    y1 = y_k[:, :, 0, :]
    y2 = y_k[:, ::-1, 2, :]
    y3 = y_k[:, :, 1, :].reshape(B, W, H, d_inner).transpose(0, 2, 1, 3).reshape(B, L, d_inner)
    y4 = y_k[:, ::-1, 3, :].reshape(B, W, H, d_inner).transpose(0, 2, 1, 3).reshape(B, L, d_inner)
    y = (y1 + y2 + y3 + y4).reshape(B * L, d_inner)

    # ---- fused LayerNorm + silu(z) gate + out_proj (Pallas) ----
    w_out_t = p["out_proj_w"].T.astype(jnp.bfloat16)
    out = pallas_norm_gate_proj(y, z.reshape(B * L, d_inner),
                                p["ln_gamma"], p["ln_beta"], w_out_t)
    return out.reshape(B, H, W, d_model)


# ----------------------------------------------------------------------------
# Pure-JAX reference (mirrors the PyTorch module, f32) — for verification
# ----------------------------------------------------------------------------
def ss2d_reference(x, p, *, d_state=16):
    B, H, W, d_model = x.shape
    L = H * W
    K = 4
    N = d_state
    d_inner = p["conv_w"].shape[-1]
    dt_rank = p["dt_projs_weight"].shape[-1]

    xz = jnp.einsum('bhwc,dc->bhwd', x, p["in_proj_w"])
    x_in, z = xz[..., :d_inner], xz[..., d_inner:]

    rhs = p["conv_w"].reshape(3, 3, 1, d_inner)
    xc = lax.conv_general_dilated(x_in, rhs, (1, 1), 'SAME',
                                  dimension_numbers=('NHWC', 'HWIO', 'NHWC'),
                                  feature_group_count=d_inner)
    xc = xc + p["conv_b"].reshape(1, 1, 1, d_inner)
    xc = xc * jax.nn.sigmoid(xc)

    xs0 = xc.reshape(B, L, d_inner)
    xs1 = xc.transpose(0, 2, 1, 3).reshape(B, L, d_inner)
    xs = jnp.stack([xs0, xs1, xs0[:, ::-1], xs1[:, ::-1]], axis=1)  # (B, K, L, d)

    x_dbl = jnp.einsum('bkld,kcd->bklc', xs, p["x_proj_weight"])
    dts_r, Bsr, Csr = jnp.split(x_dbl, [dt_rank, dt_rank + N], axis=-1)
    dts = jnp.einsum('bklr,kdr->bkld', dts_r, p["dt_projs_weight"])
    delta = jax.nn.softplus(dts + p["dt_projs_bias"][None, :, None, :])
    A = -jnp.exp(p["A_logs"]).reshape(K, d_inner, N)

    def scan_dir(u_k, d_k, B_k, C_k, A_k):
        def step(h, inp):
            u_l, dl, Bl, Cl = inp
            dA = jnp.exp(dl[:, None] * A_k)
            h = dA * h + (dl * u_l)[:, None] * Bl[None, :]
            return h, jnp.sum(h * Cl[None, :], axis=1)
        _, ys = lax.scan(step, jnp.zeros((d_inner, N), jnp.float32),
                         (u_k, d_k, B_k, C_k))
        return ys

    ys = jax.vmap(jax.vmap(scan_dir, in_axes=(0, 0, 0, 0, 0)),
                  in_axes=(0, 0, 0, 0, None))(xs, delta, Bsr, Csr, A)
    ys = ys + xs * p["Ds"].reshape(K, d_inner)[None, :, None, :]

    y1 = ys[:, 0]
    y2 = ys[:, 2][:, ::-1]
    y3 = ys[:, 1].reshape(B, W, H, d_inner).transpose(0, 2, 1, 3).reshape(B, L, d_inner)
    y4 = ys[:, 3][:, ::-1].reshape(B, W, H, d_inner).transpose(0, 2, 1, 3).reshape(B, L, d_inner)
    y = y1 + y2 + y3 + y4

    mu = y.mean(-1, keepdims=True)
    var = ((y - mu) ** 2).mean(-1, keepdims=True)
    yn = (y - mu) * lax.rsqrt(var + 1e-5) * p["ln_gamma"].reshape(1, 1, d_inner) \
        + p["ln_beta"].reshape(1, 1, d_inner)
    gated = yn * jax.nn.silu(z.reshape(B, L, d_inner))
    out = gated @ p["out_proj_w"].T
    return out.reshape(B, H, W, d_model)


# ----------------------------------------------------------------------------
# Deterministic parameter init (shapes match SS2D.__init__)
# ----------------------------------------------------------------------------
def init_params(key, d_model=32, d_state=16, d_conv=3, expand=2,
                dt_min=1e-3, dt_max=0.1, dt_init_floor=1e-4):
    d_inner = int(expand * d_model)
    dt_rank = math.ceil(d_model / 16)
    K = 4
    ks = jax.random.split(key, 8)
    dt_init_std = dt_rank ** -0.5

    in_proj_w = jax.random.normal(ks[0], (2 * d_inner, d_model), jnp.float32) * (d_model ** -0.5)
    conv_w_nchw = jax.random.normal(ks[1], (d_inner, 1, d_conv, d_conv), jnp.float32) * (1.0 / d_conv)
    conv_w = conv_w_nchw[:, 0].transpose(1, 2, 0)                 # (3,3,C)
    conv_b = jax.random.normal(ks[2], (1, d_inner), jnp.float32) * 0.1
    x_proj_weight = jax.random.normal(
        ks[3], (K, dt_rank + 2 * d_state, d_inner), jnp.float32) * (d_inner ** -0.5)
    dt_projs_weight = jax.random.uniform(
        ks[4], (K, d_inner, dt_rank), jnp.float32, minval=-dt_init_std, maxval=dt_init_std)
    dt = jnp.exp(jax.random.uniform(ks[5], (K, d_inner), jnp.float32)
                 * (math.log(dt_max) - math.log(dt_min)) + math.log(dt_min))
    dt = jnp.maximum(dt, dt_init_floor)
    dt_projs_bias = dt + jnp.log(-jnp.expm1(-dt))                 # inverse softplus
    A_logs = jnp.log(jnp.tile(jnp.arange(1, d_state + 1, dtype=jnp.float32)[None, :],
                              (K * d_inner, 1)))                  # (K*d_inner, N)
    Ds = jnp.ones((K * d_inner,), jnp.float32)
    ln_gamma = jnp.ones((1, d_inner), jnp.float32)
    ln_beta = jnp.zeros((1, d_inner), jnp.float32)
    out_proj_w = jax.random.normal(ks[6], (d_model, d_inner), jnp.float32) * (d_inner ** -0.5)

    return dict(in_proj_w=in_proj_w, conv_w=conv_w, conv_b=conv_b,
                x_proj_weight=x_proj_weight, dt_projs_weight=dt_projs_weight,
                dt_projs_bias=dt_projs_bias, A_logs=A_logs, Ds=Ds,
                ln_gamma=ln_gamma, ln_beta=ln_beta, out_proj_w=out_proj_w)


if __name__ == "__main__":
    d_model, d_state = 32, 16           # -> d_inner=64, dt_rank=2, K=4, D=256
    B, H, W = 2, 8, 8                   # L = 64
    key = jax.random.PRNGKey(0)
    kp, kx = jax.random.split(key)
    params = init_params(kp, d_model=d_model, d_state=d_state)
    x = jax.random.normal(kx, (B, H, W, d_model), jnp.float32)

    # scan_chunk=32 -> 2 L-chunks, scan_d_tile=128 -> 2 D-tiles at this toy size,
    # exercising the persistent-h / D-tiled / double-buffered-group paths.
    fwd = jax.jit(lambda xx: ss2d_forward(xx, params, d_state=d_state,
                                          scan_chunk=32, scan_d_tile=128))
    out = fwd(x)
    jax.block_until_ready(out)

    assert out.shape == (B, H, W, d_model)
    assert bool(jnp.all(jnp.isfinite(out)))

    # cross-check against plain-JAX reference (bf16 MXU operands => loose tol)
    ref = jax.jit(lambda xx: ss2d_reference(xx, params, d_state=d_state))(x)
    jax.block_until_ready(ref)
    err = float(jnp.max(jnp.abs(out - ref)))
    assert err < 0.25, f"max abs err vs reference too large: {err}"

    print("KERNEL_OK")
</pallas_src>

<mosaic_0001>
module attributes {stable_mosaic.version = 11 : i64} {
  func.func @_bmm_kernel(%arg0: i32, %arg1: i32, %arg2: memref<1x128x32xbf16, #tpu.memory_space<vmem>>, %arg3: memref<1x32x128xbf16, #tpu.memory_space<vmem>>, %arg4: memref<1x128x128xf32, #tpu.memory_space<vmem>>) attributes {dimension_semantics = [#tpu.dimension_semantics<parallel>, #tpu.dimension_semantics<parallel>], iteration_bounds = array<i64: 1, 1>, scalar_prefetch = 0 : i64, scratch_operands = 0 : i64, tpu.core_type = #tpu.core_type<tc>, window_params = [{transform_indices = @transform_0, window_bounds = array<i64: 1, 128, 32>}, {transform_indices = @transform_1, window_bounds = array<i64: 1, 32, 128>}, {transform_indices = @transform_2, window_bounds = array<i64: 1, 128, 128>}]} {
    %c0 = arith.constant 0 : index
    %c0_0 = arith.constant 0 : index
    %c0_1 = arith.constant 0 : index
    %0 = vector.load %arg2[%c0, %c0_0, %c0_1] : memref<1x128x32xbf16, #tpu.memory_space<vmem>>, vector<1x128x32xbf16>
    %1 = vector.shape_cast %0 : vector<1x128x32xbf16> to vector<128x32xbf16>
    %c0_2 = arith.constant 0 : index
    %c0_3 = arith.constant 0 : index
    %c0_4 = arith.constant 0 : index
    %2 = vector.load %arg3[%c0_2, %c0_3, %c0_4] : memref<1x32x128xbf16, #tpu.memory_space<vmem>>, vector<1x32x128xbf16>
    %3 = vector.shape_cast %2 : vector<1x32x128xbf16> to vector<32x128xbf16>
    %cst = arith.constant dense<0.000000e+00> : vector<128x128xf32>
    %4 = tpu.matmul %1, %3, %cst {dimension_numbers = #tpu.dot_dimension_numbers<[1], [0], [0], [1], [0, 0, 1, 1], [], []>} : vector<128x32xbf16>, vector<32x128xbf16>, vector<128x128xf32> -> vector<128x128xf32>
    %c0_5 = arith.constant 0 : index
    %c0_6 = arith.constant 0 : index
    %c0_7 = arith.constant 0 : index
    %5 = vector.load %arg4[%c0_5, %c0_6, %c0_7] : memref<1x128x128xf32, #tpu.memory_space<vmem>>, vector<1x128x128xf32>
    %6 = vector.shape_cast %5 : vector<1x128x128xf32> to vector<128x128xf32>
    %7 = vector.shape_cast %4 : vector<128x128xf32> to vector<1x128x128xf32>
    tpu.vector_store %arg4[%c0_5, %c0_6, %c0_7], %7 {strides = array<i32>} : memref<1x128x128xf32, #tpu.memory_space<vmem>>, vector<1x128x128xf32>,
    return
  }
  func.func @transform_0(%arg0: i32, %arg1: i32) -> (i32, i32, i32) {
    %c0_i32 = arith.constant 0 : i32
    %c0_i32_0 = arith.constant 0 : i32
    return %arg0, %arg1, %c0_i32 : i32, i32, i32
  }
  func.func @transform_1(%arg0: i32, %arg1: i32) -> (i32, i32, i32) {
    %c0_i32 = arith.constant 0 : i32
    %c0_i32_0 = arith.constant 0 : i32
    %c0_i32_1 = arith.constant 0 : i32
    return %arg0, %c0_i32, %c0_i32_0 : i32, i32, i32
  }
  func.func @transform_2(%arg0: i32, %arg1: i32) -> (i32, i32, i32) {
    %c0_i32 = arith.constant 0 : i32
    %c0_i32_0 = arith.constant 0 : i32
    return %arg0, %arg1, %c0_i32 : i32, i32, i32
  }
}

module attributes {stable_mosaic.version = 11 : i64} {
  func.func @_bmm_kernel(%arg0: i32, %arg1: i32, %arg2: memref<1x128x64xf32, #tpu.memory_space<vmem>>, %arg3: memref<1x64x128xf32, #tpu.memory_space<vmem>>, %arg4: memref<1x128x128xf32, #tpu.memory_space<vmem>>) attributes {dimension_semantics = [#tpu.dimension_semantics<parallel>, #tpu.dimension_semantics<parallel>], iteration_bounds = array<i64: 4, 1>, scalar_prefetch = 0 : i64, scratch_operands = 0 : i64, tpu.core_type = #tpu.core_type<tc>, window_params = [{transform_indices = @transform_0, window_bounds = array<i64: 1, 128, 64>}, {transform_indices = @transform_1, window_bounds = array<i64: 1, 64, 128>}, {transform_indices = @transform_2, window_bounds = array<i64: 1, 128, 128>}]} {
    %c0 = arith.constant 0 : index
    %c0_0 = arith.constant 0 : index
    %c0_1 = arith.constant 0 : index
    %0 = vector.load %arg2[%c0, %c0_0, %c0_1] : memref<1x128x64xf32, #tpu.memory_space<vmem>>, vector<1x128x64xf32>
    %1 = vector.shape_cast %0 : vector<1x128x64xf32> to vector<128x64xf32>
    %c0_2 = arith.constant 0 : index
    %c0_3 = arith.constant 0 : index
    %c0_4 = arith.constant 0 : index
    %2 = vector.load %arg3[%c0_2, %c0_3, %c0_4] : memref<1x64x128xf32, #tpu.memory_space<vmem>>, vector<1x64x128xf32>
    %3 = vector.shape_cast %2 : vector<1x64x128xf32> to vector<64x128xf32>
    %cst = arith.constant dense<0.000000e+00> : vector<128x128xf32>
    %4 = tpu.matmul %1, %3, %cst {dimension_numbers = #tpu.dot_dimension_numbers<[1], [0], [0], [1], [0, 0, 1, 1], [], []>} : vector<128x64xf32>, vector<64x128xf32>, vector<128x128xf32> -> vector<128x128xf32>
    %c0_5 = arith.constant 0 : index
    %c0_6 = arith.constant 0 : index
    %c0_7 = arith.constant 0 : index
    %5 = vector.load %arg4[%c0_5, %c0_6, %c0_7] : memref<1x128x128xf32, #tpu.memory_space<vmem>>, vector<1x128x128xf32>
    %6 = vector.shape_cast %5 : vector<1x128x128xf32> to vector<128x128xf32>
    %7 = vector.shape_cast %4 : vector<128x128xf32> to vector<1x128x128xf32>
    tpu.vector_store %arg4[%c0_5, %c0_6, %c0_7], %7 {strides = array<i32>} : memref<1x128x128xf32, #tpu.memory_space<vmem>>, vector<1x128x128xf32>,
    return
  }
  func.func @transform_0(%arg0: i32, %arg1: i32) -> (i32, i32, i32) {
    %c0_i32 = arith.constant 0 : i32
    %c0_i32_0 = arith.constant 0 : i32
    return %arg0, %arg1, %c0_i32 : i32, i32, i32
  }
  func.func @transform_1(%arg0: i32, %arg1: i32) -> (i32, i32, i32) {
    %c0_i32 = arith.constant 0 : i32
    %c0_i32_0 = arith.constant 0 : i32
    %c0_i32_1 = arith.constant 0 : i32
    return %arg0, %c0_i32, %c0_i32_0 : i32, i32, i32
  }
  func.func @transform_2(%arg0: i32, %arg1: i32) -> (i32, i32, i32) {
    %c0_i32 = arith.constant 0 : i32
    %c0_i32_0 = arith.constant 0 : i32
    return %arg0, %arg1, %c0_i32 : i32, i32, i32
  }
}

module attributes {stable_mosaic.version = 11 : i64} {
  func.func @_dwconv_silu_kernel(%arg0: i32, %arg1: memref<1x10x10x64xf32, #tpu.memory_space<vmem>>, %arg2: memref<3x3x64xf32, #tpu.memory_space<vmem>>, %arg3: memref<1x64xf32, #tpu.memory_space<vmem>>, %arg4: memref<1x8x8x64xf32, #tpu.memory_space<vmem>>) attributes {dimension_semantics = [#tpu.dimension_semantics<parallel>], iteration_bounds = array<i64: 2>, scalar_prefetch = 0 : i64, scratch_operands = 0 : i64, tpu.core_type = #tpu.core_type<tc>, window_params = [{transform_indices = @transform_0, window_bounds = array<i64: 1, 10, 10, 64>}, {pipeline_mode = #tpu.pipeline_mode<synchronous>, transform_indices = @transform_1, window_bounds = array<i64: 3, 3, 64>}, {pipeline_mode = #tpu.pipeline_mode<synchronous>, transform_indices = @transform_2, window_bounds = array<i64: 1, 64>}, {transform_indices = @transform_3, window_bounds = array<i64: 1, 8, 8, 64>}]} {
    %c0 = arith.constant 0 : index
    %c0_0 = arith.constant 0 : index
    %c0_1 = arith.constant 0 : index
    %0 = vector.load %arg2[%c0, %c0_0, %c0_1] : memref<3x3x64xf32, #tpu.memory_space<vmem>>, vector<3x3x64xf32>
    %c0_2 = arith.constant 0 : index
    %c0_3 = arith.constant 0 : index
    %1 = vector.load %arg3[%c0_2, %c0_3] : memref<1x64xf32, #tpu.memory_space<vmem>>, vector<1x64xf32>
    %2 = vector.shape_cast %1 : vector<1x64xf32> to vector<1x1x64xf32>
    %3 = vector.shape_cast %2 : vector<1x1x64xf32> to vector<1x1x64xf32>
    %4 = vector.broadcast %3 : vector<1x1x64xf32> to vector<8x8x64xf32>
    %c0_4 = arith.constant 0 : index
    %c0_5 = arith.constant 0 : index
    %c0_6 = arith.constant 0 : index
    %c0_7 = arith.constant 0 : index
    %5 = vector.load %arg1[%c0_4, %c0_5, %c0_6, %c0_7] : memref<1x10x10x64xf32, #tpu.memory_space<vmem>>, vector<1x8x8x64xf32>
    %6 = vector.shape_cast %5 : vector<1x8x8x64xf32> to vector<8x8x64xf32>
    %7 = vector.extract_strided_slice %0 {offsets = [0, 0, 0], sizes = [1, 1, 64], strides = [1, 1, 1]} : vector<3x3x64xf32> to vector<1x1x64xf32>
    %8 = vector.shape_cast %7 : vector<1x1x64xf32> to vector<64xf32>
    %9 = vector.shape_cast %8 : vector<64xf32> to vector<1x1x64xf32>
    %10 = vector.broadcast %9 : vector<1x1x64xf32> to vector<8x8x64xf32>
    %11 = arith.mulf %6, %10 : vector<8x8x64xf32>
    %12 = arith.addf %4, %11 : vector<8x8x64xf32>
    %c0_8 = arith.constant 0 : index
    %c0_9 = arith.constant 0 : index
    %c1 = arith.constant 1 : index
    %c0_10 = arith.constant 0 : index
    %13 = vector.load %arg1[%c0_8, %c0_9, %c1, %c0_10] : memref<1x10x10x64xf32, #tpu.memory_space<vmem>>, vector<1x8x8x64xf32>
    %14 = vector.shape_cast %13 : vector<1x8x8x64xf32> to vector<8x8x64xf32>
    %15 = vector.extract_strided_slice %0 {offsets = [0, 1, 0], sizes = [1, 1, 64], strides = [1, 1, 1]} : vector<3x3x64xf32> to vector<1x1x64xf32>
    %16 = vector.shape_cast %15 : vector<1x1x64xf32> to vector<64xf32>
    %17 = vector.shape_cast %16 : vector<64xf32> to vector<1x1x64xf32>
    %18 = vector.broadcast %17 : vector<1x1x64xf32> to vector<8x8x64xf32>
    %19 = arith.mulf %14, %18 : vector<8x8x64xf32>
    %20 = arith.addf %12, %19 : vector<8x8x64xf32>
    %c0_11 = arith.constant 0 : index
    %c0_12 = arith.constant 0 : index
    %c2 = arith.constant 2 : index
    %c0_13 = arith.constant 0 : index
    %21 = vector.load %arg1[%c0_11, %c0_12, %c2, %c0_13] : memref<1x10x10x64xf32, #tpu.memory_space<vmem>>, vector<1x8x8x64xf32>
    %22 = vector.shape_cast %21 : vector<1x8x8x64xf32> to vector<8x8x64xf32>
    %23 = vector.extract_strided_slice %0 {offsets = [0, 2, 0], sizes = [1, 1, 64], strides = [1, 1, 1]} : vector<3x3x64xf32> to vector<1x1x64xf32>
    %24 = vector.shape_cast %23 : vector<1x1x64xf32> to vector<64xf32>
    %25 = vector.shape_cast %24 : vector<64xf32> to vector<1x1x64xf32>
    %26 = vector.broadcast %25 : vector<1x1x64xf32> to vector<8x8x64xf32>
    %27 = arith.mulf %22, %26 : vector<8x8x64xf32>
    %28 = arith.addf %20, %27 : vector<8x8x64xf32>
    %c0_14 = arith.constant 0 : index
    %c1_15 = arith.constant 1 : index
    %c0_16 = arith.constant 0 : index
    %c0_17 = arith.constant 0 : index
    %29 = vector.load %arg1[%c0_14, %c1_15, %c0_16, %c0_17] : memref<1x10x10x64xf32, #tpu.memory_space<vmem>>, vector<1x8x8x64xf32>
    %30 = vector.shape_cast %29 : vector<1x8x8x64xf32> to vector<8x8x64xf32>
    %31 = vector.extract_strided_slice %0 {offsets = [1, 0, 0], sizes = [1, 1, 64], strides = [1, 1, 1]} : vector<3x3x64xf32> to vector<1x1x64xf32>
    %32 = vector.shape_cast %31 : vector<1x1x64xf32> to vector<64xf32>
    %33 = vector.shape_cast %32 : vector<64xf32> to vector<1x1x64xf32>
    %34 = vector.broadcast %33 : vector<1x1x64xf32> to vector<8x8x64xf32>
    %35 = arith.mulf %30, %34 : vector<8x8x64xf32>
    %36 = arith.addf %28, %35 : vector<8x8x64xf32>
    %c0_18 = arith.constant 0 : index
    %c1_19 = arith.constant 1 : index
    %c1_20 = arith.constant 1 : index
    %c0_21 = arith.constant 0 : index
    %37 = vector.load %arg1[%c0_18, %c1_19, %c1_20, %c0_21] : memref<1x10x10x64xf32, #tpu.memory_space<vmem>>, vector<1x8x8x64xf32>
    %38 = vector.shape_cast %37 : vector<1x8x8x64xf32> to vector<8x8x64xf32>
    %39 = vector.extract_strided_slice %0 {offsets = [1, 1, 0], sizes = [1, 1, 64], strides = [1, 1, 1]} : vector<3x3x64xf32> to vector<1x1x64xf32>
    %40 = vector.shape_cast %39 : vector<1x1x64xf32> to vector<64xf32>
    %41 = vector.shape_cast %40 : vector<64xf32> to vector<1x1x64xf32>
    %42 = vector.broadcast %41 : vector<1x1x64xf32> to vector<8x8x64xf32>
    %43 = arith.mulf %38, %42 : vector<8x8x64xf32>
    %44 = arith.addf %36, %43 : vector<8x8x64xf32>
    %c0_22 = arith.constant 0 : index
    %c1_23 = arith.constant 1 : index
    %c2_24 = arith.constant 2 : index
    %c0_25 = arith.constant 0 : index
    %45 = vector.load %arg1[%c0_22, %c1_23, %c2_24, %c0_25] : memref<1x10x10x64xf32, #tpu.memory_space<vmem>>, vector<1x8x8x64xf32>
    %46 = vector.shape_cast %45 : vector<1x8x8x64xf32> to vector<8x8x64xf32>
    %47 = vector.extract_strided_slice %0 {offsets = [1, 2, 0], sizes = [1, 1, 64], strides = [1, 1, 1]} : vector<3x3x64xf32> to vector<1x1x64xf32>
    %48 = vector.shape_cast %47 : vector<1x1x64xf32> to vector<64xf32>
    %49 = vector.shape_cast %48 : vector<64xf32> to vector<1x1x64xf32>
    %50 = vector.broadcast %49 : vector<1x1x64xf32> to vector<8x8x64xf32>
    %51 = arith.mulf %46, %50 : vector<8x8x64xf32>
    %52 = arith.addf %44, %51 : vector<8x8x64xf32>
    %c0_26 = arith.constant 0 : index
    %c2_27 = arith.constant 2 : index
    %c0_28 = arith.constant 0 : index
    %c0_29 = arith.constant 0 : index
    %53 = vector.load %arg1[%c0_26, %c2_27, %c0_28, %c0_29] : memref<1x10x10x64xf32, #tpu.memory_space<vmem>>, vector<1x8x8x64xf32>
    %54 = vector.shape_cast %53 : vector<1x8x8x64xf32> to vector<8x8x64xf32>
    %55 = vector.extract_strided_slice %0 {offsets = [2, 0, 0], sizes = [1, 1, 64], strides = [1, 1, 1]} : vector<3x3x64xf32> to vector<1x1x64xf32>
    %56 = vector.shape_cast %55 : vector<1x1x64xf32> to vector<64xf32>
    %57 = vector.shape_cast %56 : vector<64xf32> to vector<1x1x64xf32>
    %58 = vector.broadcast %57 : vector<1x1x64xf32> to vector<8x8x64xf32>
    %59 = arith.mulf %54, %58 : vector<8x8x64xf32>
    %60 = arith.addf %52, %59 : vector<8x8x64xf32>
    %c0_30 = arith.constant 0 : index
    %c2_31 = arith.constant 2 : index
    %c1_32 = arith.constant 1 : index
    %c0_33 = arith.constant 0 : index
    %61 = vector.load %arg1[%c0_30, %c2_31, %c1_32, %c0_33] : memref<1x10x10x64xf32, #tpu.memory_space<vmem>>, vector<1x8x8x64xf32>
    %62 = vector.shape_cast %61 : vector<1x8x8x64xf32> to vector<8x8x64xf32>
    %63 = vector.extract_strided_slice %0 {offsets = [2, 1, 0], sizes = [1, 1, 64], strides = [1, 1, 1]} : vector<3x3x64xf32> to vector<1x1x64xf32>
    %64 = vector.shape_cast %63 : vector<1x1x64xf32> to vector<64xf32>
    %65 = vector.shape_cast %64 : vector<64xf32> to vector<1x1x64xf32>
    %66 = vector.broadcast %65 : vector<1x1x64xf32> to vector<8x8x64xf32>
    %67 = arith.mulf %62, %66 : vector<8x8x64xf32>
    %68 = arith.addf %60, %67 : vector<8x8x64xf32>
    %c0_34 = arith.constant 0 : index
    %c2_35 = arith.constant 2 : index
    %c2_36 = arith.constant 2 : index
    %c0_37 = arith.constant 0 : index
    %69 = vector.load %arg1[%c0_34, %c2_35, %c2_36, %c0_37] : memref<1x10x10x64xf32, #tpu.memory_space<vmem>>, vector<1x8x8x64xf32>
    %70 = vector.shape_cast %69 : vector<1x8x8x64xf32> to vector<8x8x64xf32>
    %71 = vector.extract_strided_slice %0 {offsets = [2, 2, 0], sizes = [1, 1, 64], strides = [1, 1, 1]} : vector<3x3x64xf32> to vector<1x1x64xf32>
    %72 = vector.shape_cast %71 : vector<1x1x64xf32> to vector<64xf32>
    %73 = vector.shape_cast %72 : vector<64xf32> to vector<1x1x64xf32>
    %74 = vector.broadcast %73 : vector<1x1x64xf32> to vector<8x8x64xf32>
    %75 = arith.mulf %70, %74 : vector<8x8x64xf32>
    %76 = arith.addf %68, %75 : vector<8x8x64xf32>
    %cst = arith.constant 0.000000e+00 : f32
    %77 = vector.broadcast %cst : f32 to vector<8x8x64xf32>
    %78 = arith.subf %77, %76 : vector<8x8x64xf32>
    %79 = math.exp %78 : vector<8x8x64xf32>
    %cst_38 = arith.constant 1.000000e+00 : f32
    %80 = vector.broadcast %cst_38 : f32 to vector<8x8x64xf32>
    %81 = arith.addf %80, %79 : vector<8x8x64xf32>
    %cst_39 = arith.constant 1.000000e+00 : f32
    %82 = vector.broadcast %cst_39 : f32 to vector<8x8x64xf32>
    %83 = arith.divf %82, %81 : vector<8x8x64xf32>
    %84 = arith.mulf %76, %83 : vector<8x8x64xf32>
    %c0_40 = arith.constant 0 : index
    %c0_41 = arith.constant 0 : index
    %c0_42 = arith.constant 0 : index
    %c0_43 = arith.constant 0 : index
    %85 = vector.load %arg4[%c0_40, %c0_41, %c0_42, %c0_43] : memref<1x8x8x64xf32, #tpu.memory_space<vmem>>, vector<1x8x8x64xf32>
    %86 = vector.shape_cast %85 : vector<1x8x8x64xf32> to vector<8x8x64xf32>
    %87 = vector.shape_cast %84 : vector<8x8x64xf32> to vector<1x8x8x64xf32>
    tpu.vector_store %arg4[%c0_40, %c0_41, %c0_42, %c0_43], %87 {strides = array<i32>} : memref<1x8x8x64xf32, #tpu.memory_space<vmem>>, vector<1x8x8x64xf32>,
    return
  }
  func.func @transform_0(%arg0: i32) -> (i32, i32, i32, i32) {
    %c0_i32 = arith.constant 0 : i32
    %c0_i32_0 = arith.constant 0 : i32
    %c0_i32_1 = arith.constant 0 : i32
    %c0_i32_2 = arith.constant 0 : i32
    return %arg0, %c0_i32, %c0_i32_0, %c0_i32_1 : i32, i32, i32, i32
  }
  func.func @transform_1(%arg0: i32) -> (i32, i32, i32) {
    %c0_i32 = arith.constant 0 : i32
    %c0_i32_0 = arith.constant 0 : i32
    %c0_i32_1 = arith.constant 0 : i32
    %c0_i32_2 = arith.constant 0 : i32
    return %c0_i32, %c0_i32_0, %c0_i32_1 : i32, i32, i32
  }
  func.func @transform_2(%arg0: i32) -> (i32, i32) {
    %c0_i32 = arith.constant 0 : i32
    %c0_i32_0 = arith.constant 0 : i32
    %c0_i32_1 = arith.constant 0 : i32
    return %c0_i32, %c0_i32_0 : i32, i32
  }
  func.func @transform_3(%arg0: i32) -> (i32, i32, i32, i32) {
    %c0_i32 = arith.constant 0 : i32
    %c0_i32_0 = arith.constant 0 : i32
    %c0_i32_1 = arith.constant 0 : i32
    %c0_i32_2 = arith.constant 0 : i32
    return %arg0, %c0_i32, %c0_i32_0, %c0_i32_1 : i32, i32, i32, i32
  }
}

module attributes {stable_mosaic.version = 11 : i64} {
  func.func @_scan_kernel(%arg0: i32, %arg1: i32, %arg2: i32, %arg3: memref<1x32x128xf32, #tpu.memory_space<vmem>>, %arg4: memref<1x32x128xf32, #tpu.memory_space<vmem>>, %arg5: memref<16x128xf32, #tpu.memory_space<vmem>>, %arg6: memref<1x512x8xf32, #tpu.memory_space<vmem>>, %arg7: memref<8x128xf32, #tpu.memory_space<vmem>>, %arg8: memref<8x128xf32, #tpu.memory_space<vmem>>, %arg9: memref<1x128xf32, #tpu.memory_space<vmem>>, %arg10: memref<1x32x128xf32, #tpu.memory_space<vmem>>, %arg11: memref<16x128xf32, #tpu.memory_space<vmem>>, %arg12: memref<256x128xf32, #tpu.memory_space<vmem>>, %arg13: memref<256x128xf32, #tpu.memory_space<vmem>>, %arg14: memref<256x128xf32, #tpu.memory_space<vmem>>, %arg15: memref<16x128xf32, #tpu.memory_space<vmem>>) attributes {dimension_semantics = [#tpu.dimension_semantics<parallel>, #tpu.dimension_semantics<parallel>, #tpu.dimension_semantics<arbitrary>], iteration_bounds = array<i64: 2, 2, 2>, scalar_prefetch = 0 : i64, scratch_operands = 5 : i64, tpu.core_type = #tpu.core_type<tc>, window_params = [{transform_indices = @transform_0, window_bounds = array<i64: 1, 32, 128>}, {transform_indices = @transform_1, window_bounds = array<i64: 1, 32, 128>}, {transform_indices = @transform_2, window_bounds = array<i64: 16, 128>}, {transform_indices = @transform_3, window_bounds = array<i64: 1, 512, 8>}, {transform_indices = @transform_4, window_bounds = array<i64: 8, 128>}, {transform_indices = @transform_5, window_bounds = array<i64: 8, 128>}, {transform_indices = @transform_6, window_bounds = array<i64: 1, 128>}, {transform_indices = @transform_7, window_bounds = array<i64: 1, 32, 128>}]} {
    %c0_i32 = arith.constant 0 : i32
    %0 = arith.cmpi eq, %arg2, %c0_i32 : i32
    %1 = arith.extui %0 : i1 to i32
    %c0_i32_0 = arith.constant 0 : i32
    %2 = arith.cmpi ne, %1, %c0_i32_0 : i32
    scf.if %2 {
      %cst_42 = arith.constant 0.000000e+00 : f32
      %72 = vector.broadcast %cst_42 : f32 to vector<16x128xf32>
      %c0_43 = arith.constant 0 : index
      %c0_44 = arith.constant 0 : index
      %73 = vector.load %arg11[%c0_43, %c0_44] : memref<16x128xf32, #tpu.memory_space<vmem>>, vector<16x128xf32>
      tpu.vector_store %arg11[%c0_43, %c0_44], %72 {strides = array<i32>} : memref<16x128xf32, #tpu.memory_space<vmem>>, vector<16x128xf32>,
    } else {
    }
    %c0 = arith.constant 0 : index
    %c0_1 = arith.constant 0 : index
    %3 = vector.load %arg5[%c0, %c0_1] : memref<16x128xf32, #tpu.memory_space<vmem>>, vector<16x128xf32>
    %c0_2 = arith.constant 0 : index
    %c0_3 = arith.constant 0 : index
    %4 = vector.load %arg7[%c0_2, %c0_3] : memref<8x128xf32, #tpu.memory_space<vmem>>, vector<8x128xf32>
    %c0_4 = arith.constant 0 : index
    %c0_5 = arith.constant 0 : index
    %5 = vector.load %arg8[%c0_4, %c0_5] : memref<8x128xf32, #tpu.memory_space<vmem>>, vector<8x128xf32>
    %c0_6 = arith.constant 0 : index
    %c0_7 = arith.constant 0 : index
    %6 = vector.load %arg9[%c0_6, %c0_7] : memref<1x128xf32, #tpu.memory_space<vmem>>, vector<1x128xf32>
    %c0_8 = arith.constant 0 : index
    %c0_9 = arith.constant 0 : index
    %c0_10 = arith.constant 0 : index
    %7 = vector.load %arg4[%c0_8, %c0_9, %c0_10] : memref<1x32x128xf32, #tpu.memory_space<vmem>>, vector<1x8x128xf32>
    %8 = vector.shape_cast %7 : vector<1x8x128xf32> to vector<8x128xf32>
    %c0_11 = arith.constant 0 : index
    %c0_12 = arith.constant 0 : index
    %c0_13 = arith.constant 0 : index
    %9 = vector.load %arg3[%c0_11, %c0_12, %c0_13] : memref<1x32x128xf32, #tpu.memory_space<vmem>>, vector<1x8x128xf32>
    %10 = vector.shape_cast %9 : vector<1x8x128xf32> to vector<8x128xf32>
    %cst = arith.constant 2.000000e+01 : f32
    %11 = vector.broadcast %cst : f32 to vector<8x128xf32>
    %12 = arith.cmpf ogt, %8, %11 : vector<8x128xf32>
    %cst_14 = arith.constant 2.000000e+01 : f32
    %13 = vector.broadcast %cst_14 : f32 to vector<8x128xf32>
    %14 = arith.minimumf %8, %13 : vector<8x128xf32>
    %15 = math.exp %14 : vector<8x128xf32>
    %cst_15 = arith.constant 1.000000e+00 : f32
    %16 = vector.broadcast %cst_15 : f32 to vector<8x128xf32>
    %17 = arith.addf %16, %15 : vector<8x128xf32>
    %18 = math.log %17 : vector<8x128xf32>
    %19 = arith.select %12, %8, %18 : vector<8x128xi1>, vector<8x128xf32>
    %20 = arith.mulf %19, %10 : vector<8x128xf32>
    %c0_16 = arith.constant 0 : index
    %c0_17 = arith.constant 0 : index
    %21 = vector.load %arg15[%c0_16, %c0_17] : memref<16x128xf32, #tpu.memory_space<vmem>>, vector<8x128xf32>
    tpu.vector_store %arg15[%c0_16, %c0_17], %20 {strides = array<i32>} : memref<16x128xf32, #tpu.memory_space<vmem>>, vector<8x128xf32>,
    %c0_18 = arith.constant 0 : index
    %c0_19 = arith.constant 0 : index
    %c0_20 = arith.constant 0 : index
    %22 = vector.load %arg6[%c0_18, %c0_19, %c0_20] : memref<1x512x8xf32, #tpu.memory_space<vmem>>, vector<1x128x8xf32>
    %23 = vector.shape_cast %22 : vector<1x128x8xf32> to vector<128x8xf32>
    %cst_21 = arith.constant dense<0.000000e+00> : vector<128x128xf32>
    %24 = tpu.matmul %23, %4, %cst_21 {dimension_numbers = #tpu.dot_dimension_numbers<[1], [0], [0], [1], [0, 0, 1, 1], [], []>} : vector<128x8xf32>, vector<8x128xf32>, vector<128x128xf32> -> vector<128x128xf32>
    %c0_22 = arith.constant 0 : index
    %c0_23 = arith.constant 0 : index
    %25 = vector.load %arg13[%c0_22, %c0_23] : memref<256x128xf32, #tpu.memory_space<vmem>>, vector<128x128xf32>
    tpu.vector_store %arg13[%c0_22, %c0_23], %24 {strides = array<i32>} : memref<256x128xf32, #tpu.memory_space<vmem>>, vector<128x128xf32>,
    %cst_24 = arith.constant dense<0.000000e+00> : vector<128x128xf32>
    %26 = tpu.matmul %23, %5, %cst_24 {dimension_numbers = #tpu.dot_dimension_numbers<[1], [0], [0], [1], [0, 0, 1, 1], [], []>} : vector<128x8xf32>, vector<8x128xf32>, vector<128x128xf32> -> vector<128x128xf32>
    %c0_25 = arith.constant 0 : index
    %c0_26 = arith.constant 0 : index
    %27 = vector.load %arg14[%c0_25, %c0_26] : memref<256x128xf32, #tpu.memory_space<vmem>>, vector<128x128xf32>
    tpu.vector_store %arg14[%c0_25, %c0_26], %26 {strides = array<i32>} : memref<256x128xf32, #tpu.memory_space<vmem>>, vector<128x128xf32>,
    %28 = vector.extract_strided_slice %19 {offsets = [0, 0], sizes = [1, 128], strides = [1, 1]} : vector<8x128xf32> to vector<1x128xf32>
    %29 = vector.broadcast %28 : vector<1x128xf32> to vector<16x128xf32>
    %30 = arith.mulf %29, %3 : vector<16x128xf32>
    %31 = math.exp %30 : vector<16x128xf32>
    %c0_27 = arith.constant 0 : index
    %c0_28 = arith.constant 0 : index
    %32 = vector.load %arg12[%c0_27, %c0_28] : memref<256x128xf32, #tpu.memory_space<vmem>>, vector<16x128xf32>
    tpu.vector_store %arg12[%c0_27, %c0_28], %31 {strides = array<i32>} : memref<256x128xf32, #tpu.memory_space<vmem>>, vector<16x128xf32>,
    %33 = vector.extract_strided_slice %19 {offsets = [1, 0], sizes = [1, 128], strides = [1, 1]} : vector<8x128xf32> to vector<1x128xf32>
    %34 = vector.broadcast %33 : vector<1x128xf32> to vector<16x128xf32>
    %35 = arith.mulf %34, %3 : vector<16x128xf32>
    %36 = math.exp %35 : vector<16x128xf32>
    %c16 = arith.constant 16 : index
    %c0_29 = arith.constant 0 : index
    %37 = vector.load %arg12[%c16, %c0_29] : memref<256x128xf32, #tpu.memory_space<vmem>>, vector<16x128xf32>
    tpu.vector_store %arg12[%c16, %c0_29], %36 {strides = array<i32>} : memref<256x128xf32, #tpu.memory_space<vmem>>, vector<16x128xf32>,
    %38 = vector.extract_strided_slice %19 {offsets = [2, 0], sizes = [1, 128], strides = [1, 1]} : vector<8x128xf32> to vector<1x128xf32>
    %39 = vector.broadcast %38 : vector<1x128xf32> to vector<16x128xf32>
    %40 = arith.mulf %39, %3 : vector<16x128xf32>
    %41 = math.exp %40 : vector<16x128xf32>
    %c32 = arith.constant 32 : index
    %c0_30 = arith.constant 0 : index
    %42 = vector.load %arg12[%c32, %c0_30] : memref<256x128xf32, #tpu.memory_space<vmem>>, vector<16x128xf32>
    tpu.vector_store %arg12[%c32, %c0_30], %41 {strides = array<i32>} : memref<256x128xf32, #tpu.memory_space<vmem>>, vector<16x128xf32>,
    %43 = vector.extract_strided_slice %19 {offsets = [3, 0], sizes = [1, 128], strides = [1, 1]} : vector<8x128xf32> to vector<1x128xf32>
    %44 = vector.broadcast %43 : vector<1x128xf32> to vector<16x128xf32>
    %45 = arith.mulf %44, %3 : vector<16x128xf32>
    %46 = math.exp %45 : vector<16x128xf32>
    %c48 = arith.constant 48 : index
    %c0_31 = arith.constant 0 : index
    %47 = vector.load %arg12[%c48, %c0_31] : memref<256x128xf32, #tpu.memory_space<vmem>>, vector<16x128xf32>
    tpu.vector_store %arg12[%c48, %c0_31], %46 {strides = array<i32>} : memref<256x128xf32, #tpu.memory_space<vmem>>, vector<16x128xf32>,
    %48 = vector.extract_strided_slice %19 {offsets = [4, 0], sizes = [1, 128], strides = [1, 1]} : vector<8x128xf32> to vector<1x128xf32>
    %49 = vector.broadcast %48 : vector<1x128xf32> to vector<16x128xf32>
    %50 = arith.mulf %49, %3 : vector<16x128xf32>
    %51 = math.exp %50 : vector<16x128xf32>
    %c64 = arith.constant 64 : index
    %c0_32 = arith.constant 0 : index
    %52 = vector.load %arg12[%c64, %c0_32] : memref<256x128xf32, #tpu.memory_space<vmem>>, vector<16x128xf32>
    tpu.vector_store %arg12[%c64, %c0_32], %51 {strides = array<i32>} : memref<256x128xf32, #tpu.memory_space<vmem>>, vector<16x128xf32>,
    %53 = vector.extract_strided_slice %19 {offsets = [5, 0], sizes = [1, 128], strides = [1, 1]} : vector<8x128xf32> to vector<1x128xf32>
    %54 = vector.broadcast %53 : vector<1x128xf32> to vector<16x128xf32>
    %55 = arith.mulf %54, %3 : vector<16x128xf32>
    %56 = math.exp %55 : vector<16x128xf32>
    %c80 = arith.constant 80 : index
    %c0_33 = arith.constant 0 : index
    %57 = vector.load %arg12[%c80, %c0_33] : memref<256x128xf32, #tpu.memory_space<vmem>>, vector<16x128xf32>
    tpu.vector_store %arg12[%c80, %c0_33], %56 {strides = array<i32>} : memref<256x128xf32, #tpu.memory_space<vmem>>, vector<16x128xf32>,
    %58 = vector.extract_strided_slice %19 {offsets = [6, 0], sizes = [1, 128], strides = [1, 1]} : vector<8x128xf32> to vector<1x128xf32>
    %59 = vector.broadcast %58 : vector<1x128xf32> to vector<16x128xf32>
    %60 = arith.mulf %59, %3 : vector<16x128xf32>
    %61 = math.exp %60 : vector<16x128xf32>
    %c96 = arith.constant 96 : index
    %c0_34 = arith.constant 0 : index
    %62 = vector.load %arg12[%c96, %c0_34] : memref<256x128xf32, #tpu.memory_space<vmem>>, vector<16x128xf32>
    tpu.vector_store %arg12[%c96, %c0_34], %61 {strides = array<i32>} : memref<256x128xf32, #tpu.memory_space<vmem>>, vector<16x128xf32>,
    %63 = vector.extract_strided_slice %19 {offsets = [7, 0], sizes = [1, 128], strides = [1, 1]} : vector<8x128xf32> to vector<1x128xf32>
    %64 = vector.broadcast %63 : vector<1x128xf32> to vector<16x128xf32>
    %65 = arith.mulf %64, %3 : vector<16x128xf32>
    %66 = math.exp %65 : vector<16x128xf32>
    %c112 = arith.constant 112 : index
    %c0_35 = arith.constant 0 : index
    %67 = vector.load %arg12[%c112, %c0_35] : memref<256x128xf32, #tpu.memory_space<vmem>>, vector<16x128xf32>
    tpu.vector_store %arg12[%c112, %c0_35], %66 {strides = array<i32>} : memref<256x128xf32, #tpu.memory_space<vmem>>, vector<16x128xf32>,
    %c0_36 = arith.constant 0 : index
    %c0_37 = arith.constant 0 : index
    %68 = vector.load %arg11[%c0_36, %c0_37] : memref<16x128xf32, #tpu.memory_space<vmem>>, vector<16x128xf32>
    %c0_i32_38 = arith.constant 0 : i32
    %c4_i32 = arith.constant 4 : i32
    %69 = arith.addi %c0_i32_38, %c4_i32 : i32
    %c1_i32 = arith.constant 1 : i32
    %70 = scf.for %arg16 = %c0_i32_38 to %69 step %c1_i32 iter_args(%arg17 = %68) -> (vector<16x128xf32>)  : i32 {
      %c2_i32 = arith.constant 2 : i32
      %72 = arith.remsi %arg16, %c2_i32 : i32
      %c1_i32_42 = arith.constant 1 : i32
      %73 = arith.addi %arg16, %c1_i32_42 : i32
      %c3_i32 = arith.constant 3 : i32
      %74 = arith.minsi %73, %c3_i32 : i32
      %c1_i32_43 = arith.constant 1 : i32
      %75 = arith.subi %c1_i32_43, %72 : i32
      %c8_i32 = arith.constant 8 : i32
      %76 = arith.muli %74, %c8_i32 : i32
      %77 = tpu.assume_multiple %76, 8 : i32
      %c128_i32 = arith.constant 128 : i32
      %78 = arith.muli %75, %c128_i32 : i32
      %79 = tpu.assume_multiple %78, 8 : i32
      %c0_44 = arith.constant 0 : index
      %80 = arith.index_cast %77 : i32 to index
      %c0_45 = arith.constant 0 : index
      %81 = vector.load %arg4[%c0_44, %80, %c0_45] : memref<1x32x128xf32, #tpu.memory_space<vmem>>, vector<1x8x128xf32>
      %82 = vector.shape_cast %81 : vector<1x8x128xf32> to vector<8x128xf32>
      %c0_46 = arith.constant 0 : index
      %83 = arith.index_cast %77 : i32 to index
      %c0_47 = arith.constant 0 : index
      %84 = vector.load %arg3[%c0_46, %83, %c0_47] : memref<1x32x128xf32, #tpu.memory_space<vmem>>, vector<1x8x128xf32>
      %85 = vector.shape_cast %84 : vector<1x8x128xf32> to vector<8x128xf32>
      %cst_48 = arith.constant 2.000000e+01 : f32
      %86 = vector.broadcast %cst_48 : f32 to vector<8x128xf32>
      %87 = arith.cmpf ogt, %82, %86 : vector<8x128xf32>
      %cst_49 = arith.constant 2.000000e+01 : f32
      %88 = vector.broadcast %cst_49 : f32 to vector<8x128xf32>
      %89 = arith.minimumf %82, %88 : vector<8x128xf32>
      %90 = math.exp %89 : vector<8x128xf32>
      %cst_50 = arith.constant 1.000000e+00 : f32
      %91 = vector.broadcast %cst_50 : f32 to vector<8x128xf32>
      %92 = arith.addf %91, %90 : vector<8x128xf32>
      %93 = math.log %92 : vector<8x128xf32>
      %94 = arith.select %87, %82, %93 : vector<8x128xi1>, vector<8x128xf32>
      %95 = arith.mulf %94, %85 : vector<8x128xf32>
      %c8_i32_51 = arith.constant 8 : i32
      %96 = arith.muli %75, %c8_i32_51 : i32
      %97 = tpu.assume_multiple %96, 8 : i32
      %98 = arith.index_cast %97 : i32 to index
      %c0_52 = arith.constant 0 : index
      %99 = vector.load %arg15[%98, %c0_52] : memref<16x128xf32, #tpu.memory_space<vmem>>, vector<8x128xf32>
      tpu.vector_store %arg15[%98, %c0_52], %95 {strides = array<i32>} : memref<16x128xf32, #tpu.memory_space<vmem>>, vector<8x128xf32>,
      %c16_i32 = arith.constant 16 : i32
      %100 = arith.muli %77, %c16_i32 : i32
      %101 = tpu.assume_multiple %100, 8 : i32
      %c0_53 = arith.constant 0 : index
      %102 = arith.index_cast %101 : i32 to index
      %c0_54 = arith.constant 0 : index
      %103 = vector.load %arg6[%c0_53, %102, %c0_54] : memref<1x512x8xf32, #tpu.memory_space<vmem>>, vector<1x128x8xf32>
      %104 = vector.shape_cast %103 : vector<1x128x8xf32> to vector<128x8xf32>
      %cst_55 = arith.constant dense<0.000000e+00> : vector<128x128xf32>
      %105 = tpu.matmul %104, %4, %cst_55 {dimension_numbers = #tpu.dot_dimension_numbers<[1], [0], [0], [1], [0, 0, 1, 1], [], []>} : vector<128x8xf32>, vector<8x128xf32>, vector<128x128xf32> -> vector<128x128xf32>
      %106 = arith.index_cast %79 : i32 to index
      %c0_56 = arith.constant 0 : index
      %107 = vector.load %arg13[%106, %c0_56] : memref<256x128xf32, #tpu.memory_space<vmem>>, vector<128x128xf32>
      tpu.vector_store %arg13[%106, %c0_56], %105 {strides = array<i32>} : memref<256x128xf32, #tpu.memory_space<vmem>>, vector<128x128xf32>,
      %cst_57 = arith.constant dense<0.000000e+00> : vector<128x128xf32>
      %108 = tpu.matmul %104, %5, %cst_57 {dimension_numbers = #tpu.dot_dimension_numbers<[1], [0], [0], [1], [0, 0, 1, 1], [], []>} : vector<128x8xf32>, vector<8x128xf32>, vector<128x128xf32> -> vector<128x128xf32>
      %109 = arith.index_cast %79 : i32 to index
      %c0_58 = arith.constant 0 : index
      %110 = vector.load %arg14[%109, %c0_58] : memref<256x128xf32, #tpu.memory_space<vmem>>, vector<128x128xf32>
      tpu.vector_store %arg14[%109, %c0_58], %108 {strides = array<i32>} : memref<256x128xf32, #tpu.memory_space<vmem>>, vector<128x128xf32>,
      %111 = vector.extract_strided_slice %94 {offsets = [0, 0], sizes = [1, 128], strides = [1, 1]} : vector<8x128xf32> to vector<1x128xf32>
      %112 = vector.broadcast %111 : vector<1x128xf32> to vector<16x128xf32>
      %113 = arith.mulf %112, %3 : vector<16x128xf32>
      %114 = math.exp %113 : vector<16x128xf32>
      %c128_i32_59 = arith.constant 128 : i32
      %115 = arith.muli %75, %c128_i32_59 : i32
      %c0_i32_60 = arith.constant 0 : i32
      %116 = arith.addi %115, %c0_i32_60 : i32
      %117 = tpu.assume_multiple %116, 8 : i32
      %118 = arith.index_cast %117 : i32 to index
      %c0_61 = arith.constant 0 : index
      %119 = vector.load %arg12[%118, %c0_61] : memref<256x128xf32, #tpu.memory_space<vmem>>, vector<16x128xf32>
      tpu.vector_store %arg12[%118, %c0_61], %114 {strides = array<i32>} : memref<256x128xf32, #tpu.memory_space<vmem>>, vector<16x128xf32>,
      %120 = vector.extract_strided_slice %94 {offsets = [1, 0], sizes = [1, 128], strides = [1, 1]} : vector<8x128xf32> to vector<1x128xf32>
      %121 = vector.broadcast %120 : vector<1x128xf32> to vector<16x128xf32>
      %122 = arith.mulf %121, %3 : vector<16x128xf32>
      %123 = math.exp %122 : vector<16x128xf32>
      %c128_i32_62 = arith.constant 128 : i32
      %124 = arith.muli %75, %c128_i32_62 : i32
      %c16_i32_63 = arith.constant 16 : i32
      %125 = arith.addi %124, %c16_i32_63 : i32
      %126 = tpu.assume_multiple %125, 8 : i32
      %127 = arith.index_cast %126 : i32 to index
      %c0_64 = arith.constant 0 : index
      %128 = vector.load %arg12[%127, %c0_64] : memref<256x128xf32, #tpu.memory_space<vmem>>, vector<16x128xf32>
      tpu.vector_store %arg12[%127, %c0_64], %123 {strides = array<i32>} : memref<256x128xf32, #tpu.memory_space<vmem>>, vector<16x128xf32>,
      %129 = vector.extract_strided_slice %94 {offsets = [2, 0], sizes = [1, 128], strides = [1, 1]} : vector<8x128xf32> to vector<1x128xf32>
      %130 = vector.broadcast %129 : vector<1x128xf32> to vector<16x128xf32>
      %131 = arith.mulf %130, %3 : vector<16x128xf32>
      %132 = math.exp %131 : vector<16x128xf32>
      %c128_i32_65 = arith.constant 128 : i32
      %133 = arith.muli %75, %c128_i32_65 : i32
      %c32_i32 = arith.constant 32 : i32
      %134 = arith.addi %133, %c32_i32 : i32
      %135 = tpu.assume_multiple %134, 8 : i32
      %136 = arith.index_cast %135 : i32 to index
      %c0_66 = arith.constant 0 : index
      %137 = vector.load %arg12[%136, %c0_66] : memref<256x128xf32, #tpu.memory_space<vmem>>, vector<16x128xf32>
      tpu.vector_store %arg12[%136, %c0_66], %132 {strides = array<i32>} : memref<256x128xf32, #tpu.memory_space<vmem>>, vector<16x128xf32>,
      %138 = vector.extract_strided_slice %94 {offsets = [3, 0], sizes = [1, 128], strides = [1, 1]} : vector<8x128xf32> to vector<1x128xf32>
      %139 = vector.broadcast %138 : vector<1x128xf32> to vector<16x128xf32>
      %140 = arith.mulf %139, %3 : vector<16x128xf32>
      %141 = math.exp %140 : vector<16x128xf32>
      %c128_i32_67 = arith.constant 128 : i32
      %142 = arith.muli %75, %c128_i32_67 : i32
      %c48_i32 = arith.constant 48 : i32
      %143 = arith.addi %142, %c48_i32 : i32
      %144 = tpu.assume_multiple %143, 8 : i32
      %145 = arith.index_cast %144 : i32 to index
      %c0_68 = arith.constant 0 : index
      %146 = vector.load %arg12[%145, %c0_68] : memref<256x128xf32, #tpu.memory_space<vmem>>, vector<16x128xf32>
      tpu.vector_store %arg12[%145, %c0_68], %141 {strides = array<i32>} : memref<256x128xf32, #tpu.memory_space<vmem>>, vector<16x128xf32>,
      %147 = vector.extract_strided_slice %94 {offsets = [4, 0], sizes = [1, 128], strides = [1, 1]} : vector<8x128xf32> to vector<1x128xf32>
      %148 = vector.broadcast %147 : vector<1x128xf32> to vector<16x128xf32>
      %149 = arith.mulf %148, %3 : vector<16x128xf32>
      %150 = math.exp %149 : vector<16x128xf32>
      %c128_i32_69 = arith.constant 128 : i32
      %151 = arith.muli %75, %c128_i32_69 : i32
      %c64_i32 = arith.constant 64 : i32
      %152 = arith.addi %151, %c64_i32 : i32
      %153 = tpu.assume_multiple %152, 8 : i32
      %154 = arith.index_cast %153 : i32 to index
      %c0_70 = arith.constant 0 : index
      %155 = vector.load %arg12[%154, %c0_70] : memref<256x128xf32, #tpu.memory_space<vmem>>, vector<16x128xf32>
      tpu.vector_store %arg12[%154, %c0_70], %150 {strides = array<i32>} : memref<256x128xf32, #tpu.memory_space<vmem>>, vector<16x128xf32>,
      %156 = vector.extract_strided_slice %94 {offsets = [5, 0], sizes = [1, 128], strides = [1, 1]} : vector<8x128xf32> to vector<1x128xf32>
      %157 = vector.broadcast %156 : vector<1x128xf32> to vector<16x128xf32>
      %158 = arith.mulf %157, %3 : vector<16x128xf32>
      %159 = math.exp %158 : vector<16x128xf32>
      %c128_i32_71 = arith.constant 128 : i32
      %160 = arith.muli %75, %c128_i32_71 : i32
      %c80_i32 = arith.constant 80 : i32
      %161 = arith.addi %160, %c80_i32 : i32
      %162 = tpu.assume_multiple %161, 8 : i32
      %163 = arith.index_cast %162 : i32 to index
      %c0_72 = arith.constant 0 : index
      %164 = vector.load %arg12[%163, %c0_72] : memref<256x128xf32, #tpu.memory_space<vmem>>, vector<16x128xf32>
      tpu.vector_store %arg12[%163, %c0_72], %159 {strides = array<i32>} : memref<256x128xf32, #tpu.memory_space<vmem>>, vector<16x128xf32>,
      %165 = vector.extract_strided_slice %94 {offsets = [6, 0], sizes = [1, 128], strides = [1, 1]} : vector<8x128xf32> to vector<1x128xf32>
      %166 = vector.broadcast %165 : vector<1x128xf32> to vector<16x128xf32>
      %167 = arith.mulf %166, %3 : vector<16x128xf32>
      %168 = math.exp %167 : vector<16x128xf32>
      %c128_i32_73 = arith.constant 128 : i32
      %169 = arith.muli %75, %c128_i32_73 : i32
      %c96_i32 = arith.constant 96 : i32
      %170 = arith.addi %169, %c96_i32 : i32
      %171 = tpu.assume_multiple %170, 8 : i32
      %172 = arith.index_cast %171 : i32 to index
      %c0_74 = arith.constant 0 : index
      %173 = vector.load %arg12[%172, %c0_74] : memref<256x128xf32, #tpu.memory_space<vmem>>, vector<16x128xf32>
      tpu.vector_store %arg12[%172, %c0_74], %168 {strides = array<i32>} : memref<256x128xf32, #tpu.memory_space<vmem>>, vector<16x128xf32>,
      %174 = vector.extract_strided_slice %94 {offsets = [7, 0], sizes = [1, 128], strides = [1, 1]} : vector<8x128xf32> to vector<1x128xf32>
      %175 = vector.broadcast %174 : vector<1x128xf32> to vector<16x128xf32>
      %176 = arith.mulf %175, %3 : vector<16x128xf32>
      %177 = math.exp %176 : vector<16x128xf32>
      %c128_i32_75 = arith.constant 128 : i32
      %178 = arith.muli %75, %c128_i32_75 : i32
      %c112_i32 = arith.constant 112 : i32
      %179 = arith.addi %178, %c112_i32 : i32
      %180 = tpu.assume_multiple %179, 8 : i32
      %181 = arith.index_cast %180 : i32 to index
      %c0_76 = arith.constant 0 : index
      %182 = vector.load %arg12[%181, %c0_76] : memref<256x128xf32, #tpu.memory_space<vmem>>, vector<16x128xf32>
      tpu.vector_store %arg12[%181, %c0_76], %177 {strides = array<i32>} : memref<256x128xf32, #tpu.memory_space<vmem>>, vector<16x128xf32>,
      %c8_i32_77 = arith.constant 8 : i32
      %183 = arith.muli %arg16, %c8_i32_77 : i32
      %184 = tpu.assume_multiple %183, 8 : i32
      %c0_78 = arith.constant 0 : index
      %185 = arith.index_cast %184 : i32 to index
      %c0_79 = arith.constant 0 : index
      %186 = vector.load %arg3[%c0_78, %185, %c0_79] : memref<1x32x128xf32, #tpu.memory_space<vmem>>, vector<1x8x128xf32>
      %187 = vector.shape_cast %186 : vector<1x8x128xf32> to vector<8x128xf32>
      %c8_i32_80 = arith.constant 8 : i32
      %188 = arith.muli %72, %c8_i32_80 : i32
      %189 = tpu.assume_multiple %188, 8 : i32
      %190 = arith.index_cast %189 : i32 to index
      %c0_81 = arith.constant 0 : index
      %191 = vector.load %arg15[%190, %c0_81] : memref<16x128xf32, #tpu.memory_space<vmem>>, vector<8x128xf32>
      %c128_i32_82 = arith.constant 128 : i32
      %192 = arith.muli %72, %c128_i32_82 : i32
      %c0_i32_83 = arith.constant 0 : i32
      %193 = arith.addi %192, %c0_i32_83 : i32
      %194 = tpu.assume_multiple %193, 8 : i32
      %195 = arith.index_cast %194 : i32 to index
      %c0_84 = arith.constant 0 : index
      %196 = vector.load %arg12[%195, %c0_84] : memref<256x128xf32, #tpu.memory_space<vmem>>, vector<16x128xf32>
      %197 = vector.extract_strided_slice %191 {offsets = [0, 0], sizes = [1, 128], strides = [1, 1]} : vector<8x128xf32> to vector<1x128xf32>
      %198 = arith.index_cast %194 : i32 to index
      %c0_85 = arith.constant 0 : index
      %199 = vector.load %arg13[%198, %c0_85] : memref<256x128xf32, #tpu.memory_space<vmem>>, vector<16x128xf32>
      %200 = vector.broadcast %197 : vector<1x128xf32> to vector<16x128xf32>
      %201 = arith.mulf %200, %199 : vector<16x128xf32>
      %202 = arith.mulf %196, %arg17 : vector<16x128xf32>
      %203 = arith.addf %202, %201 : vector<16x128xf32>
      %204 = arith.index_cast %194 : i32 to index
      %c0_86 = arith.constant 0 : index
      %205 = vector.load %arg14[%204, %c0_86] : memref<256x128xf32, #tpu.memory_space<vmem>>, vector<16x128xf32>
      %206 = arith.mulf %203, %205 : vector<16x128xf32>
      %cst_87 = arith.constant dense<0.000000e+00> : vector<128xf32>
      %207 = vector.multi_reduction <add>, %206, %cst_87 [0] : vector<16x128xf32> to vector<128xf32>
      %208 = vector.shape_cast %207 : vector<128xf32> to vector<1x128xf32>
      %c128_i32_88 = arith.constant 128 : i32
      %209 = arith.muli %72, %c128_i32_88 : i32
      %c16_i32_89 = arith.constant 16 : i32
      %210 = arith.addi %209, %c16_i32_89 : i32
      %211 = tpu.assume_multiple %210, 8 : i32
      %212 = arith.index_cast %211 : i32 to index
      %c0_90 = arith.constant 0 : index
      %213 = vector.load %arg12[%212, %c0_90] : memref<256x128xf32, #tpu.memory_space<vmem>>, vector<16x128xf32>
      %214 = vector.extract_strided_slice %191 {offsets = [1, 0], sizes = [1, 128], strides = [1, 1]} : vector<8x128xf32> to vector<1x128xf32>
      %215 = arith.index_cast %211 : i32 to index
      %c0_91 = arith.constant 0 : index
      %216 = vector.load %arg13[%215, %c0_91] : memref<256x128xf32, #tpu.memory_space<vmem>>, vector<16x128xf32>
      %217 = vector.broadcast %214 : vector<1x128xf32> to vector<16x128xf32>
      %218 = arith.mulf %217, %216 : vector<16x128xf32>
      %219 = arith.mulf %213, %203 : vector<16x128xf32>
      %220 = arith.addf %219, %218 : vector<16x128xf32>
      %221 = arith.index_cast %211 : i32 to index
      %c0_92 = arith.constant 0 : index
      %222 = vector.load %arg14[%221, %c0_92] : memref<256x128xf32, #tpu.memory_space<vmem>>, vector<16x128xf32>
      %223 = arith.mulf %220, %222 : vector<16x128xf32>
      %cst_93 = arith.constant dense<0.000000e+00> : vector<128xf32>
      %224 = vector.multi_reduction <add>, %223, %cst_93 [0] : vector<16x128xf32> to vector<128xf32>
      %225 = vector.shape_cast %224 : vector<128xf32> to vector<1x128xf32>
      %c128_i32_94 = arith.constant 128 : i32
      %226 = arith.muli %72, %c128_i32_94 : i32
      %c32_i32_95 = arith.constant 32 : i32
      %227 = arith.addi %226, %c32_i32_95 : i32
      %228 = tpu.assume_multiple %227, 8 : i32
      %229 = arith.index_cast %228 : i32 to index
      %c0_96 = arith.constant 0 : index
      %230 = vector.load %arg12[%229, %c0_96] : memref<256x128xf32, #tpu.memory_space<vmem>>, vector<16x128xf32>
      %231 = vector.extract_strided_slice %191 {offsets = [2, 0], sizes = [1, 128], strides = [1, 1]} : vector<8x128xf32> to vector<1x128xf32>
      %232 = arith.index_cast %228 : i32 to index
      %c0_97 = arith.constant 0 : index
      %233 = vector.load %arg13[%232, %c0_97] : memref<256x128xf32, #tpu.memory_space<vmem>>, vector<16x128xf32>
      %234 = vector.broadcast %231 : vector<1x128xf32> to vector<16x128xf32>
      %235 = arith.mulf %234, %233 : vector<16x128xf32>
      %236 = arith.mulf %230, %220 : vector<16x128xf32>
      %237 = arith.addf %236, %235 : vector<16x128xf32>
      %238 = arith.index_cast %228 : i32 to index
      %c0_98 = arith.constant 0 : index
      %239 = vector.load %arg14[%238, %c0_98] : memref<256x128xf32, #tpu.memory_space<vmem>>, vector<16x128xf32>
      %240 = arith.mulf %237, %239 : vector<16x128xf32>
      %cst_99 = arith.constant dense<0.000000e+00> : vector<128xf32>
      %241 = vector.multi_reduction <add>, %240, %cst_99 [0] : vector<16x128xf32> to vector<128xf32>
      %242 = vector.shape_cast %241 : vector<128xf32> to vector<1x128xf32>
      %c128_i32_100 = arith.constant 128 : i32
      %243 = arith.muli %72, %c128_i32_100 : i32
      %c48_i32_101 = arith.constant 48 : i32
      %244 = arith.addi %243, %c48_i32_101 : i32
      %245 = tpu.assume_multiple %244, 8 : i32
      %246 = arith.index_cast %245 : i32 to index
      %c0_102 = arith.constant 0 : index
      %247 = vector.load %arg12[%246, %c0_102] : memref<256x128xf32, #tpu.memory_space<vmem>>, vector<16x128xf32>
      %248 = vector.extract_strided_slice %191 {offsets = [3, 0], sizes = [1, 128], strides = [1, 1]} : vector<8x128xf32> to vector<1x128xf32>
      %249 = arith.index_cast %245 : i32 to index
      %c0_103 = arith.constant 0 : index
      %250 = vector.load %arg13[%249, %c0_103] : memref<256x128xf32, #tpu.memory_space<vmem>>, vector<16x128xf32>
      %251 = vector.broadcast %248 : vector<1x128xf32> to vector<16x128xf32>
      %252 = arith.mulf %251, %250 : vector<16x128xf32>
      %253 = arith.mulf %247, %237 : vector<16x128xf32>
      %254 = arith.addf %253, %252 : vector<16x128xf32>
      %255 = arith.index_cast %245 : i32 to index
      %c0_104 = arith.constant 0 : index
      %256 = vector.load %arg14[%255, %c0_104] : memref<256x128xf32, #tpu.memory_space<vmem>>, vector<16x128xf32>
      %257 = arith.mulf %254, %256 : vector<16x128xf32>
      %cst_105 = arith.constant dense<0.000000e+00> : vector<128xf32>
      %258 = vector.multi_reduction <add>, %257, %cst_105 [0] : vector<16x128xf32> to vector<128xf32>
      %259 = vector.shape_cast %258 : vector<128xf32> to vector<1x128xf32>
      %c128_i32_106 = arith.constant 128 : i32
      %260 = arith.muli %72, %c128_i32_106 : i32
      %c64_i32_107 = arith.constant 64 : i32
      %261 = arith.addi %260, %c64_i32_107 : i32
      %262 = tpu.assume_multiple %261, 8 : i32
      %263 = arith.index_cast %262 : i32 to index
      %c0_108 = arith.constant 0 : index
      %264 = vector.load %arg12[%263, %c0_108] : memref<256x128xf32, #tpu.memory_space<vmem>>, vector<16x128xf32>
      %265 = vector.extract_strided_slice %191 {offsets = [4, 0], sizes = [1, 128], strides = [1, 1]} : vector<8x128xf32> to vector<1x128xf32>
      %266 = arith.index_cast %262 : i32 to index
      %c0_109 = arith.constant 0 : index
      %267 = vector.load %arg13[%266, %c0_109] : memref<256x128xf32, #tpu.memory_space<vmem>>, vector<16x128xf32>
      %268 = vector.broadcast %265 : vector<1x128xf32> to vector<16x128xf32>
      %269 = arith.mulf %268, %267 : vector<16x128xf32>
      %270 = arith.mulf %264, %254 : vector<16x128xf32>
      %271 = arith.addf %270, %269 : vector<16x128xf32>
      %272 = arith.index_cast %262 : i32 to index
      %c0_110 = arith.constant 0 : index
      %273 = vector.load %arg14[%272, %c0_110] : memref<256x128xf32, #tpu.memory_space<vmem>>, vector<16x128xf32>
      %274 = arith.mulf %271, %273 : vector<16x128xf32>
      %cst_111 = arith.constant dense<0.000000e+00> : vector<128xf32>
      %275 = vector.multi_reduction <add>, %274, %cst_111 [0] : vector<16x128xf32> to vector<128xf32>
      %276 = vector.shape_cast %275 : vector<128xf32> to vector<1x128xf32>
      %c128_i32_112 = arith.constant 128 : i32
      %277 = arith.muli %72, %c128_i32_112 : i32
      %c80_i32_113 = arith.constant 80 : i32
      %278 = arith.addi %277, %c80_i32_113 : i32
      %279 = tpu.assume_multiple %278, 8 : i32
      %280 = arith.index_cast %279 : i32 to index
      %c0_114 = arith.constant 0 : index
      %281 = vector.load %arg12[%280, %c0_114] : memref<256x128xf32, #tpu.memory_space<vmem>>, vector<16x128xf32>
      %282 = vector.extract_strided_slice %191 {offsets = [5, 0], sizes = [1, 128], strides = [1, 1]} : vector<8x128xf32> to vector<1x128xf32>
      %283 = arith.index_cast %279 : i32 to index
      %c0_115 = arith.constant 0 : index
      %284 = vector.load %arg13[%283, %c0_115] : memref<256x128xf32, #tpu.memory_space<vmem>>, vector<16x128xf32>
      %285 = vector.broadcast %282 : vector<1x128xf32> to vector<16x128xf32>
      %286 = arith.mulf %285, %284 : vector<16x128xf32>
      %287 = arith.mulf %281, %271 : vector<16x128xf32>
      %288 = arith.addf %287, %286 : vector<16x128xf32>
      %289 = arith.index_cast %279 : i32 to index
      %c0_116 = arith.constant 0 : index
      %290 = vector.load %arg14[%289, %c0_116] : memref<256x128xf32, #tpu.memory_space<vmem>>, vector<16x128xf32>
      %291 = arith.mulf %288, %290 : vector<16x128xf32>
      %cst_117 = arith.constant dense<0.000000e+00> : vector<128xf32>
      %292 = vector.multi_reduction <add>, %291, %cst_117 [0] : vector<16x128xf32> to vector<128xf32>
      %293 = vector.shape_cast %292 : vector<128xf32> to vector<1x128xf32>
      %c128_i32_118 = arith.constant 128 : i32
      %294 = arith.muli %72, %c128_i32_118 : i32
      %c96_i32_119 = arith.constant 96 : i32
      %295 = arith.addi %294, %c96_i32_119 : i32
      %296 = tpu.assume_multiple %295, 8 : i32
      %297 = arith.index_cast %296 : i32 to index
      %c0_120 = arith.constant 0 : index
      %298 = vector.load %arg12[%297, %c0_120] : memref<256x128xf32, #tpu.memory_space<vmem>>, vector<16x128xf32>
      %299 = vector.extract_strided_slice %191 {offsets = [6, 0], sizes = [1, 128], strides = [1, 1]} : vector<8x128xf32> to vector<1x128xf32>
      %300 = arith.index_cast %296 : i32 to index
      %c0_121 = arith.constant 0 : index
      %301 = vector.load %arg13[%300, %c0_121] : memref<256x128xf32, #tpu.memory_space<vmem>>, vector<16x128xf32>
      %302 = vector.broadcast %299 : vector<1x128xf32> to vector<16x128xf32>
      %303 = arith.mulf %302, %301 : vector<16x128xf32>
      %304 = arith.mulf %298, %288 : vector<16x128xf32>
      %305 = arith.addf %304, %303 : vector<16x128xf32>
      %306 = arith.index_cast %296 : i32 to index
      %c0_122 = arith.constant 0 : index
      %307 = vector.load %arg14[%306, %c0_122] : memref<256x128xf32, #tpu.memory_space<vmem>>, vector<16x128xf32>
      %308 = arith.mulf %305, %307 : vector<16x128xf32>
      %cst_123 = arith.constant dense<0.000000e+00> : vector<128xf32>
      %309 = vector.multi_reduction <add>, %308, %cst_123 [0] : vector<16x128xf32> to vector<128xf32>
      %310 = vector.shape_cast %309 : vector<128xf32> to vector<1x128xf32>
      %c128_i32_124 = arith.constant 128 : i32
      %311 = arith.muli %72, %c128_i32_124 : i32
      %c112_i32_125 = arith.constant 112 : i32
      %312 = arith.addi %311, %c112_i32_125 : i32
      %313 = tpu.assume_multiple %312, 8 : i32
      %314 = arith.index_cast %313 : i32 to index
      %c0_126 = arith.constant 0 : index
      %315 = vector.load %arg12[%314, %c0_126] : memref<256x128xf32, #tpu.memory_space<vmem>>, vector<16x128xf32>
      %316 = vector.extract_strided_slice %191 {offsets = [7, 0], sizes = [1, 128], strides = [1, 1]} : vector<8x128xf32> to vector<1x128xf32>
      %317 = arith.index_cast %313 : i32 to index
      %c0_127 = arith.constant 0 : index
      %318 = vector.load %arg13[%317, %c0_127] : memref<256x128xf32, #tpu.memory_space<vmem>>, vector<16x128xf32>
      %319 = vector.broadcast %316 : vector<1x128xf32> to vector<16x128xf32>
      %320 = arith.mulf %319, %318 : vector<16x128xf32>
      %321 = arith.mulf %315, %305 : vector<16x128xf32>
      %322 = arith.addf %321, %320 : vector<16x128xf32>
      %323 = arith.index_cast %313 : i32 to index
      %c0_128 = arith.constant 0 : index
      %324 = vector.load %arg14[%323, %c0_128] : memref<256x128xf32, #tpu.memory_space<vmem>>, vector<16x128xf32>
      %325 = arith.mulf %322, %324 : vector<16x128xf32>
      %cst_129 = arith.constant dense<0.000000e+00> : vector<128xf32>
      %326 = vector.multi_reduction <add>, %325, %cst_129 [0] : vector<16x128xf32> to vector<128xf32>
      %327 = vector.shape_cast %326 : vector<128xf32> to vector<1x128xf32>
      %328 = tpu.concatenate %208, %225, %242, %259, %276, %293, %310, %327 in 0 : vector<1x128xf32>, vector<1x128xf32>, vector<1x128xf32>, vector<1x128xf32>, vector<1x128xf32>, vector<1x128xf32>, vector<1x128xf32>, vector<1x128xf32> -> vector<8x128xf32>
      %329 = vector.broadcast %6 : vector<1x128xf32> to vector<8x128xf32>
      %330 = arith.mulf %329, %187 : vector<8x128xf32>
      %331 = arith.addf %328, %330 : vector<8x128xf32>
      %c0_130 = arith.constant 0 : index
      %332 = arith.index_cast %184 : i32 to index
      %c0_131 = arith.constant 0 : index
      %333 = vector.load %arg10[%c0_130, %332, %c0_131] : memref<1x32x128xf32, #tpu.memory_space<vmem>>, vector<1x8x128xf32>
      %334 = vector.shape_cast %333 : vector<1x8x128xf32> to vector<8x128xf32>
      %335 = vector.shape_cast %331 : vector<8x128xf32> to vector<1x8x128xf32>
      tpu.vector_store %arg10[%c0_130, %332, %c0_131], %335 {strides = array<i32>} : memref<1x32x128xf32, #tpu.memory_space<vmem>>, vector<1x8x128xf32>,
      scf.yield %322 : vector<16x128xf32>
    }
    %c4_i32_39 = arith.constant 4 : i32
    %c0_40 = arith.constant 0 : index
    %c0_41 = arith.constant 0 : index
    %71 = vector.load %arg11[%c0_40, %c0_41] : memref<16x128xf32, #tpu.memory_space<vmem>>, vector<16x128xf32>
    tpu.vector_store %arg11[%c0_40, %c0_41], %70 {strides = array<i32>} : memref<16x128xf32, #tpu.memory_space<vmem>>, vector<16x128xf32>,
    return
  }
  func.func @transform_0(%arg0: i32, %arg1: i32, %arg2: i32) -> (i32, i32, i32) {
    %c0_i32 = arith.constant 0 : i32
    return %arg0, %arg2, %arg1 : i32, i32, i32
  }
  func.func @transform_1(%arg0: i32, %arg1: i32, %arg2: i32) -> (i32, i32, i32) {
    %c0_i32 = arith.constant 0 : i32
    return %arg0, %arg2, %arg1 : i32, i32, i32
  }
  func.func @transform_2(%arg0: i32, %arg1: i32, %arg2: i32) -> (i32, i32) {
    %c0_i32 = arith.constant 0 : i32
    %c0_i32_0 = arith.constant 0 : i32
    return %c0_i32, %arg1 : i32, i32
  }
  func.func @transform_3(%arg0: i32, %arg1: i32, %arg2: i32) -> (i32, i32, i32) {
    %c0_i32 = arith.constant 0 : i32
    %c0_i32_0 = arith.constant 0 : i32
    return %arg0, %arg2, %c0_i32 : i32, i32, i32
  }
  func.func @transform_4(%arg0: i32, %arg1: i32, %arg2: i32) -> (i32, i32) {
    %c0_i32 = arith.constant 0 : i32
    %c0_i32_0 = arith.constant 0 : i32
    return %c0_i32, %arg1 : i32, i32
  }
  func.func @transform_5(%arg0: i32, %arg1: i32, %arg2: i32) -> (i32, i32) {
    %c0_i32 = arith.constant 0 : i32
    %c0_i32_0 = arith.constant 0 : i32
    return %c0_i32, %arg1 : i32, i32
  }
  func.func @transform_6(%arg0: i32, %arg1: i32, %arg2: i32) -> (i32, i32) {
    %c0_i32 = arith.constant 0 : i32
    %c0_i32_0 = arith.constant 0 : i32
    return %c0_i32, %arg1 : i32, i32
  }
  func.func @transform_7(%arg0: i32, %arg1: i32, %arg2: i32) -> (i32, i32, i32) {
    %c0_i32 = arith.constant 0 : i32
    return %arg0, %arg2, %arg1 : i32, i32, i32
  }
}

module attributes {stable_mosaic.version = 11 : i64} {
  func.func @_norm_gate_proj_kernel(%arg0: i32, %arg1: memref<128x64xf32, #tpu.memory_space<vmem>>, %arg2: memref<128x64xf32, #tpu.memory_space<vmem>>, %arg3: memref<1x64xf32, #tpu.memory_space<vmem>>, %arg4: memref<1x64xf32, #tpu.memory_space<vmem>>, %arg5: memref<64x128xbf16, #tpu.memory_space<vmem>>, %arg6: memref<128x128xf32, #tpu.memory_space<vmem>>) attributes {dimension_semantics = [#tpu.dimension_semantics<parallel>], iteration_bounds = array<i64: 1>, scalar_prefetch = 0 : i64, scratch_operands = 0 : i64, tpu.core_type = #tpu.core_type<tc>, window_params = [{transform_indices = @transform_0, window_bounds = array<i64: 128, 64>}, {transform_indices = @transform_1, window_bounds = array<i64: 128, 64>}, {pipeline_mode = #tpu.pipeline_mode<synchronous>, transform_indices = @transform_2, window_bounds = array<i64: 1, 64>}, {pipeline_mode = #tpu.pipeline_mode<synchronous>, transform_indices = @transform_3, window_bounds = array<i64: 1, 64>}, {pipeline_mode = #tpu.pipeline_mode<synchronous>, transform_indices = @transform_4, window_bounds = array<i64: 64, 128>}, {transform_indices = @transform_5, window_bounds = array<i64: 128, 128>}]} {
    %c0 = arith.constant 0 : index
    %c0_0 = arith.constant 0 : index
    %0 = vector.load %arg1[%c0, %c0_0] : memref<128x64xf32, #tpu.memory_space<vmem>>, vector<128x64xf32>
    %cst = arith.constant dense<0.000000e+00> : vector<128xf32>
    %1 = vector.multi_reduction <add>, %0, %cst [1] : vector<128x64xf32> to vector<128xf32>
    %2 = vector.shape_cast %1 : vector<128xf32> to vector<128x1xf32>
    %cst_1 = arith.constant 6.400000e+01 : f32
    %3 = vector.broadcast %cst_1 : f32 to vector<128x1xf32>
    %4 = arith.divf %2, %3 : vector<128x1xf32>
    %5 = vector.broadcast %4 : vector<128x1xf32> to vector<128x64xf32>
    %6 = arith.subf %0, %5 : vector<128x64xf32>
    %7 = arith.mulf %6, %6 : vector<128x64xf32>
    %cst_2 = arith.constant dense<0.000000e+00> : vector<128xf32>
    %8 = vector.multi_reduction <add>, %7, %cst_2 [1] : vector<128x64xf32> to vector<128xf32>
    %9 = vector.shape_cast %8 : vector<128xf32> to vector<128x1xf32>
    %cst_3 = arith.constant 6.400000e+01 : f32
    %10 = vector.broadcast %cst_3 : f32 to vector<128x1xf32>
    %11 = arith.divf %9, %10 : vector<128x1xf32>
    %12 = vector.broadcast %4 : vector<128x1xf32> to vector<128x64xf32>
    %13 = arith.subf %0, %12 : vector<128x64xf32>
    %cst_4 = arith.constant 9.99999974E-6 : f32
    %14 = vector.broadcast %cst_4 : f32 to vector<128x1xf32>
    %15 = arith.addf %11, %14 : vector<128x1xf32>
    %16 = math.rsqrt %15 : vector<128x1xf32>
    %17 = vector.broadcast %16 : vector<128x1xf32> to vector<128x64xf32>
    %18 = arith.mulf %13, %17 : vector<128x64xf32>
    %c0_5 = arith.constant 0 : index
    %c0_6 = arith.constant 0 : index
    %19 = vector.load %arg3[%c0_5, %c0_6] : memref<1x64xf32, #tpu.memory_space<vmem>>, vector<1x64xf32>
    %20 = vector.broadcast %19 : vector<1x64xf32> to vector<128x64xf32>
    %21 = arith.mulf %18, %20 : vector<128x64xf32>
    %c0_7 = arith.constant 0 : index
    %c0_8 = arith.constant 0 : index
    %22 = vector.load %arg4[%c0_7, %c0_8] : memref<1x64xf32, #tpu.memory_space<vmem>>, vector<1x64xf32>
    %23 = vector.broadcast %22 : vector<1x64xf32> to vector<128x64xf32>
    %24 = arith.addf %21, %23 : vector<128x64xf32>
    %c0_9 = arith.constant 0 : index
    %c0_10 = arith.constant 0 : index
    %25 = vector.load %arg2[%c0_9, %c0_10] : memref<128x64xf32, #tpu.memory_space<vmem>>, vector<128x64xf32>
    %cst_11 = arith.constant 0.000000e+00 : f32
    %26 = vector.broadcast %cst_11 : f32 to vector<128x64xf32>
    %27 = arith.subf %26, %25 : vector<128x64xf32>
    %28 = math.exp %27 : vector<128x64xf32>
    %cst_12 = arith.constant 1.000000e+00 : f32
    %29 = vector.broadcast %cst_12 : f32 to vector<128x64xf32>
    %30 = arith.addf %29, %28 : vector<128x64xf32>
    %31 = arith.divf %25, %30 : vector<128x64xf32>
    %32 = arith.mulf %24, %31 : vector<128x64xf32>
    %33 = arith.truncf %32 : vector<128x64xf32> to vector<128x64xbf16>
    %c0_13 = arith.constant 0 : index
    %c0_14 = arith.constant 0 : index
    %34 = vector.load %arg5[%c0_13, %c0_14] : memref<64x128xbf16, #tpu.memory_space<vmem>>, vector<64x128xbf16>
    %cst_15 = arith.constant dense<0.000000e+00> : vector<128x128xf32>
    %35 = tpu.matmul %33, %34, %cst_15 {dimension_numbers = #tpu.dot_dimension_numbers<[1], [0], [0], [1], [0, 0, 1, 1], [], []>} : vector<128x64xbf16>, vector<64x128xbf16>, vector<128x128xf32> -> vector<128x128xf32>
    %c0_16 = arith.constant 0 : index
    %c0_17 = arith.constant 0 : index
    %36 = vector.load %arg6[%c0_16, %c0_17] : memref<128x128xf32, #tpu.memory_space<vmem>>, vector<128x128xf32>
    tpu.vector_store %arg6[%c0_16, %c0_17], %35 {strides = array<i32>} : memref<128x128xf32, #tpu.memory_space<vmem>>, vector<128x128xf32>,
    return
  }
  func.func @transform_0(%arg0: i32) -> (i32, i32) {
    %c0_i32 = arith.constant 0 : i32
    %c0_i32_0 = arith.constant 0 : i32
    return %arg0, %c0_i32 : i32, i32
  }
  func.func @transform_1(%arg0: i32) -> (i32, i32) {
    %c0_i32 = arith.constant 0 : i32
    %c0_i32_0 = arith.constant 0 : i32
    return %arg0, %c0_i32 : i32, i32
  }
  func.func @transform_2(%arg0: i32) -> (i32, i32) {
    %c0_i32 = arith.constant 0 : i32
    %c0_i32_0 = arith.constant 0 : i32
    %c0_i32_1 = arith.constant 0 : i32
    return %c0_i32, %c0_i32_0 : i32, i32
  }
  func.func @transform_3(%arg0: i32) -> (i32, i32) {
    %c0_i32 = arith.constant 0 : i32
    %c0_i32_0 = arith.constant 0 : i32
    %c0_i32_1 = arith.constant 0 : i32
    return %c0_i32, %c0_i32_0 : i32, i32
  }
  func.func @transform_4(%arg0: i32) -> (i32, i32) {
    %c0_i32 = arith.constant 0 : i32
    %c0_i32_0 = arith.constant 0 : i32
    %c0_i32_1 = arith.constant 0 : i32
    return %c0_i32, %c0_i32_0 : i32, i32
  }
  func.func @transform_5(%arg0: i32) -> (i32, i32) {
    %c0_i32 = arith.constant 0 : i32
    %c0_i32_0 = arith.constant 0 : i32
    return %arg0, %c0_i32 : i32, i32
  }
}

</mosaic_0001>

<llo_original>
// kernel: _lambda_.7
$region0: #{_lambda_.7}
  #allocation0 [shape = 'u32[]', space=smem, size = 0x4, offset = 0x4, fixed_abs, tag = 'smem constant byte address 0x4 - core index']
  #allocation1 [shape = 'u32[144,128]{1,0:T(1,128)}', space=vmem, size = 0x12000, scoped, tag = 'internal scratch']
  %s0 = inlined_call_operand.vmem [shape: f32[4,128,64], index: 0, kind: input, shape index: {}]
  %s1 = inlined_call_operand.vmem [shape: f32[4,64,128], index: 1, kind: input, shape index: {}]
  %s2 = inlined_call_operand.vmem [shape: f32[4,128,128], index: 2, kind: output, shape index: {}]
  %s3 = sld [smem:[#allocation0]]
  $region41: #{_lambda_.7} parent=0
    _
  %s5 = ssub.s32 1, %s3
  %s6 = scalar_select 0, %s5, %s3
  loop: start=0, step=1, limit=6
  $region2: #{_lambda_.7} parent=0 // loop_pre_header
    _
  $region3: #{_lambda_.7} parent=0 // loop_header
    %s8 = sphi 0, %s12
    %p9 = scmp.ge.s32.totalorder %s8, 6
    %s15 = sphi 0, %s27
    %s16 = sphi 0, %s23
    %s17 = sphi 0, %s15
    %s18 = sphi 0, %s16
    %s19 = sphi 0, %s17
    %s20 = sphi 0, %s18
    %s32 = sphi 0, %s34
    %s35 = sphi 0, %s32
    %s36 = sphi 0, %s35
    %s52 = sphi 0, %s36
    %s58 = sphi 0, %s60
    %s61 = sphi 0, %s58
    %s62 = sphi 0, %s61
    %s78 = sphi 0, %s62
    %s86 = sphi 0, %s88
    %s89 = sphi 0, %s86
    %s90 = sphi 0, %s89
    %s106 = sphi 0, %s90
  $region4: #{_lambda_.7} parent=0 // loop_header_branch
    %11 = sbr.rel (%p9) target = $region8
  $region5: #{_lambda_.7} parent=0 // loop_body
    %s13 = ssub.s32 %s8, 1
    %s14 = ssub.s32 %s8, 2
    %s21 = sadd.s32 1, %s16
    %p22 = scmp.ge.s32.totalorder %s21, 1
    %s23 = scalar_select %p22, 0, %s21
    %s24 = sadd.s32 1, %s15
    %s25 = scalar_select %p22, %s24, %s15
    %p26 = scmp.ge.s32.totalorder %s25, 4
    %s27 = scalar_select %p26, 0, %s25
    %s28 = ssub.s32 %s15, %s27
    %s29 = ssub.s32 %s16, %s23
    %s30 = sor.u32 %s28, %s29
    %p31 = scmp.eq.s32.totalorder %s30, 0
    %s33 = sadd.s32 %s32, 1
    %s34 = scalar_select %p31, %s32, %s33
    %p37 = pneg %p31
    %p38 = scmp.eq.s32.totalorder %s8, 3
    %p39 = por %p37, %p38
    %p40 = scmp.ne.s32.totalorder %s32, %s35
    %p41 = scmp.eq.s32.totalorder %s8, 0
    %p42 = por %p40, %p41
    %p43 = scmp.ne.s32.totalorder %s32, %s35
    %p44 = scmp.eq.s32.totalorder %s13, 3
    %p45 = por %p43, %p44
    %p46 = scmp.ne.s32.totalorder %s35, %s36
    %p47 = scmp.eq.s32.totalorder %s13, 0
    %p48 = por %p46, %p47
    %p49 = scmp.ne.s32.totalorder %s35, %s36
    %p50 = scmp.eq.s32.totalorder %s14, 3
    %p51 = por %p49, %p50
    %p53 = scmp.ne.s32.totalorder %s36, %s52
    %p54 = scmp.eq.s32.totalorder %s14, 0
    %p55 = por %p53, %p54
    %s56 = ssub.s32 %s15, %s27
    %p57 = scmp.eq.s32.totalorder %s56, 0
    %s59 = sadd.s32 %s58, 1
    %s60 = scalar_select %p57, %s58, %s59
    %p63 = pneg %p57
    %p64 = scmp.eq.s32.totalorder %s8, 3
    %p65 = por %p63, %p64
    %p66 = scmp.ne.s32.totalorder %s58, %s61
    %p67 = scmp.eq.s32.totalorder %s8, 0
    %p68 = por %p66, %p67
    %p69 = scmp.ne.s32.totalorder %s58, %s61
    %p70 = scmp.eq.s32.totalorder %s13, 3
    %p71 = por %p69, %p70
    %p72 = scmp.ne.s32.totalorder %s61, %s62
    %p73 = scmp.eq.s32.totalorder %s13, 0
    %p74 = por %p72, %p73
    %p75 = scmp.ne.s32.totalorder %s61, %s62
    %p76 = scmp.eq.s32.totalorder %s14, 3
    %p77 = por %p75, %p76
    %p79 = scmp.ne.s32.totalorder %s62, %s78
    %p80 = scmp.eq.s32.totalorder %s14, 0
    %p81 = por %p79, %p80
    %s82 = ssub.s32 %s15, %s27
    %s83 = ssub.s32 %s16, %s23
    %s84 = sor.u32 %s82, %s83
    %p85 = scmp.eq.s32.totalorder %s84, 0
    %s87 = sadd.s32 %s86, 1
    %s88 = scalar_select %p85, %s86, %s87
    %p91 = pneg %p85
    %p92 = scmp.eq.s32.totalorder %s8, 3
    %p93 = por %p91, %p92
    %p94 = scmp.ne.s32.totalorder %s86, %s89
    %p95 = scmp.eq.s32.totalorder %s8, 0
    %p96 = por %p94, %p95
    %p97 = scmp.ne.s32.totalorder %s86, %s89
    %p98 = scmp.eq.s32.totalorder %s13, 3
    %p99 = por %p97, %p98
    %p100 = scmp.ne.s32.totalorder %s89, %s90
    %p101 = scmp.eq.s32.totalorder %s13, 0
    %p102 = por %p100, %p101
    %p103 = scmp.ne.s32.totalorder %s89, %s90
    %p104 = scmp.eq.s32.totalorder %s14, 3
    %p105 = por %p103, %p104
    %p107 = scmp.ne.s32.totalorder %s90, %s106
    %p108 = scmp.eq.s32.totalorder %s14, 0
    %p109 = por %p107, %p108
    %p110 = scmp.le.s32.totalorder 1, %s8
    %p111 = scmp.lt.s32.totalorder %s8, 5
    %p112 = pnand %p110, %p111
    %p113 = pneg %p112
    // Predicated region
    $region9: #{_lambda_.7} parent=5 // pred_check
      _
    $region10: #{_lambda_.7} parent=5 // pred_check_branch
      %115 = sbr.rel (%p112) target = $region12
    $region11: #{_lambda_.7} parent=5 // pred_region
      %s116 = ssub.s32 %s8, 1
    $region12: #{_lambda_.7} parent=5 // pred_fallthru
      _
    %p117 = scmp.lt.s32.totalorder %s8, 4
    // Predicated region
    $region13: #{_lambda_.7} parent=5 // pred_check
      %p118 = pneg %p117
    $region14: #{_lambda_.7} parent=5 // pred_check_branch
      %120 = sbr.rel (%p118) target = $region16
    $region15: #{_lambda_.7} parent=5 // pred_region
      // Predicated region
      $region17: #{_lambda_.7} parent=15 // pred_check
        %p121 = pneg %p42
      $region18: #{_lambda_.7} parent=15 // pred_check_branch
        %123 = sbr.rel (%p121) target = $region20
      $region19: #{_lambda_.7} parent=15 // pred_region
        %s124 = smul.u32 16, %s16
        %p125 = scmp.lt.s32.totalorder %s15, 3
        %s126 = scalar_select %p125, %s15, 3
        %p127 = scmp.lt.s32.totalorder %s124, 15
        %s128 = scalar_select %p127, %s124, 15
        %s129 = smul.addr %s126, 16
        %s130 = sadd.s32 %s128, %s129
        %s131 = smul.addr %s130, 8
        %s132 = scalar_lea.vmem %s0, %s131
        %s133 = smul.u32 16, %s16
      $region20: #{_lambda_.7} parent=15 // pred_fallthru
        _
      // Predicated region
      $region21: #{_lambda_.7} parent=15 // pred_check
        %p134 = pneg %p68
      $region22: #{_lambda_.7} parent=15 // pred_check_branch
        %136 = sbr.rel (%p134) target = $region24
      $region23: #{_lambda_.7} parent=15 // pred_region
        %p137 = scmp.lt.s32.totalorder %s15, 3
        %s138 = scalar_select %p137, %s15, 3
        %s139 = smul.addr %s138, 8
        %s140 = smul.addr %s139, 8
        %s141 = scalar_lea.vmem %s1, %s140
      $region24: #{_lambda_.7} parent=15 // pred_fallthru
        _
    $region16: #{_lambda_.7} parent=5 // pred_fallthru
      _
    %p142 = scmp.le.s32.totalorder 1, %s8
    %p143 = scmp.lt.s32.totalorder %s8, 5
    %p144 = pnand %p142, %p143
    %p145 = pneg %p144
    // Predicated region
    $region25: #{_lambda_.7} parent=5 // pred_check
      _
    $region26: #{_lambda_.7} parent=5 // pred_check_branch
      %147 = sbr.rel (%p144) target = $region28
    $region27: #{_lambda_.7} parent=5 // pred_region
      %s148 = ssub.s32 %s8, 1
      %s149 = smul.u32 16, %s18
      %p150 = scmp.lt.s32.totalorder %s17, 3
      %s151 = scalar_select %p150, %s17, 3
      %p152 = scmp.lt.s32.totalorder %s149, 15
      %s153 = scalar_select %p152, %s149, 15
      %s154 = smul.addr %s151, 16
      %s155 = sadd.s32 %s153, %s154
      %s156 = smul.addr %s155, 8
      %s157 = scalar_lea.vmem %s0, %s156
      %p158 = pneg %p48
      %p159 = pneg %p45
      %p160 = scmp.lt.s32.totalorder %s17, 3
      %s161 = scalar_select %p160, %s17, 3
      %s162 = smul.addr %s161, 8
      %s163 = smul.addr %s162, 8
      %s164 = scalar_lea.vmem %s1, %s163
      %p165 = pneg %p74
      %p166 = pneg %p71
      %p167 = pneg %p102
      %p168 = pneg %p99
      %s169 = smul.u32 16, %s18
      %p170 = scmp.lt.s32.totalorder %s17, 3
      %s171 = scalar_select %p170, %s17, 3
      %p172 = scmp.lt.s32.totalorder %s169, 15
      %s173 = scalar_select %p172, %s169, 15
      %s174 = smul.addr %s171, 16
      %s175 = sadd.s32 %s173, %s174
      %s176 = smul.addr %s175, 8
      %s177 = scalar_lea.vmem %s2, %s176
      %s178 = smul.u32 16, %s18
      %p179 = scmp.lt.s32.totalorder %s17, 3
      %s180 = scalar_select %p179, %s17, 3
      %p181 = scmp.lt.s32.totalorder %s178, 15
      %s182 = scalar_select %p181, %s178, 15
      %s183 = smul.addr %s180, 16
      %s184 = sadd.s32 %s182, %s183
      %s185 = smul.addr %s184, 8
      %s186 = scalar_lea.vmem %s0, %s185
      %s187 = smul.u32 16, %s18
      %p188 = scmp.lt.s32.totalorder %s17, 3
      %s189 = scalar_select %p188, %s17, 3
      %s190 = smul.addr %s189, 8
      %s191 = smul.addr %s190, 8
      %s192 = scalar_lea.vmem %s1, %s191
      %s193 = smul.u32 16, %s18
      %p194 = scmp.lt.s32.totalorder %s17, 3
      %s195 = scalar_select %p194, %s17, 3
      %p196 = scmp.lt.s32.totalorder %s193, 15
      %s197 = scalar_select %p196, %s193, 15
      %s198 = smul.addr %s195, 16
      %s199 = sadd.s32 %s197, %s198
      %s200 = smul.addr %s199, 8
      %s201 = scalar_lea.vmem %s2, %s200
      %s202 = smul.u32 16, %s18
      %v203 = vld [vmem:[%s186] sm:$0xff]
      %v204 = vld [vmem:[%s186 + $0x8] sm:$0xff]
      %v205 = vld [vmem:[%s186 + $0x10] sm:$0xff]
      %v206 = vld [vmem:[%s186 + $0x18] sm:$0xff]
      %v207 = vld [vmem:[%s186 + $0x20] sm:$0xff]
      %v208 = vld [vmem:[%s186 + $0x28] sm:$0xff]
      %v209 = vld [vmem:[%s186 + $0x30] sm:$0xff]
      %v210 = vld [vmem:[%s186 + $0x38] sm:$0xff]
      %v211 = vld [vmem:[%s186 + $0x40] sm:$0xff]
      %v212 = vld [vmem:[%s186 + $0x48] sm:$0xff]
      %v213 = vld [vmem:[%s186 + $0x50] sm:$0xff]
      %v214 = vld [vmem:[%s186 + $0x58] sm:$0xff]
      %v215 = vld [vmem:[%s186 + $0x60] sm:$0xff]
      %v216 = vld [vmem:[%s186 + $0x68] sm:$0xff]
      %v217 = vld [vmem:[%s186 + $0x70] sm:$0xff]
      %v218 = vld [vmem:[%s186 + $0x78] sm:$0xff]
      %v219 = vld [vmem:[%s192] sm:$0xff]
      %v220 = vld [vmem:[%s192 + $0x8] sm:$0xff]
      %v221 = vld [vmem:[%s192 + $0x10] sm:$0xff]
      %v222 = vld [vmem:[%s192 + $0x18] sm:$0xff]
      %v223 = vld [vmem:[%s192 + $0x20] sm:$0xff]
      %v224 = vld [vmem:[%s192 + $0x28] sm:$0xff]
      %v225 = vld [vmem:[%s192 + $0x30] sm:$0xff]
      %v226 = vld [vmem:[%s192 + $0x38] sm:$0xff]
      %vm227 = vcmask 523264
      %v229 = vsel %vm227, %v203, 0
      %v232 = vsel %vm227, %v204, 0
      %v235 = vsel %vm227, %v205, 0
      %v238 = vsel %vm227, %v206, 0
      %v241 = vsel %vm227, %v207, 0
      %v244 = vsel %vm227, %v208, 0
      %v247 = vsel %vm227, %v209, 0
      %v250 = vsel %vm227, %v210, 0
      %v253 = vsel %vm227, %v211, 0
      %v256 = vsel %vm227, %v212, 0
      %v259 = vsel %vm227, %v213, 0
      %v262 = vsel %vm227, %v214, 0
      %v265 = vsel %vm227, %v215, 0
      %v268 = vsel %vm227, %v216, 0
      %v271 = vsel %vm227, %v217, 0
      %v274 = vsel %vm227, %v218, 0
      %276 = vmatprep.subr.mxu0 0.0
      %277 = vmatpush1.msra.mxu0 %v219
      %278 = vmatprep.subr.mxu0 0.0
      %279 = vmatpush1.msra.mxu0 %v220
      %280 = vmatprep.subr.mxu0 0.0
      %281 = vmatpush1.msra.mxu0 %v221
      %282 = vmatprep.subr.mxu0 0.0
      %283 = vmatpush1.msra.mxu0 %v222
      %284 = vmatprep.subr.mxu0 0.0
      %285 = vmatpush1.msra.mxu0 %v223
      %286 = vmatprep.subr.mxu0 0.0
      %287 = vmatpush1.msra.mxu0 %v224
      %288 = vmatprep.subr.mxu0 0.0
      %289 = vmatpush1.msra.mxu0 %v225
      %290 = vmatprep.subr.mxu0 0.0
      %291 = vmatpush1.msra.mxu0 %v226
      %292 = vmatprep.subr.mxu0 0.0
      %293 = vmatpush1.msra.mxu0 0.0
      %294 = vmatprep.subr.mxu0 0.0
      %295 = vmatpush1.msra.mxu0 0.0
      %296 = vmatprep.subr.mxu0 0.0
      %297 = vmatpush1.msra.mxu0 0.0
      %298 = vmatprep.subr.mxu0 0.0
      %299 = vmatpush1.msra.mxu0 0.0
      %300 = vmatprep.subr.mxu0 0.0
      %301 = vmatpush1.msra.mxu0 0.0
      %302 = vmatprep.subr.mxu0 0.0
      %303 = vmatpush1.msra.mxu0 0.0
      %304 = vmatprep.subr.mxu0 0.0
      %305 = vmatpush1.msra.mxu0 0.0
      %306 = vmatprep.subr.mxu0 0.0
      %307 = vmatpush1.msra.mxu0 0.0
      %308 = vmatprep.subr.mxu0 0.0
      %309 = vmatpush1.msra.mxu0 0.0
      %310 = vmatprep.subr.mxu0 0.0
      %311 = vmatpush1.msra.mxu0 0.0
      %312 = vmatprep.subr.mxu0 0.0
      %313 = vmatpush1.msra.mxu0 0.0
      %314 = vmatprep.subr.mxu0 0.0
      %315 = vmatpush1.msra.mxu0 0.0
      %316 = vmatprep.subr.mxu0 0.0
      %317 = vmatpush1.msra.mxu0 0.0
      %318 = vmatprep.subr.mxu0 0.0
      %319 = vmatpush1.msra.mxu0 0.0
      %320 = vmatprep.subr.mxu0 0.0
      %321 = vmatpush1.msra.mxu0 0.0
      %322 = vmatprep.subr.mxu0 0.0
      %323 = vmatpush1.msra.mxu0 0.0
      %324 = vmatprep.subr.mxu0 0.0
      %325 = vmatpush1.msra.mxu0 0.0
      %326 = vmatprep.subr.mxu0 0.0
      %327 = vmatpush1.msra.mxu0 0.0
      %328 = vmatprep.subr.mxu0 0.0
      %329 = vmatpush1.msra.mxu0 0.0
      %330 = vmatprep.subr.mxu0 0.0
      %331 = vmatpush1.msra.mxu0 0.0
      %332 = vmatprep.subr.mxu0 0.0
      %333 = vmatpush1.msra.mxu0 0.0
      %334 = vmatprep.subr.mxu0 0.0
      %335 = vmatpush1.msra.mxu0 0.0
      %336 = vmatprep.subr.mxu0 0.0
      %337 = vmatpush1.msra.mxu0 0.0
      %338 = vmatprep.subr.mxu0 0.0
      %339 = vmatpush1.msra.mxu0 0.0
      %340 = vmatprep.mubr.f32.mxu0 0.0
      %341 = vmatmul.mubr.f32.gmra.mrb[0].mxu0 %v229
      %v342 = vpop.f32.mrb[0].mxu0
      %v343 = vadd.f32 0.0, %v342
      %v344 = vpop.f32.mrb[0].mxu0
      %345 = vmatprep.mubr.f32.mxu0 0.0
      %346 = vmatmul.mubr.f32.gmra.mrb[0].mxu0 %v232
      %v347 = vpop.f32.mrb[0].mxu0
      %v348 = vadd.f32 0.0, %v347
      %v349 = vpop.f32.mrb[0].mxu0
      %350 = vmatprep.mubr.f32.mxu0 0.0
      %351 = vmatmul.mubr.f32.gmra.mrb[0].mxu0 %v235
      %v352 = vpop.f32.mrb[0].mxu0
      %v353 = vadd.f32 0.0, %v352
      %v354 = vpop.f32.mrb[0].mxu0
      %355 = vmatprep.mubr.f32.mxu0 0.0
      %356 = vmatmul.mubr.f32.gmra.mrb[0].mxu0 %v238
      %v357 = vpop.f32.mrb[0].mxu0
      %v358 = vadd.f32 0.0, %v357
      %v359 = vpop.f32.mrb[0].mxu0
      %360 = vmatprep.mubr.f32.mxu0 0.0
      %361 = vmatmul.mubr.f32.gmra.mrb[0].mxu0 %v241
      %v362 = vpop.f32.mrb[0].mxu0
      %v363 = vadd.f32 0.0, %v362
      %v364 = vpop.f32.mrb[0].mxu0
      %365 = vmatprep.mubr.f32.mxu0 0.0
      %366 = vmatmul.mubr.f32.gmra.mrb[0].mxu0 %v244
      %v367 = vpop.f32.mrb[0].mxu0
      %v368 = vadd.f32 0.0, %v367
      %v369 = vpop.f32.mrb[0].mxu0
      %370 = vmatprep.mubr.f32.mxu0 0.0
      %371 = vmatmul.mubr.f32.gmra.mrb[0].mxu0 %v247
      %v372 = vpop.f32.mrb[0].mxu0
      %v373 = vadd.f32 0.0, %v372
      %v374 = vpop.f32.mrb[0].mxu0
      %375 = vmatprep.mubr.f32.mxu0 0.0
      %376 = vmatmul.mubr.f32.gmra.mrb[0].mxu0 %v250
      %v377 = vpop.f32.mrb[0].mxu0
      %v378 = vadd.f32 0.0, %v377
      %v379 = vpop.f32.mrb[0].mxu0
      %380 = vmatprep.mubr.f32.mxu0 0.0
      %381 = vmatmul.mubr.f32.gmra.mrb[0].mxu0 %v253
      %v382 = vpop.f32.mrb[0].mxu0
      %v383 = vadd.f32 0.0, %v382
      %v384 = vpop.f32.mrb[0].mxu0
      %385 = vmatprep.mubr.f32.mxu0 0.0
      %386 = vmatmul.mubr.f32.gmra.mrb[0].mxu0 %v256
      %v387 = vpop.f32.mrb[0].mxu0
      %v388 = vadd.f32 0.0, %v387
      %v389 = vpop.f32.mrb[0].mxu0
      %390 = vmatprep.mubr.f32.mxu0 0.0
      %391 = vmatmul.mubr.f32.gmra.mrb[0].mxu0 %v259
      %v392 = vpop.f32.mrb[0].mxu0
      %v393 = vadd.f32 0.0, %v392
      %v394 = vpop.f32.mrb[0].mxu0
      %395 = vmatprep.mubr.f32.mxu0 0.0
      %396 = vmatmul.mubr.f32.gmra.mrb[0].mxu0 %v262
      %v397 = vpop.f32.mrb[0].mxu0
      %v398 = vadd.f32 0.0, %v397
      %v399 = vpop.f32.mrb[0].mxu0
      %400 = vmatprep.mubr.f32.mxu0 0.0
      %401 = vmatmul.mubr.f32.gmra.mrb[0].mxu0 %v265
      %v402 = vpop.f32.mrb[0].mxu0
      %v403 = vadd.f32 0.0, %v402
      %v404 = vpop.f32.mrb[0].mxu0
      %405 = vmatprep.mubr.f32.mxu0 0.0
      %406 = vmatmul.mubr.f32.gmra.mrb[0].mxu0 %v268
      %v407 = vpop.f32.mrb[0].mxu0
      %v408 = vadd.f32 0.0, %v407
      %v409 = vpop.f32.mrb[0].mxu0
      %410 = vmatprep.mubr.f32.mxu0 0.0
      %411 = vmatmul.mubr.f32.gmra.mrb[0].mxu0 %v271
      %v412 = vpop.f32.mrb[0].mxu0
      %v413 = vadd.f32 0.0, %v412
      %v414 = vpop.f32.mrb[0].mxu0
      %415 = vmatprep.mubr.f32.mxu0 0.0
      %416 = vmatmul.mubr.f32.gmra.mrb[0].mxu0 %v274
      %v417 = vpop.f32.mrb[0].mxu0
      %v418 = vadd.f32 0.0, %v417
      %v419 = vpop.f32.mrb[0].mxu0
      %420 = vdwg.mxu0
      %421 = vst [vmem:[%s201] sm:$0xff] %v343
      %422 = vst [vmem:[%s201 + $0x8] sm:$0xff] %v348
      %423 = vst [vmem:[%s201 + $0x10] sm:$0xff] %v353
      %424 = vst [vmem:[%s201 + $0x18] sm:$0xff] %v358
      %425 = vst [vmem:[%s201 + $0x20] sm:$0xff] %v363
      %426 = vst [vmem:[%s201 + $0x28] sm:$0xff] %v368
      %427 = vst [vmem:[%s201 + $0x30] sm:$0xff] %v373
      %428 = vst [vmem:[%s201 + $0x38] sm:$0xff] %v378
      %429 = vst [vmem:[%s201 + $0x40] sm:$0xff] %v383
      %430 = vst [vmem:[%s201 + $0x48] sm:$0xff] %v388
      %431 = vst [vmem:[%s201 + $0x50] sm:$0xff] %v393
      %432 = vst [vmem:[%s201 + $0x58] sm:$0xff] %v398
      %433 = vst [vmem:[%s201 + $0x60] sm:$0xff] %v403
      %434 = vst [vmem:[%s201 + $0x68] sm:$0xff] %v408
      %435 = vst [vmem:[%s201 + $0x70] sm:$0xff] %v413
      %436 = vst [vmem:[%s201 + $0x78] sm:$0xff] %v418
      %s437 = smul.u32 16, %s18
      %p438 = scmp.lt.s32.totalorder %s17, 3
      %s439 = scalar_select %p438, %s17, 3
      %p440 = scmp.lt.s32.totalorder %s437, 15
      %s441 = scalar_select %p440, %s437, 15
      %s442 = smul.addr %s439, 16
      %s443 = sadd.s32 %s441, %s442
      %s444 = smul.addr %s443, 8
      %s445 = scalar_lea.vmem %s2, %s444
      // Predicated region
      $region29: #{_lambda_.7} parent=27 // pred_check
        %p446 = pneg %p99
      $region30: #{_lambda_.7} parent=27 // pred_check_branch
        %448 = sbr.rel (%p446) target = $region32
      $region31: #{_lambda_.7} parent=27 // pred_region
        %s449 = smul.u32 16, %s18
      $region32: #{_lambda_.7} parent=27 // pred_fallthru
        _
    $region28: #{_lambda_.7} parent=5 // pred_fallthru
      _
    %p450 = scmp.le.s32.totalorder 2, %s8
    // Predicated region
    $region33: #{_lambda_.7} parent=5 // pred_check
      %p451 = pneg %p450
    $region34: #{_lambda_.7} parent=5 // pred_check_branch
      %453 = sbr.rel (%p451) target = $region36
    $region35: #{_lambda_.7} parent=5 // pred_region
      %s454 = ssub.s32 %s8, 2
      // Predicated region
      $region37: #{_lambda_.7} parent=35 // pred_check
        %p455 = pneg %p105
      $region38: #{_lambda_.7} parent=35 // pred_check_branch
        %457 = sbr.rel (%p455) target = $region40
      $region39: #{_lambda_.7} parent=35 // pred_region
        %s458 = smul.u32 16, %s20
        %p459 = scmp.lt.s32.totalorder %s19, 3
        %s460 = scalar_select %p459, %s19, 3
        %p461 = scmp.lt.s32.totalorder %s458, 15
        %s462 = scalar_select %p461, %s458, 15
        %s463 = smul.addr %s460, 16
        %s464 = sadd.s32 %s462, %s463
        %s465 = smul.addr %s464, 8
        %s466 = scalar_lea.vmem %s2, %s465
      $region40: #{_lambda_.7} parent=35 // pred_fallthru
        _
    $region36: #{_lambda_.7} parent=5 // pred_fallthru
      _
  $region6: #{_lambda_.7} parent=0 // loop_footer
    %s12 = sadd.s32 1, %s8
  $region7: #{_lambda_.7} parent=0 // loop_footer_branch
    %7 = sbr.rel target = $region3
  $region8: #{_lambda_.7} parent=0 // loop_exit
    _

// kernel: _lambda_.5
$region0: #{_lambda_.5}
  #allocation0 [shape = 'u32[]', space=smem, size = 0x4, offset = 0x4, fixed_abs, tag = 'smem constant byte address 0x4 - core index']
  #allocation1 [shape = 'u32[144,128]{1,0:T(1,128)}', space=vmem, size = 0x12000, scoped, tag = 'internal scratch']
  %s0 = inlined_call_operand.vmem [shape: bf16[1,128,32], index: 0, kind: input, shape index: {}]
  %s1 = inlined_call_operand.vmem [shape: bf16[1,32,128], index: 1, kind: input, shape index: {}]
  %s2 = inlined_call_operand.vmem [shape: f32[1,128,128], index: 2, kind: output, shape index: {}]
  %s3 = sld [smem:[#allocation0]]
  $region18: #{_lambda_.5} parent=0
    _
  %s5 = ssub.s32 1, %s3
  %s6 = scalar_select 0, %s5, %s3
  // Predicated region
  $region2: #{_lambda_.5} parent=0 // pred_check
    _
  $region3: #{_lambda_.5} parent=0 // pred_check_branch
    %8 = sbr.rel (0) target = $region5
  $region4: #{_lambda_.5} parent=0 // pred_region
    _
  $region5: #{_lambda_.5} parent=0 // pred_fallthru
    _
  // Predicated region
  $region6: #{_lambda_.5} parent=0 // pred_check
    _
  $region7: #{_lambda_.5} parent=0 // pred_check_branch
    %10 = sbr.rel (0) target = $region9
  $region8: #{_lambda_.5} parent=0 // pred_region
    _
  $region9: #{_lambda_.5} parent=0 // pred_fallthru
    _
  %v12 = vld [vmem:[%s0] sm:$0xf]
  %v13 = vld [vmem:[%s0 + $0x4] sm:$0xf]
  %v14 = vld [vmem:[%s0 + $0x8] sm:$0xf]
  %v15 = vld [vmem:[%s0 + $0xc] sm:$0xf]
  %v16 = vld [vmem:[%s0 + $0x10] sm:$0xf]
  %v17 = vld [vmem:[%s0 + $0x14] sm:$0xf]
  %v18 = vld [vmem:[%s0 + $0x18] sm:$0xf]
  %v19 = vld [vmem:[%s0 + $0x1c] sm:$0xf]
  %v20 = vld [vmem:[%s0 + $0x20] sm:$0xf]
  %v21 = vld [vmem:[%s0 + $0x24] sm:$0xf]
  %v22 = vld [vmem:[%s0 + $0x28] sm:$0xf]
  %v23 = vld [vmem:[%s0 + $0x2c] sm:$0xf]
  %v24 = vld [vmem:[%s0 + $0x30] sm:$0xf]
  %v25 = vld [vmem:[%s0 + $0x34] sm:$0xf]
  %v26 = vld [vmem:[%s0 + $0x38] sm:$0xf]
  %v27 = vld [vmem:[%s0 + $0x3c] sm:$0xf]
  %v28 = vld [vmem:[%s1] sm:$0xf]
  %v29 = vld [vmem:[%s1 + $0x4] sm:$0xf]
  %v30 = vld [vmem:[%s1 + $0x8] sm:$0xf]
  %v31 = vld [vmem:[%s1 + $0xc] sm:$0xf]
  %v48 = vunpack.c.l.b16 %v12
  %v49 = vunpack.c.l.b16 %v13
  %v50 = vunpack.c.l.b16 %v14
  %v51 = vunpack.c.l.b16 %v15
  %v52 = vunpack.c.l.b16 %v16
  %v53 = vunpack.c.l.b16 %v17
  %v54 = vunpack.c.l.b16 %v18
  %v55 = vunpack.c.l.b16 %v19
  %v56 = vunpack.c.l.b16 %v20
  %v57 = vunpack.c.l.b16 %v21
  %v58 = vunpack.c.l.b16 %v22
  %v59 = vunpack.c.l.b16 %v23
  %v60 = vunpack.c.l.b16 %v24
  %v61 = vunpack.c.l.b16 %v25
  %v62 = vunpack.c.l.b16 %v26
  %v63 = vunpack.c.l.b16 %v27
  %v64 = vpack.c.b16 %v49, %v48
  %v65 = vpack.c.b16 %v51, %v50
  %v66 = vpack.c.b16 %v53, %v52
  %v67 = vpack.c.b16 %v55, %v54
  %v68 = vpack.c.b16 %v57, %v56
  %v69 = vpack.c.b16 %v59, %v58
  %v70 = vpack.c.b16 %v61, %v60
  %v71 = vpack.c.b16 %v63, %v62
  %v76 = vunpack.c.l.b16 %v28
  %v77 = vunpack.c.l.b16 %v29
  %v78 = vunpack.c.l.b16 %v30
  %v79 = vunpack.c.l.b16 %v31
  %v80 = vpack.c.b16 %v77, %v76
  %v81 = vpack.c.b16 %v79, %v78
  %vm84 = vcmask 261120
  %v86 = vsel %vm84, %v64, 0
  %v89 = vsel %vm84, %v65, 0
  %v92 = vsel %vm84, %v66, 0
  %v95 = vsel %vm84, %v67, 0
  %v98 = vsel %vm84, %v68, 0
  %v101 = vsel %vm84, %v69, 0
  %v104 = vsel %vm84, %v70, 0
  %v107 = vsel %vm84, %v71, 0
  %109 = vmatprep.subr.bf16.mxu0 0
  %110 = vmatpush1.bf16.msra.mxu0 %v80
  %111 = vmatprep.subr.bf16.mxu0 0
  %112 = vmatpush1.bf16.msra.mxu0 %v81
  %113 = vmatprep.subr.bf16.mxu0 0
  %114 = vmatpush1.bf16.msra.mxu0 0
  %115 = vmatprep.subr.bf16.mxu0 0
  %116 = vmatpush1.bf16.msra.mxu0 0
  %117 = vmatprep.subr.bf16.mxu0 0
  %118 = vmatpush1.bf16.msra.mxu0 0
  %119 = vmatprep.subr.bf16.mxu0 0
  %120 = vmatpush1.bf16.msra.mxu0 0
  %121 = vmatprep.subr.bf16.mxu0 0
  %122 = vmatpush1.bf16.msra.mxu0 0
  %123 = vmatprep.subr.bf16.mxu0 0
  %124 = vmatpush1.bf16.msra.mxu0 0
  %125 = vmatprep.subr.bf16.mxu0 0
  %126 = vmatpush1.bf16.msra.mxu0 0
  %127 = vmatprep.subr.bf16.mxu0 0
  %128 = vmatpush1.bf16.msra.mxu0 0
  %129 = vmatprep.subr.bf16.mxu0 0
  %130 = vmatpush1.bf16.msra.mxu0 0
  %131 = vmatprep.subr.bf16.mxu0 0
  %132 = vmatpush1.bf16.msra.mxu0 0
  %133 = vmatprep.subr.bf16.mxu0 0
  %134 = vmatpush1.bf16.msra.mxu0 0
  %135 = vmatprep.subr.bf16.mxu0 0
  %136 = vmatpush1.bf16.msra.mxu0 0
  %137 = vmatprep.subr.bf16.mxu0 0
  %138 = vmatpush1.bf16.msra.mxu0 0
  %139 = vmatprep.subr.bf16.mxu0 0
  %140 = vmatpush1.bf16.msra.mxu0 0
  %141 = vmatprep.mubr.bf16.mxu0 0
  %142 = vmatmul.mubr.bf16.gmra.mrb[0].mxu0 %v86
  %v143 = vpop.f32.mrb[0].mxu0
  %v144 = vadd.f32 0.0, %v143
  %v145 = vpop.f32.mrb[0].mxu0
  %v146 = vpop.f32.mrb[0].mxu0
  %v147 = vadd.f32 0.0, %v146
  %v148 = vpop.f32.mrb[0].mxu0
  %149 = vmatprep.mubr.bf16.mxu0 0
  %150 = vmatmul.mubr.bf16.gmra.mrb[0].mxu0 %v89
  %v151 = vpop.f32.mrb[0].mxu0
  %v152 = vadd.f32 0.0, %v151
  %v153 = vpop.f32.mrb[0].mxu0
  %v154 = vpop.f32.mrb[0].mxu0
  %v155 = vadd.f32 0.0, %v154
  %v156 = vpop.f32.mrb[0].mxu0
  %157 = vmatprep.mubr.bf16.mxu0 0
  %158 = vmatmul.mubr.bf16.gmra.mrb[0].mxu0 %v92
  %v159 = vpop.f32.mrb[0].mxu0
  %v160 = vadd.f32 0.0, %v159
  %v161 = vpop.f32.mrb[0].mxu0
  %v162 = vpop.f32.mrb[0].mxu0
  %v163 = vadd.f32 0.0, %v162
  %v164 = vpop.f32.mrb[0].mxu0
  %165 = vmatprep.mubr.bf16.mxu0 0
  %166 = vmatmul.mubr.bf16.gmra.mrb[0].mxu0 %v95
  %v167 = vpop.f32.mrb[0].mxu0
  %v168 = vadd.f32 0.0, %v167
  %v169 = vpop.f32.mrb[0].mxu0
  %v170 = vpop.f32.mrb[0].mxu0
  %v171 = vadd.f32 0.0, %v170
  %v172 = vpop.f32.mrb[0].mxu0
  %173 = vmatprep.mubr.bf16.mxu0 0
  %174 = vmatmul.mubr.bf16.gmra.mrb[0].mxu0 %v98
  %v175 = vpop.f32.mrb[0].mxu0
  %v176 = vadd.f32 0.0, %v175
  %v177 = vpop.f32.mrb[0].mxu0
  %v178 = vpop.f32.mrb[0].mxu0
  %v179 = vadd.f32 0.0, %v178
  %v180 = vpop.f32.mrb[0].mxu0
  %181 = vmatprep.mubr.bf16.mxu0 0
  %182 = vmatmul.mubr.bf16.gmra.mrb[0].mxu0 %v101
  %v183 = vpop.f32.mrb[0].mxu0
  %v184 = vadd.f32 0.0, %v183
  %v185 = vpop.f32.mrb[0].mxu0
  %v186 = vpop.f32.mrb[0].mxu0
  %v187 = vadd.f32 0.0, %v186
  %v188 = vpop.f32.mrb[0].mxu0
  %189 = vmatprep.mubr.bf16.mxu0 0
  %190 = vmatmul.mubr.bf16.gmra.mrb[0].mxu0 %v104
  %v191 = vpop.f32.mrb[0].mxu0
  %v192 = vadd.f32 0.0, %v191
  %v193 = vpop.f32.mrb[0].mxu0
  %v194 = vpop.f32.mrb[0].mxu0
  %v195 = vadd.f32 0.0, %v194
  %v196 = vpop.f32.mrb[0].mxu0
  %197 = vmatprep.mubr.bf16.mxu0 0
  %198 = vmatmul.mubr.bf16.gmra.mrb[0].mxu0 %v107
  %v199 = vpop.f32.mrb[0].mxu0
  %v200 = vadd.f32 0.0, %v199
  %v201 = vpop.f32.mrb[0].mxu0
  %v202 = vpop.f32.mrb[0].mxu0
  %v203 = vadd.f32 0.0, %v202
  %v204 = vpop.f32.mrb[0].mxu0
  %205 = vdwg.mxu0
  %206 = vst [vmem:[%s2] sm:$0xff] %v144
  %207 = vst [vmem:[%s2 + $0x8] sm:$0xff] %v147
  %208 = vst [vmem:[%s2 + $0x10] sm:$0xff] %v152
  %209 = vst [vmem:[%s2 + $0x18] sm:$0xff] %v155
  %210 = vst [vmem:[%s2 + $0x20] sm:$0xff] %v160
  %211 = vst [vmem:[%s2 + $0x28] sm:$0xff] %v163
  %212 = vst [vmem:[%s2 + $0x30] sm:$0xff] %v168
  %213 = vst [vmem:[%s2 + $0x38] sm:$0xff] %v171
  %214 = vst [vmem:[%s2 + $0x40] sm:$0xff] %v176
  %215 = vst [vmem:[%s2 + $0x48] sm:$0xff] %v179
  %216 = vst [vmem:[%s2 + $0x50] sm:$0xff] %v184
  %217 = vst [vmem:[%s2 + $0x58] sm:$0xff] %v187
  %218 = vst [vmem:[%s2 + $0x60] sm:$0xff] %v192
  %219 = vst [vmem:[%s2 + $0x68] sm:$0xff] %v195
  %220 = vst [vmem:[%s2 + $0x70] sm:$0xff] %v200
  %221 = vst [vmem:[%s2 + $0x78] sm:$0xff] %v203
  // Predicated region
  $region10: #{_lambda_.5} parent=0 // pred_check
    _
  $region11: #{_lambda_.5} parent=0 // pred_check_branch
    %223 = sbr.rel (0) target = $region13
  $region12: #{_lambda_.5} parent=0 // pred_region
    _
  $region13: #{_lambda_.5} parent=0 // pred_fallthru
    _
  // Predicated region
  $region14: #{_lambda_.5} parent=0 // pred_check
    _
  $region15: #{_lambda_.5} parent=0 // pred_check_branch
    %225 = sbr.rel (0) target = $region17
  $region16: #{_lambda_.5} parent=0 // pred_region
    _
  $region17: #{_lambda_.5} parent=0 // pred_fallthru
    _

// kernel: _lambda_.6
$region0: #{_lambda_.6}
  #allocation0 [shape = 'u32[]', space=smem, size = 0x4, offset = 0x4, fixed_abs, tag = 'smem constant byte address 0x4 - core index']
  #allocation1 [shape = 'u32[144,128]{1,0:T(1,128)}', space=vmem, size = 0x12000, scoped, tag = 'internal scratch']
  %s0 = inlined_call_operand.vmem [shape: f32[2,10,10,64], index: 0, kind: input, shape index: {}]
  %s1 = inlined_call_operand.vmem [shape: f32[3,3,64], index: 1, kind: input, shape index: {}]
  %s2 = inlined_call_operand.vmem [shape: f32[1,64], index: 2, kind: input, shape index: {}]
  %s3 = inlined_call_operand.vmem [shape: f32[2,8,8,64], index: 3, kind: output, shape index: {}]
  %s4 = sld [smem:[#allocation0]]
  $region45: #{_lambda_.6} parent=0
    _
  %s6 = ssub.s32 1, %s4
  %s7 = scalar_select 0, %s6, %s4
  loop: start=0, step=1, limit=4
  $region2: #{_lambda_.6} parent=0 // loop_pre_header
    _
  $region3: #{_lambda_.6} parent=0 // loop_header
    %s9 = sphi 0, %s13
    %p10 = scmp.ge.s32.totalorder %s9, 4
    %s19 = sphi 0, %s21
    %s22 = sphi 0, %s19
    %s23 = sphi 0, %s22
    %s39 = sphi 0, %s23
    %s43 = sphi 0, %s43
    %s45 = sphi 0, %s43
    %s46 = sphi 0, %s45
    %s60 = sphi 0, %s46
    %s64 = sphi 0, %s64
    %s66 = sphi 0, %s64
    %s67 = sphi 0, %s66
    %s81 = sphi 0, %s67
    %s87 = sphi 0, %s89
    %s90 = sphi 0, %s87
    %s91 = sphi 0, %s90
    %s107 = sphi 0, %s91
  $region4: #{_lambda_.6} parent=0 // loop_header_branch
    %12 = sbr.rel (%p10) target = $region8
  $region5: #{_lambda_.6} parent=0 // loop_body
    %s14 = ssub.s32 %s9, 1
    %s15 = ssub.s32 %s9, 2
    %s16 = sadd.s32 %s9, 1
    %s17 = ssub.s32 %s9, %s16
    %p18 = scmp.eq.s32.totalorder %s17, 0
    %s20 = sadd.s32 %s19, 1
    %s21 = scalar_select %p18, %s19, %s20
    %p24 = pneg %p18
    %p25 = scmp.eq.s32.totalorder %s9, 1
    %p26 = por %p24, %p25
    %p27 = scmp.ne.s32.totalorder %s19, %s22
    %p28 = scmp.eq.s32.totalorder %s9, 0
    %p29 = por %p27, %p28
    %p30 = scmp.ne.s32.totalorder %s19, %s22
    %p31 = scmp.eq.s32.totalorder %s14, 1
    %p32 = por %p30, %p31
    %p33 = scmp.ne.s32.totalorder %s22, %s23
    %p34 = scmp.eq.s32.totalorder %s14, 0
    %p35 = por %p33, %p34
    %p36 = scmp.ne.s32.totalorder %s22, %s23
    %p37 = scmp.eq.s32.totalorder %s15, 1
    %p38 = por %p36, %p37
    %p40 = scmp.ne.s32.totalorder %s23, %s39
    %p41 = scmp.eq.s32.totalorder %s15, 0
    %p42 = por %p40, %p41
    %s44 = sadd.s32 %s43, 1
    %p47 = scmp.eq.s32.totalorder %s9, 1
    %p48 = scmp.ne.s32.totalorder %s43, %s45
    %p49 = scmp.eq.s32.totalorder %s9, 0
    %p50 = por %p48, %p49
    %p51 = scmp.ne.s32.totalorder %s43, %s45
    %p52 = scmp.eq.s32.totalorder %s14, 1
    %p53 = por %p51, %p52
    %p54 = scmp.ne.s32.totalorder %s45, %s46
    %p55 = scmp.eq.s32.totalorder %s14, 0
    %p56 = por %p54, %p55
    %p57 = scmp.ne.s32.totalorder %s45, %s46
    %p58 = scmp.eq.s32.totalorder %s15, 1
    %p59 = por %p57, %p58
    %p61 = scmp.ne.s32.totalorder %s46, %s60
    %p62 = scmp.eq.s32.totalorder %s15, 0
    %p63 = por %p61, %p62
    %s65 = sadd.s32 %s64, 1
    %p68 = scmp.eq.s32.totalorder %s9, 1
    %p69 = scmp.ne.s32.totalorder %s64, %s66
    %p70 = scmp.eq.s32.totalorder %s9, 0
    %p71 = por %p69, %p70
    %p72 = scmp.ne.s32.totalorder %s64, %s66
    %p73 = scmp.eq.s32.totalorder %s14, 1
    %p74 = por %p72, %p73
    %p75 = scmp.ne.s32.totalorder %s66, %s67
    %p76 = scmp.eq.s32.totalorder %s14, 0
    %p77 = por %p75, %p76
    %p78 = scmp.ne.s32.totalorder %s66, %s67
    %p79 = scmp.eq.s32.totalorder %s15, 1
    %p80 = por %p78, %p79
    %p82 = scmp.ne.s32.totalorder %s67, %s81
    %p83 = scmp.eq.s32.totalorder %s15, 0
    %p84 = por %p82, %p83
    %s85 = ssub.s32 %s9, %s16
    %p86 = scmp.eq.s32.totalorder %s85, 0
    %s88 = sadd.s32 %s87, 1
    %s89 = scalar_select %p86, %s87, %s88
    %p92 = pneg %p86
    %p93 = scmp.eq.s32.totalorder %s9, 1
    %p94 = por %p92, %p93
    %p95 = scmp.ne.s32.totalorder %s87, %s90
    %p96 = scmp.eq.s32.totalorder %s9, 0
    %p97 = por %p95, %p96
    %p98 = scmp.ne.s32.totalorder %s87, %s90
    %p99 = scmp.eq.s32.totalorder %s14, 1
    %p100 = por %p98, %p99
    %p101 = scmp.ne.s32.totalorder %s90, %s91
    %p102 = scmp.eq.s32.totalorder %s14, 0
    %p103 = por %p101, %p102
    %p104 = scmp.ne.s32.totalorder %s90, %s91
    %p105 = scmp.eq.s32.totalorder %s15, 1
    %p106 = por %p104, %p105
    %p108 = scmp.ne.s32.totalorder %s91, %s107
    %p109 = scmp.eq.s32.totalorder %s15, 0
    %p110 = por %p108, %p109
    %p111 = scmp.le.s32.totalorder 1, %s9
    %p112 = scmp.lt.s32.totalorder %s9, 3
    %p113 = pnand %p111, %p112
    %p114 = pneg %p113
    // Predicated region
    $region9: #{_lambda_.6} parent=5 // pred_check
      _
    $region10: #{_lambda_.6} parent=5 // pred_check_branch
      %116 = sbr.rel (%p113) target = $region12
    $region11: #{_lambda_.6} parent=5 // pred_region
      %s117 = ssub.s32 %s9, 1
      // Predicated region
      $region13: #{_lambda_.6} parent=11 // pred_check
        %p118 = pneg %p56
      $region14: #{_lambda_.6} parent=11 // pred_check_branch
        %120 = sbr.rel (%p118) target = $region16
      $region15: #{_lambda_.6} parent=11 // pred_region
        _
      $region16: #{_lambda_.6} parent=11 // pred_fallthru
        _
      // Predicated region
      $region17: #{_lambda_.6} parent=11 // pred_check
        %p121 = pneg %p77
      $region18: #{_lambda_.6} parent=11 // pred_check_branch
        %123 = sbr.rel (%p121) target = $region20
      $region19: #{_lambda_.6} parent=11 // pred_region
        _
      $region20: #{_lambda_.6} parent=11 // pred_fallthru
        _
    $region12: #{_lambda_.6} parent=5 // pred_fallthru
      _
    %p124 = scmp.lt.s32.totalorder %s9, 2
    // Predicated region
    $region21: #{_lambda_.6} parent=5 // pred_check
      %p125 = pneg %p124
    $region22: #{_lambda_.6} parent=5 // pred_check_branch
      %127 = sbr.rel (%p125) target = $region24
    $region23: #{_lambda_.6} parent=5 // pred_region
      // Predicated region
      $region25: #{_lambda_.6} parent=23 // pred_check
        %p128 = pneg %p29
      $region26: #{_lambda_.6} parent=23 // pred_check_branch
        %130 = sbr.rel (%p128) target = $region28
      $region27: #{_lambda_.6} parent=23 // pred_region
        %p131 = scmp.lt.s32.totalorder %s9, 1
        %s132 = scalar_select %p131, %s9, 1
        %s133 = smul.addr %s132, 20
        %s134 = smul.addr %s133, 8
        %s135 = scalar_lea.vmem %s0, %s134
      $region28: #{_lambda_.6} parent=23 // pred_fallthru
        _
    $region24: #{_lambda_.6} parent=5 // pred_fallthru
      _
    %p136 = scmp.le.s32.totalorder 1, %s9
    %p137 = scmp.lt.s32.totalorder %s9, 3
    %p138 = pnand %p136, %p137
    %p139 = pneg %p138
    // Predicated region
    $region29: #{_lambda_.6} parent=5 // pred_check
      _
    $region30: #{_lambda_.6} parent=5 // pred_check_branch
      %141 = sbr.rel (%p138) target = $region32
    $region31: #{_lambda_.6} parent=5 // pred_region
      %s142 = ssub.s32 %s9, 1
      %p143 = scmp.lt.s32.totalorder %s14, 1
      %s144 = scalar_select %p143, %s14, 1
      %s145 = smul.addr %s144, 20
      %s146 = smul.addr %s145, 8
      %s147 = scalar_lea.vmem %s0, %s146
      %p148 = pneg %p35
      %p149 = pneg %p32
      %p150 = pneg %p56
      %p151 = pneg %p53
      %p152 = pneg %p77
      %p153 = pneg %p74
      %p154 = pneg %p103
      %p155 = pneg %p100
      %p156 = scmp.lt.s32.totalorder %s14, 1
      %s157 = scalar_select %p156, %s14, 1
      %s158 = smul.addr %s157, 8
      %s159 = smul.addr %s158, 8
      %s160 = scalar_lea.vmem %s3, %s159
      %p161 = scmp.lt.s32.totalorder %s14, 1
      %s162 = scalar_select %p161, %s14, 1
      %s163 = smul.addr %s162, 20
      %s164 = smul.addr %s163, 8
      %s165 = scalar_lea.vmem %s0, %s164
      %p166 = scmp.lt.s32.totalorder %s14, 1
      %s167 = scalar_select %p166, %s14, 1
      %s168 = smul.addr %s167, 8
      %s169 = smul.addr %s168, 8
      %s170 = scalar_lea.vmem %s3, %s169
      %v171 = vld [vmem:[%s1] sm:$0x7]
      %v172 = vld [vmem:[%s1 + $0x4] sm:$0x7]
      %v173 = vld [vmem:[%s1 + $0x8] sm:$0x7]
      %v174 = vld [vmem:[%s2] sm:$0x1]
      %v176 = vlaneseq
      %v177 = vshrl.u32 %v176, 7
      %v178 = vsub.s32 0, %v177
      %v179 = vrot.slane %v174, %v178
      %v181 = vld [vmem:[%s165] sm:$0xff]
      %v182 = vld [vmem:[%s165 + $0x10] sm:$0xff]
      %v183 = vld [vmem:[%s165 + $0x20] sm:$0xff]
      %v184 = vld [vmem:[%s165 + $0x30] sm:$0xff]
      %v185 = vld [vmem:[%s165 + $0x40] sm:$0xff]
      %v186 = vld [vmem:[%s165 + $0x50] sm:$0xff]
      %v187 = vld [vmem:[%s165 + $0x60] sm:$0xff]
      %v188 = vld [vmem:[%s165 + $0x70] sm:$0xff]
      %v189 = vlaneseq
      %v190 = vshrl.u32 %v189, 7
      %v191 = vsub.s32 0, %v190
      %v192 = vrot.slane %v171, %v191
      %v193 = vmul.f32 %v181, %v192
      %v194 = vmul.f32 %v182, %v192
      %v195 = vmul.f32 %v183, %v192
      %v196 = vmul.f32 %v184, %v192
      %v197 = vmul.f32 %v185, %v192
      %v198 = vmul.f32 %v186, %v192
      %v199 = vmul.f32 %v187, %v192
      %v200 = vmul.f32 %v188, %v192
      %v201 = vadd.f32 %v179, %v193
      %v202 = vadd.f32 %v179, %v194
      %v203 = vadd.f32 %v179, %v195
      %v204 = vadd.f32 %v179, %v196
      %v205 = vadd.f32 %v179, %v197
      %v206 = vadd.f32 %v179, %v198
      %v207 = vadd.f32 %v179, %v199
      %v208 = vadd.f32 %v179, %v200
      %v209 = vld [vmem:[%s165 + $0x1] sm:$0xff]
      %v210 = vld [vmem:[%s165 + $0x11] sm:$0xff]
      %v211 = vld [vmem:[%s165 + $0x21] sm:$0xff]
      %v212 = vld [vmem:[%s165 + $0x31] sm:$0xff]
      %v213 = vld [vmem:[%s165 + $0x41] sm:$0xff]
      %v214 = vld [vmem:[%s165 + $0x51] sm:$0xff]
      %v215 = vld [vmem:[%s165 + $0x61] sm:$0xff]
      %v216 = vld [vmem:[%s165 + $0x71] sm:$0xff]
      %v217 = vlaneseq
      %v218 = vshrl.u32 %v217, 7
      %v219 = vsub.s32 1, %v218
      %v220 = vrot.slane %v171, %v219
      %v221 = vmul.f32 %v209, %v220
      %v222 = vmul.f32 %v210, %v220
      %v223 = vmul.f32 %v211, %v220
      %v224 = vmul.f32 %v212, %v220
      %v225 = vmul.f32 %v213, %v220
      %v226 = vmul.f32 %v214, %v220
      %v227 = vmul.f32 %v215, %v220
      %v228 = vmul.f32 %v216, %v220
      %v229 = vadd.f32 %v201, %v221
      %v230 = vadd.f32 %v202, %v222
      %v231 = vadd.f32 %v203, %v223
      %v232 = vadd.f32 %v204, %v224
      %v233 = vadd.f32 %v205, %v225
      %v234 = vadd.f32 %v206, %v226
      %v235 = vadd.f32 %v207, %v227
      %v236 = vadd.f32 %v208, %v228
      %v237 = vld [vmem:[%s165 + $0x2] sm:$0xff]
      %v238 = vld [vmem:[%s165 + $0x12] sm:$0xff]
      %v239 = vld [vmem:[%s165 + $0x22] sm:$0xff]
      %v240 = vld [vmem:[%s165 + $0x32] sm:$0xff]
      %v241 = vld [vmem:[%s165 + $0x42] sm:$0xff]
      %v242 = vld [vmem:[%s165 + $0x52] sm:$0xff]
      %v243 = vld [vmem:[%s165 + $0x62] sm:$0xff]
      %v244 = vld [vmem:[%s165 + $0x72] sm:$0xff]
      %v245 = vlaneseq
      %v246 = vshrl.u32 %v245, 7
      %v247 = vsub.s32 2, %v246
      %v248 = vrot.slane %v171, %v247
      %v249 = vmul.f32 %v237, %v248
      %v250 = vmul.f32 %v238, %v248
      %v251 = vmul.f32 %v239, %v248
      %v252 = vmul.f32 %v240, %v248
      %v253 = vmul.f32 %v241, %v248
      %v254 = vmul.f32 %v242, %v248
      %v255 = vmul.f32 %v243, %v248
      %v256 = vmul.f32 %v244, %v248
      %v257 = vadd.f32 %v229, %v249
      %v258 = vadd.f32 %v230, %v250
      %v259 = vadd.f32 %v231, %v251
      %v260 = vadd.f32 %v232, %v252
      %v261 = vadd.f32 %v233, %v253
      %v262 = vadd.f32 %v234, %v254
      %v263 = vadd.f32 %v235, %v255
      %v264 = vadd.f32 %v236, %v256
      %s265 = scalar_lea.vmem %s165, 16
      %v266 = vld [vmem:[%s265] sm:$0xff]
      %v267 = vld [vmem:[%s265 + $0x10] sm:$0xff]
      %v268 = vld [vmem:[%s265 + $0x20] sm:$0xff]
      %v269 = vld [vmem:[%s265 + $0x30] sm:$0xff]
      %v270 = vld [vmem:[%s265 + $0x40] sm:$0xff]
      %v271 = vld [vmem:[%s265 + $0x50] sm:$0xff]
      %v272 = vld [vmem:[%s265 + $0x60] sm:$0xff]
      %v273 = vld [vmem:[%s265 + $0x70] sm:$0xff]
      %v274 = vlaneseq
      %v275 = vshrl.u32 %v274, 7
      %v276 = vsub.s32 0, %v275
      %v277 = vrot.slane %v172, %v276
      %v278 = vmul.f32 %v266, %v277
      %v279 = vmul.f32 %v267, %v277
      %v280 = vmul.f32 %v268, %v277
      %v281 = vmul.f32 %v269, %v277
      %v282 = vmul.f32 %v270, %v277
      %v283 = vmul.f32 %v271, %v277
      %v284 = vmul.f32 %v272, %v277
      %v285 = vmul.f32 %v273, %v277
      %v286 = vadd.f32 %v257, %v278
      %v287 = vadd.f32 %v258, %v279
      %v288 = vadd.f32 %v259, %v280
      %v289 = vadd.f32 %v260, %v281
      %v290 = vadd.f32 %v261, %v282
      %v291 = vadd.f32 %v262, %v283
      %v292 = vadd.f32 %v263, %v284
      %v293 = vadd.f32 %v264, %v285
      %v294 = vld [vmem:[%s265 + $0x1] sm:$0xff]
      %v295 = vld [vmem:[%s265 + $0x11] sm:$0xff]
      %v296 = vld [vmem:[%s265 + $0x21] sm:$0xff]
      %v297 = vld [vmem:[%s265 + $0x31] sm:$0xff]
      %v298 = vld [vmem:[%s265 + $0x41] sm:$0xff]
      %v299 = vld [vmem:[%s265 + $0x51] sm:$0xff]
      %v300 = vld [vmem:[%s265 + $0x61] sm:$0xff]
      %v301 = vld [vmem:[%s265 + $0x71] sm:$0xff]
      %v302 = vlaneseq
      %v303 = vshrl.u32 %v302, 7
      %v304 = vsub.s32 1, %v303
      %v305 = vrot.slane %v172, %v304
      %v306 = vmul.f32 %v294, %v305
      %v307 = vmul.f32 %v295, %v305
      %v308 = vmul.f32 %v296, %v305
      %v309 = vmul.f32 %v297, %v305
      %v310 = vmul.f32 %v298, %v305
      %v311 = vmul.f32 %v299, %v305
      %v312 = vmul.f32 %v300, %v305
      %v313 = vmul.f32 %v301, %v305
      %v314 = vadd.f32 %v286, %v306
      %v315 = vadd.f32 %v287, %v307
      %v316 = vadd.f32 %v288, %v308
      %v317 = vadd.f32 %v289, %v309
      %v318 = vadd.f32 %v290, %v310
      %v319 = vadd.f32 %v291, %v311
      %v320 = vadd.f32 %v292, %v312
      %v321 = vadd.f32 %v293, %v313
      %v322 = vld [vmem:[%s265 + $0x2] sm:$0xff]
      %v323 = vld [vmem:[%s265 + $0x12] sm:$0xff]
      %v324 = vld [vmem:[%s265 + $0x22] sm:$0xff]
      %v325 = vld [vmem:[%s265 + $0x32] sm:$0xff]
      %v326 = vld [vmem:[%s265 + $0x42] sm:$0xff]
      %v327 = vld [vmem:[%s265 + $0x52] sm:$0xff]
      %v328 = vld [vmem:[%s265 + $0x62] sm:$0xff]
      %v329 = vld [vmem:[%s265 + $0x72] sm:$0xff]
      %v330 = vlaneseq
      %v331 = vshrl.u32 %v330, 7
      %v332 = vsub.s32 2, %v331
      %v333 = vrot.slane %v172, %v332
      %v334 = vmul.f32 %v322, %v333
      %v335 = vmul.f32 %v323, %v333
      %v336 = vmul.f32 %v324, %v333
      %v337 = vmul.f32 %v325, %v333
      %v338 = vmul.f32 %v326, %v333
      %v339 = vmul.f32 %v327, %v333
      %v340 = vmul.f32 %v328, %v333
      %v341 = vmul.f32 %v329, %v333
      %v342 = vadd.f32 %v314, %v334
      %v343 = vadd.f32 %v315, %v335
      %v344 = vadd.f32 %v316, %v336
      %v345 = vadd.f32 %v317, %v337
      %v346 = vadd.f32 %v318, %v338
      %v347 = vadd.f32 %v319, %v339
      %v348 = vadd.f32 %v320, %v340
      %v349 = vadd.f32 %v321, %v341
      %s350 = scalar_lea.vmem %s165, 32
      %v351 = vld [vmem:[%s350] sm:$0xff]
      %v352 = vld [vmem:[%s350 + $0x10] sm:$0xff]
      %v353 = vld [vmem:[%s350 + $0x20] sm:$0xff]
      %v354 = vld [vmem:[%s350 + $0x30] sm:$0xff]
      %v355 = vld [vmem:[%s350 + $0x40] sm:$0xff]
      %v356 = vld [vmem:[%s350 + $0x50] sm:$0xff]
      %v357 = vld [vmem:[%s350 + $0x60] sm:$0xff]
      %v358 = vld [vmem:[%s350 + $0x70] sm:$0xff]
      %v359 = vlaneseq
      %v360 = vshrl.u32 %v359, 7
      %v361 = vsub.s32 0, %v360
      %v362 = vrot.slane %v173, %v361
      %v363 = vmul.f32 %v351, %v362
      %v364 = vmul.f32 %v352, %v362
      %v365 = vmul.f32 %v353, %v362
      %v366 = vmul.f32 %v354, %v362
      %v367 = vmul.f32 %v355, %v362
      %v368 = vmul.f32 %v356, %v362
      %v369 = vmul.f32 %v357, %v362
      %v370 = vmul.f32 %v358, %v362
      %v371 = vadd.f32 %v342, %v363
      %v372 = vadd.f32 %v343, %v364
      %v373 = vadd.f32 %v344, %v365
      %v374 = vadd.f32 %v345, %v366
      %v375 = vadd.f32 %v346, %v367
      %v376 = vadd.f32 %v347, %v368
      %v377 = vadd.f32 %v348, %v369
      %v378 = vadd.f32 %v349, %v370
      %v379 = vld [vmem:[%s350 + $0x1] sm:$0xff]
      %v380 = vld [vmem:[%s350 + $0x11] sm:$0xff]
      %v381 = vld [vmem:[%s350 + $0x21] sm:$0xff]
      %v382 = vld [vmem:[%s350 + $0x31] sm:$0xff]
      %v383 = vld [vmem:[%s350 + $0x41] sm:$0xff]
      %v384 = vld [vmem:[%s350 + $0x51] sm:$0xff]
      %v385 = vld [vmem:[%s350 + $0x61] sm:$0xff]
      %v386 = vld [vmem:[%s350 + $0x71] sm:$0xff]
      %v387 = vlaneseq
      %v388 = vshrl.u32 %v387, 7
      %v389 = vsub.s32 1, %v388
      %v390 = vrot.slane %v173, %v389
      %v391 = vmul.f32 %v379, %v390
      %v392 = vmul.f32 %v380, %v390
      %v393 = vmul.f32 %v381, %v390
      %v394 = vmul.f32 %v382, %v390
      %v395 = vmul.f32 %v383, %v390
      %v396 = vmul.f32 %v384, %v390
      %v397 = vmul.f32 %v385, %v390
      %v398 = vmul.f32 %v386, %v390
      %v399 = vadd.f32 %v371, %v391
      %v400 = vadd.f32 %v372, %v392
      %v401 = vadd.f32 %v373, %v393
      %v402 = vadd.f32 %v374, %v394
      %v403 = vadd.f32 %v375, %v395
      %v404 = vadd.f32 %v376, %v396
      %v405 = vadd.f32 %v377, %v397
      %v406 = vadd.f32 %v378, %v398
      %v407 = vld [vmem:[%s350 + $0x2] sm:$0xff]
      %v408 = vld [vmem:[%s350 + $0x12] sm:$0xff]
      %v409 = vld [vmem:[%s350 + $0x22] sm:$0xff]
      %v410 = vld [vmem:[%s350 + $0x32] sm:$0xff]
      %v411 = vld [vmem:[%s350 + $0x42] sm:$0xff]
      %v412 = vld [vmem:[%s350 + $0x52] sm:$0xff]
      %v413 = vld [vmem:[%s350 + $0x62] sm:$0xff]
      %v414 = vld [vmem:[%s350 + $0x72] sm:$0xff]
      %v415 = vlaneseq
      %v416 = vshrl.u32 %v415, 7
      %v417 = vsub.s32 2, %v416
      %v418 = vrot.slane %v173, %v417
      %v419 = vmul.f32 %v407, %v418
      %v420 = vmul.f32 %v408, %v418
      %v421 = vmul.f32 %v409, %v418
      %v422 = vmul.f32 %v410, %v418
      %v423 = vmul.f32 %v411, %v418
      %v424 = vmul.f32 %v412, %v418
      %v425 = vmul.f32 %v413, %v418
      %v426 = vmul.f32 %v414, %v418
      %v427 = vadd.f32 %v399, %v419
      %v428 = vadd.f32 %v400, %v420
      %v429 = vadd.f32 %v401, %v421
      %v430 = vadd.f32 %v402, %v422
      %v431 = vadd.f32 %v403, %v423
      %v432 = vadd.f32 %v404, %v424
      %v433 = vadd.f32 %v405, %v425
      %v434 = vadd.f32 %v406, %v426
      %v435 = vsub.f32 0.0, %v427
      %v436 = vsub.f32 0.0, %v428
      %v437 = vsub.f32 0.0, %v429
      %v438 = vsub.f32 0.0, %v430
      %v439 = vsub.f32 0.0, %v431
      %v440 = vsub.f32 0.0, %v432
      %v441 = vsub.f32 0.0, %v433
      %v442 = vsub.f32 0.0, %v434
      %v443 = vmul.f32 %v435, 1.442695
      %v444 = vpow.pop %v443
      %v445 = vmul.f32 %v436, 1.442695
      %v446 = vpow.pop %v445
      %v447 = vmul.f32 %v437, 1.442695
      %v448 = vpow.pop %v447
      %v449 = vmul.f32 %v438, 1.442695
      %v450 = vpow.pop %v449
      %v451 = vmul.f32 %v439, 1.442695
      %v452 = vpow.pop %v451
      %v453 = vmul.f32 %v440, 1.442695
      %v454 = vpow.pop %v453
      %v455 = vmul.f32 %v441, 1.442695
      %v456 = vpow.pop %v455
      %v457 = vmul.f32 %v442, 1.442695
      %v458 = vpow.pop %v457
      %v459 = vadd.f32 %v444, 1.0
      %v460 = vadd.f32 %v446, 1.0
      %v461 = vadd.f32 %v448, 1.0
      %v462 = vadd.f32 %v450, 1.0
      %v463 = vadd.f32 %v452, 1.0
      %v464 = vadd.f32 %v454, 1.0
      %v465 = vadd.f32 %v456, 1.0
      %v466 = vadd.f32 %v458, 1.0
      %v467 = vrcp.pop %v459
      %v468 = vmul.f32 1.0, %v467
      %v469 = vrcp.pop %v460
      %v470 = vmul.f32 1.0, %v469
      %v471 = vrcp.pop %v461
      %v472 = vmul.f32 1.0, %v471
      %v473 = vrcp.pop %v462
      %v474 = vmul.f32 1.0, %v473
      %v475 = vrcp.pop %v463
      %v476 = vmul.f32 1.0, %v475
      %v477 = vrcp.pop %v464
      %v478 = vmul.f32 1.0, %v477
      %v479 = vrcp.pop %v465
      %v480 = vmul.f32 1.0, %v479
      %v481 = vrcp.pop %v466
      %v482 = vmul.f32 1.0, %v481
      %v483 = vmul.f32 %v427, %v468
      %v484 = vmul.f32 %v428, %v470
      %v485 = vmul.f32 %v429, %v472
      %v486 = vmul.f32 %v430, %v474
      %v487 = vmul.f32 %v431, %v476
      %v488 = vmul.f32 %v432, %v478
      %v489 = vmul.f32 %v433, %v480
      %v490 = vmul.f32 %v434, %v482
      %vm491 = vcmask 523264
      %492 = vst.msk [vmem:[%s170] sm:$0xff] %vm491, %v483
      %493 = vst.msk [vmem:[%s170 + $0x8] sm:$0xff] %vm491, %v484
      %494 = vst.msk [vmem:[%s170 + $0x10] sm:$0xff] %vm491, %v485
      %495 = vst.msk [vmem:[%s170 + $0x18] sm:$0xff] %vm491, %v486
      %496 = vst.msk [vmem:[%s170 + $0x20] sm:$0xff] %vm491, %v487
      %497 = vst.msk [vmem:[%s170 + $0x28] sm:$0xff] %vm491, %v488
      %498 = vst.msk [vmem:[%s170 + $0x30] sm:$0xff] %vm491, %v489
      %499 = vst.msk [vmem:[%s170 + $0x38] sm:$0xff] %vm491, %v490
      %p500 = scmp.lt.s32.totalorder %s14, 1
      %s501 = scalar_select %p500, %s14, 1
      %s502 = smul.addr %s501, 8
      %s503 = smul.addr %s502, 8
      %s504 = scalar_lea.vmem %s3, %s503
      // Predicated region
      $region33: #{_lambda_.6} parent=31 // pred_check
        %p505 = pneg %p100
      $region34: #{_lambda_.6} parent=31 // pred_check_branch
        %507 = sbr.rel (%p505) target = $region36
      $region35: #{_lambda_.6} parent=31 // pred_region
        _
      $region36: #{_lambda_.6} parent=31 // pred_fallthru
        _
    $region32: #{_lambda_.6} parent=5 // pred_fallthru
      _
    %p508 = scmp.le.s32.totalorder 2, %s9
    // Predicated region
    $region37: #{_lambda_.6} parent=5 // pred_check
      %p509 = pneg %p508
    $region38: #{_lambda_.6} parent=5 // pred_check_branch
      %511 = sbr.rel (%p509) target = $region40
    $region39: #{_lambda_.6} parent=5 // pred_region
      %s512 = ssub.s32 %s9, 2
      // Predicated region
      $region41: #{_lambda_.6} parent=39 // pred_check
        %p513 = pneg %p106
      $region42: #{_lambda_.6} parent=39 // pred_check_branch
        %515 = sbr.rel (%p513) target = $region44
      $region43: #{_lambda_.6} parent=39 // pred_region
        %p516 = scmp.lt.s32.totalorder %s15, 1
        %s517 = scalar_select %p516, %s15, 1
        %s518 = smul.addr %s517, 8
        %s519 = smul.addr %s518, 8
        %s520 = scalar_lea.vmem %s3, %s519
      $region44: #{_lambda_.6} parent=39 // pred_fallthru
        _
    $region40: #{_lambda_.6} parent=5 // pred_fallthru
      _
  $region6: #{_lambda_.6} parent=0 // loop_footer
    %s13 = sadd.s32 1, %s9
  $region7: #{_lambda_.6} parent=0 // loop_footer_branch
    %8 = sbr.rel target = $region3
  $region8: #{_lambda_.6} parent=0 // loop_exit
    _

// kernel: _lambda_.8
$region0: #{_lambda_.8}
  #allocation0 [shape = 'u32[]', space=smem, size = 0x4, offset = 0x4, fixed_abs, tag = 'smem constant byte address 0x4 - core index']
  #allocation1 [shape = 'u32[144,128]{1,0:T(1,128)}', space=vmem, size = 0x12000, scoped, tag = 'internal scratch']
  #allocation2 [shape = 'f32[16,128]{1,0:T(8,128)}', space=vmem, size = 0x2000, scoped, tag = 'scratch operand']
  #allocation3 [shape = 'f32[256,128]{1,0:T(8,128)}', space=vmem, size = 0x20000, scoped, tag = 'scratch operand']
  #allocation4 [shape = 'f32[256,128]{1,0:T(8,128)}', space=vmem, size = 0x20000, scoped, tag = 'scratch operand']
  #allocation5 [shape = 'f32[256,128]{1,0:T(8,128)}', space=vmem, size = 0x20000, scoped, tag = 'scratch operand']
  #allocation6 [shape = 'f32[16,128]{1,0:T(8,128)}', space=vmem, size = 0x2000, scoped, tag = 'scratch operand']
  %s0 = inlined_call_operand.vmem [shape: f32[2,64,256], index: 0, kind: input, shape index: {}]
  %s1 = inlined_call_operand.vmem [shape: f32[2,64,256], index: 1, kind: input, shape index: {}]
  %s2 = inlined_call_operand.vmem [shape: f32[16,256], index: 2, kind: input, shape index: {}]
  %s3 = inlined_call_operand.vmem [shape: f32[2,1024,8], index: 3, kind: input, shape index: {}]
  %s4 = inlined_call_operand.vmem [shape: f32[8,256], index: 4, kind: input, shape index: {}]
  %s5 = inlined_call_operand.vmem [shape: f32[8,256], index: 5, kind: input, shape index: {}]
  %s6 = inlined_call_operand.vmem [shape: f32[1,256], index: 6, kind: input, shape index: {}]
  %s7 = inlined_call_operand.vmem [shape: f32[2,64,256], index: 7, kind: output, shape index: {}]
  %s8 = sld [smem:[#allocation0]]
  $region220: #{_lambda_.8} parent=0
    _
  %s10 = ssub.s32 1, %s8
  %s11 = scalar_select 0, %s10, %s8
  $region1: #{_lambda_.8} parent=0
    #allocation7 [shape = 'u8[32768]{0}', space=vmem, size = 0x8000, scoped, tag = 'input window, operand 0']
    #allocation8 [shape = 'u8[32768]{0}', space=vmem, size = 0x8000, scoped, tag = 'input window, operand 1']
    #allocation9 [shape = 'u8[16384]{0}', space=vmem, size = 0x4000, scoped, tag = 'input window, operand 2']
    #allocation10 [shape = 'u8[32768]{0}', space=vmem, size = 0x8000, scoped, tag = 'output window, operand 0']
    loop: start=0, step=1, limit=10
    $region2: #{_lambda_.8} parent=1 // loop_pre_header
      _
    $region3: #{_lambda_.8} parent=1 // loop_header
      %s13 = sphi 0, %s17
      %p14 = scmp.ge.s32.totalorder %s13, 10
      %s20 = sphi 0, %s39
      %s21 = sphi 0, %s35
      %s22 = sphi 0, %s31
      %s23 = sphi 0, %s20
      %s24 = sphi 0, %s21
      %s25 = sphi 0, %s22
      %s26 = sphi 0, %s23
      %s27 = sphi 0, %s24
      %s28 = sphi 0, %s25
      %s46 = sphi 0, %s48
      %s49 = sphi 0, %s46
      %s50 = sphi 0, %s49
      %s66 = sphi 0, %s50
      %s76 = sphi 0, %s78
      %s79 = sphi 0, %s76
      %s80 = sphi 0, %s79
      %s96 = sphi 0, %s80
      %s102 = sphi 0, %s104
      %s105 = sphi 0, %s102
      %s106 = sphi 0, %s105
      %s122 = sphi 0, %s106
      %s130 = sphi 0, %s132
      %s133 = sphi 0, %s130
      %s134 = sphi 0, %s133
      %s150 = sphi 0, %s134
      %s156 = sphi 0, %s158
      %s159 = sphi 0, %s156
      %s160 = sphi 0, %s159
      %s176 = sphi 0, %s160
      %s182 = sphi 0, %s184
      %s185 = sphi 0, %s182
      %s186 = sphi 0, %s185
      %s202 = sphi 0, %s186
      %s208 = sphi 0, %s210
      %s211 = sphi 0, %s208
      %s212 = sphi 0, %s211
      %s228 = sphi 0, %s212
      %s238 = sphi 0, %s240
      %s241 = sphi 0, %s238
      %s242 = sphi 0, %s241
      %s258 = sphi 0, %s242
    $region4: #{_lambda_.8} parent=1 // loop_header_branch
      %16 = sbr.rel (%p14) target = $region8
    $region5: #{_lambda_.8} parent=1 // loop_body
      %s18 = ssub.s32 %s13, 1
      %s19 = ssub.s32 %s13, 2
      %s29 = sadd.s32 1, %s22
      %p30 = scmp.ge.s32.totalorder %s29, 2
      %s31 = scalar_select %p30, 0, %s29
      %s32 = sadd.s32 1, %s21
      %s33 = scalar_select %p30, %s32, %s21
      %p34 = scmp.ge.s32.totalorder %s33, 2
      %s35 = scalar_select %p34, 0, %s33
      %s36 = sadd.s32 1, %s20
      %s37 = scalar_select %p34, %s36, %s20
      %p38 = scmp.ge.s32.totalorder %s37, 2
      %s39 = scalar_select %p38, 0, %s37
      %s40 = ssub.s32 %s20, %s39
      %s41 = ssub.s32 %s22, %s31
      %s42 = sor.u32 %s40, %s41
      %s43 = ssub.s32 %s21, %s35
      %s44 = sor.u32 %s42, %s43
      %p45 = scmp.eq.s32.totalorder %s44, 0
      %s47 = sadd.s32 %s46, 1
      %s48 = scalar_select %p45, %s46, %s47
      %p51 = pneg %p45
      %p52 = scmp.eq.s32.totalorder %s13, 7
      %p53 = por %p51, %p52
      %p54 = scmp.ne.s32.totalorder %s46, %s49
      %p55 = scmp.eq.s32.totalorder %s13, 0
      %p56 = por %p54, %p55
      %p57 = scmp.ne.s32.totalorder %s46, %s49
      %p58 = scmp.eq.s32.totalorder %s18, 7
      %p59 = por %p57, %p58
      %p60 = scmp.ne.s32.totalorder %s49, %s50
      %p61 = scmp.eq.s32.totalorder %s18, 0
      %p62 = por %p60, %p61
      %p63 = scmp.ne.s32.totalorder %s49, %s50
      %p64 = scmp.eq.s32.totalorder %s19, 7
      %p65 = por %p63, %p64
      %p67 = scmp.ne.s32.totalorder %s50, %s66
      %p68 = scmp.eq.s32.totalorder %s19, 0
      %p69 = por %p67, %p68
      %s70 = ssub.s32 %s20, %s39
      %s71 = ssub.s32 %s22, %s31
      %s72 = sor.u32 %s70, %s71
      %s73 = ssub.s32 %s21, %s35
      %s74 = sor.u32 %s72, %s73
      %p75 = scmp.eq.s32.totalorder %s74, 0
      %s77 = sadd.s32 %s76, 1
      %s78 = scalar_select %p75, %s76, %s77
      %p81 = pneg %p75
      %p82 = scmp.eq.s32.totalorder %s13, 7
      %p83 = por %p81, %p82
      %p84 = scmp.ne.s32.totalorder %s76, %s79
      %p85 = scmp.eq.s32.totalorder %s13, 0
      %p86 = por %p84, %p85
      %p87 = scmp.ne.s32.totalorder %s76, %s79
      %p88 = scmp.eq.s32.totalorder %s18, 7
      %p89 = por %p87, %p88
      %p90 = scmp.ne.s32.totalorder %s79, %s80
      %p91 = scmp.eq.s32.totalorder %s18, 0
      %p92 = por %p90, %p91
      %p93 = scmp.ne.s32.totalorder %s79, %s80
      %p94 = scmp.eq.s32.totalorder %s19, 7
      %p95 = por %p93, %p94
      %p97 = scmp.ne.s32.totalorder %s80, %s96
      %p98 = scmp.eq.s32.totalorder %s19, 0
      %p99 = por %p97, %p98
      %s100 = ssub.s32 %s21, %s35
      %p101 = scmp.eq.s32.totalorder %s100, 0
      %s103 = sadd.s32 %s102, 1
      %s104 = scalar_select %p101, %s102, %s103
      %p107 = pneg %p101
      %p108 = scmp.eq.s32.totalorder %s13, 7
      %p109 = por %p107, %p108
      %p110 = scmp.ne.s32.totalorder %s102, %s105
      %p111 = scmp.eq.s32.totalorder %s13, 0
      %p112 = por %p110, %p111
      %p113 = scmp.ne.s32.totalorder %s102, %s105
      %p114 = scmp.eq.s32.totalorder %s18, 7
      %p115 = por %p113, %p114
      %p116 = scmp.ne.s32.totalorder %s105, %s106
      %p117 = scmp.eq.s32.totalorder %s18, 0
      %p118 = por %p116, %p117
      %p119 = scmp.ne.s32.totalorder %s105, %s106
      %p120 = scmp.eq.s32.totalorder %s19, 7
      %p121 = por %p119, %p120
      %p123 = scmp.ne.s32.totalorder %s106, %s122
      %p124 = scmp.eq.s32.totalorder %s19, 0
      %p125 = por %p123, %p124
      %s126 = ssub.s32 %s20, %s39
      %s127 = ssub.s32 %s22, %s31
      %s128 = sor.u32 %s126, %s127
      %p129 = scmp.eq.s32.totalorder %s128, 0
      %s131 = sadd.s32 %s130, 1
      %s132 = scalar_select %p129, %s130, %s131
      %p135 = pneg %p129
      %p136 = scmp.eq.s32.totalorder %s13, 7
      %p137 = por %p135, %p136
      %p138 = scmp.ne.s32.totalorder %s130, %s133
      %p139 = scmp.eq.s32.totalorder %s13, 0
      %p140 = por %p138, %p139
      %p141 = scmp.ne.s32.totalorder %s130, %s133
      %p142 = scmp.eq.s32.totalorder %s18, 7
      %p143 = por %p141, %p142
      %p144 = scmp.ne.s32.totalorder %s133, %s134
      %p145 = scmp.eq.s32.totalorder %s18, 0
      %p146 = por %p144, %p145
      %p147 = scmp.ne.s32.totalorder %s133, %s134
      %p148 = scmp.eq.s32.totalorder %s19, 7
      %p149 = por %p147, %p148
      %p151 = scmp.ne.s32.totalorder %s134, %s150
      %p152 = scmp.eq.s32.totalorder %s19, 0
      %p153 = por %p151, %p152
      %s154 = ssub.s32 %s21, %s35
      %p155 = scmp.eq.s32.totalorder %s154, 0
      %s157 = sadd.s32 %s156, 1
      %s158 = scalar_select %p155, %s156, %s157
      %p161 = pneg %p155
      %p162 = scmp.eq.s32.totalorder %s13, 7
      %p163 = por %p161, %p162
      %p164 = scmp.ne.s32.totalorder %s156, %s159
      %p165 = scmp.eq.s32.totalorder %s13, 0
      %p166 = por %p164, %p165
      %p167 = scmp.ne.s32.totalorder %s156, %s159
      %p168 = scmp.eq.s32.totalorder %s18, 7
      %p169 = por %p167, %p168
      %p170 = scmp.ne.s32.totalorder %s159, %s160
      %p171 = scmp.eq.s32.totalorder %s18, 0
      %p172 = por %p170, %p171
      %p173 = scmp.ne.s32.totalorder %s159, %s160
      %p174 = scmp.eq.s32.totalorder %s19, 7
      %p175 = por %p173, %p174
      %p177 = scmp.ne.s32.totalorder %s160, %s176
      %p178 = scmp.eq.s32.totalorder %s19, 0
      %p179 = por %p177, %p178
      %s180 = ssub.s32 %s21, %s35
      %p181 = scmp.eq.s32.totalorder %s180, 0
      %s183 = sadd.s32 %s182, 1
      %s184 = scalar_select %p181, %s182, %s183
      %p187 = pneg %p181
      %p188 = scmp.eq.s32.totalorder %s13, 7
      %p189 = por %p187, %p188
      %p190 = scmp.ne.s32.totalorder %s182, %s185
      %p191 = scmp.eq.s32.totalorder %s13, 0
      %p192 = por %p190, %p191
      %p193 = scmp.ne.s32.totalorder %s182, %s185
      %p194 = scmp.eq.s32.totalorder %s18, 7
      %p195 = por %p193, %p194
      %p196 = scmp.ne.s32.totalorder %s185, %s186
      %p197 = scmp.eq.s32.totalorder %s18, 0
      %p198 = por %p196, %p197
      %p199 = scmp.ne.s32.totalorder %s185, %s186
      %p200 = scmp.eq.s32.totalorder %s19, 7
      %p201 = por %p199, %p200
      %p203 = scmp.ne.s32.totalorder %s186, %s202
      %p204 = scmp.eq.s32.totalorder %s19, 0
      %p205 = por %p203, %p204
      %s206 = ssub.s32 %s21, %s35
      %p207 = scmp.eq.s32.totalorder %s206, 0
      %s209 = sadd.s32 %s208, 1
      %s210 = scalar_select %p207, %s208, %s209
      %p213 = pneg %p207
      %p214 = scmp.eq.s32.totalorder %s13, 7
      %p215 = por %p213, %p214
      %p216 = scmp.ne.s32.totalorder %s208, %s211
      %p217 = scmp.eq.s32.totalorder %s13, 0
      %p218 = por %p216, %p217
      %p219 = scmp.ne.s32.totalorder %s208, %s211
      %p220 = scmp.eq.s32.totalorder %s18, 7
      %p221 = por %p219, %p220
      %p222 = scmp.ne.s32.totalorder %s211, %s212
      %p223 = scmp.eq.s32.totalorder %s18, 0
      %p224 = por %p222, %p223
      %p225 = scmp.ne.s32.totalorder %s211, %s212
      %p226 = scmp.eq.s32.totalorder %s19, 7
      %p227 = por %p225, %p226
      %p229 = scmp.ne.s32.totalorder %s212, %s228
      %p230 = scmp.eq.s32.totalorder %s19, 0
      %p231 = por %p229, %p230
      %s232 = ssub.s32 %s20, %s39
      %s233 = ssub.s32 %s22, %s31
      %s234 = sor.u32 %s232, %s233
      %s235 = ssub.s32 %s21, %s35
      %s236 = sor.u32 %s234, %s235
      %p237 = scmp.eq.s32.totalorder %s236, 0
      %s239 = sadd.s32 %s238, 1
      %s240 = scalar_select %p237, %s238, %s239
      %p243 = pneg %p237
      %p244 = scmp.eq.s32.totalorder %s13, 7
      %p245 = por %p243, %p244
      %p246 = scmp.ne.s32.totalorder %s238, %s241
      %p247 = scmp.eq.s32.totalorder %s13, 0
      %p248 = por %p246, %p247
      %p249 = scmp.ne.s32.totalorder %s238, %s241
      %p250 = scmp.eq.s32.totalorder %s18, 7
      %p251 = por %p249, %p250
      %p252 = scmp.ne.s32.totalorder %s241, %s242
      %p253 = scmp.eq.s32.totalorder %s18, 0
      %p254 = por %p252, %p253
      %p255 = scmp.ne.s32.totalorder %s241, %s242
      %p256 = scmp.eq.s32.totalorder %s19, 7
      %p257 = por %p255, %p256
      %p259 = scmp.ne.s32.totalorder %s242, %s258
      %p260 = scmp.eq.s32.totalorder %s19, 0
      %p261 = por %p259, %p260
      %p262 = scmp.le.s32.totalorder 1, %s13
      %p263 = scmp.lt.s32.totalorder %s13, 9
      %p264 = pnand %p262, %p263
      %p265 = pneg %p264
      // Predicated region
      $region9: #{_lambda_.8} parent=5 // pred_check
        _
      $region10: #{_lambda_.8} parent=5 // pred_check_branch
        %267 = sbr.rel (%p264) target = $region12
      $region11: #{_lambda_.8} parent=5 // pred_region
        %s268 = ssub.s32 %s13, 1
      $region12: #{_lambda_.8} parent=5 // pred_fallthru
        _
      %p269 = scmp.lt.s32.totalorder %s13, 8
      // Predicated region
      $region13: #{_lambda_.8} parent=5 // pred_check
        %p270 = pneg %p269
      $region14: #{_lambda_.8} parent=5 // pred_check_branch
        %272 = sbr.rel (%p270) target = $region16
      $region15: #{_lambda_.8} parent=5 // pred_region
        // Predicated region
        $region17: #{_lambda_.8} parent=15 // pred_check
          %p273 = pneg %p56
        $region18: #{_lambda_.8} parent=15 // pred_check_branch
          %275 = sbr.rel (%p273) target = $region20
        $region19: #{_lambda_.8} parent=15 // pred_region
          %s276 = sand.u32 %s46, 1
          %s277 = sand.u32 %s46, 1
          %s278 = smul.addr %s277, 32
          %s279 = scalar_lea.vmem [#allocation7], %s278
          %s280 = smul.u32 4, %s22
          %s281 = smul.addr %s280, 2
          %s282 = sadd.s32 %s21, %s281
          %s283 = smul.addr %s20, 16
          %s284 = sadd.s32 %s282, %s283
          %s285 = smul.addr %s284, 8
          %s286 = scalar_lea.vmem %s0, %s285
          // Predicated region
          $region21: #{_lambda_.8} parent=19 // pred_check
            _
          $region22: #{_lambda_.8} parent=19 // pred_check_branch
            %288 = sbr.rel (0) target = $region24
          $region23: #{_lambda_.8} parent=19 // pred_region
            // Predicated region
            $region25: #{_lambda_.8} parent=23 // pred_check
              _
            $region26: #{_lambda_.8} parent=23 // pred_check_branch
              %290 = sbr.rel (0) target = $region28
            $region27: #{_lambda_.8} parent=23 // pred_region
              // Predicated region
              $region40: #{_lambda_.8} parent=27 // pred_check
                _
              $region41: #{_lambda_.8} parent=27 // pred_check_branch
                %311 = sbr.rel (0) target = $region43
              $region42: #{_lambda_.8} parent=27 // pred_region
                loop: start=0, step=1, limit=1
                $region44: #{_lambda_.8} parent=42 // loop_pre_header
                  _
                $region45: #{_lambda_.8} parent=42 // loop_header
                  %s313 = sphi 0, %s317
                  %p314 = scmp.ge.s32.totalorder %s313, 1
                  %s318 = sphi %s286, %s286
                  %s319 = sphi %s279, %s279
                $region46: #{_lambda_.8} parent=42 // loop_header_branch
                  %316 = sbr.rel (%p314) target = $region50
                $region47: #{_lambda_.8} parent=42 // loop_body
                  %v320 = vld [vmem:[%s318] sm:$0xff]
                  %321 = vst [vmem:[%s319] sm:$0xff] %v320
                  %v322 = vld [vmem:[%s318 + $0x10] sm:$0xff]
                  %323 = vst [vmem:[%s319 + $0x8] sm:$0xff] %v322
                  %v324 = vld [vmem:[%s318 + $0x20] sm:$0xff]
                  %325 = vst [vmem:[%s319 + $0x10] sm:$0xff] %v324
                  %v326 = vld [vmem:[%s318 + $0x30] sm:$0xff]
                  %327 = vst [vmem:[%s319 + $0x18] sm:$0xff] %v326
                $region48: #{_lambda_.8} parent=42 // loop_footer
                  %s317 = sadd.s32 1, %s313
                $region49: #{_lambda_.8} parent=42 // loop_footer_branch
                  %312 = sbr.rel target = $region45
                $region50: #{_lambda_.8} parent=42 // loop_exit
                  _
              $region43: #{_lambda_.8} parent=27 // pred_fallthru
                _
              // Predicated region
              $region51: #{_lambda_.8} parent=27 // pred_check
                _
              $region52: #{_lambda_.8} parent=27 // pred_check_branch
                %329 = sbr.rel target = $region54
              $region53: #{_lambda_.8} parent=27 // pred_region
                _
              $region54: #{_lambda_.8} parent=27 // pred_fallthru
                _
            $region28: #{_lambda_.8} parent=23 // pred_fallthru
              _
            // Predicated region
            $region29: #{_lambda_.8} parent=23 // pred_check
              _
            $region30: #{_lambda_.8} parent=23 // pred_check_branch
              %292 = sbr.rel target = $region32
            $region31: #{_lambda_.8} parent=23 // pred_region
              loop: start=0, step=1, limit=1
              $region33: #{_lambda_.8} parent=31 // loop_pre_header
                _
              $region34: #{_lambda_.8} parent=31 // loop_header
                %s295 = sphi 0, %s299
                %p296 = scmp.ge.s32.totalorder %s295, 1
                %s300 = sphi %s286, %s286
                %s301 = sphi %s279, %s279
              $region35: #{_lambda_.8} parent=31 // loop_header_branch
                %298 = sbr.rel (%p296) target = $region39
              $region36: #{_lambda_.8} parent=31 // loop_body
                %v302 = vld [vmem:[%s300] sm:$0xff]
                %303 = vst [vmem:[%s301] sm:$0xff] %v302
                %v304 = vld [vmem:[%s300 + $0x10] sm:$0xff]
                %305 = vst [vmem:[%s301 + $0x8] sm:$0xff] %v304
                %v306 = vld [vmem:[%s300 + $0x20] sm:$0xff]
                %307 = vst [vmem:[%s301 + $0x10] sm:$0xff] %v306
                %v308 = vld [vmem:[%s300 + $0x30] sm:$0xff]
                %309 = vst [vmem:[%s301 + $0x18] sm:$0xff] %v308
              $region37: #{_lambda_.8} parent=31 // loop_footer
                %s299 = sadd.s32 1, %s295
              $region38: #{_lambda_.8} parent=31 // loop_footer_branch
                %294 = sbr.rel target = $region34
              $region39: #{_lambda_.8} parent=31 // loop_exit
                _
            $region32: #{_lambda_.8} parent=23 // pred_fallthru
              _
          $region24: #{_lambda_.8} parent=19 // pred_fallthru
            _
          %330 = vnop
        $region20: #{_lambda_.8} parent=15 // pred_fallthru
          _
        // Predicated region
        $region55: #{_lambda_.8} parent=15 // pred_check
          %p331 = pneg %p86
        $region56: #{_lambda_.8} parent=15 // pred_check_branch
          %333 = sbr.rel (%p331) target = $region58
        $region57: #{_lambda_.8} parent=15 // pred_region
          %s334 = sand.u32 %s76, 1
          %s335 = sand.u32 %s76, 1
          %s336 = smul.addr %s335, 32
          %s337 = scalar_lea.vmem [#allocation8], %s336
          %s338 = smul.u32 4, %s22
          %s339 = smul.addr %s338, 2
          %s340 = sadd.s32 %s21, %s339
          %s341 = smul.addr %s20, 16
          %s342 = sadd.s32 %s340, %s341
          %s343 = smul.addr %s342, 8
          %s344 = scalar_lea.vmem %s1, %s343
          // Predicated region
          $region59: #{_lambda_.8} parent=57 // pred_check
            _
          $region60: #{_lambda_.8} parent=57 // pred_check_branch
            %346 = sbr.rel (0) target = $region62
          $region61: #{_lambda_.8} parent=57 // pred_region
            // Predicated region
            $region63: #{_lambda_.8} parent=61 // pred_check
              _
            $region64: #{_lambda_.8} parent=61 // pred_check_branch
              %348 = sbr.rel (0) target = $region66
            $region65: #{_lambda_.8} parent=61 // pred_region
              // Predicated region
              $region78: #{_lambda_.8} parent=65 // pred_check
                _
              $region79: #{_lambda_.8} parent=65 // pred_check_branch
                %369 = sbr.rel (0) target = $region81
              $region80: #{_lambda_.8} parent=65 // pred_region
                loop: start=0, step=1, limit=1
                $region82: #{_lambda_.8} parent=80 // loop_pre_header
                  _
                $region83: #{_lambda_.8} parent=80 // loop_header
                  %s371 = sphi 0, %s375
                  %p372 = scmp.ge.s32.totalorder %s371, 1
                  %s376 = sphi %s344, %s344
                  %s377 = sphi %s337, %s337
                $region84: #{_lambda_.8} parent=80 // loop_header_branch
                  %374 = sbr.rel (%p372) target = $region88
                $region85: #{_lambda_.8} parent=80 // loop_body
                  %v378 = vld [vmem:[%s376] sm:$0xff]
                  %379 = vst [vmem:[%s377] sm:$0xff] %v378
                  %v380 = vld [vmem:[%s376 + $0x10] sm:$0xff]
                  %381 = vst [vmem:[%s377 + $0x8] sm:$0xff] %v380
                  %v382 = vld [vmem:[%s376 + $0x20] sm:$0xff]
                  %383 = vst [vmem:[%s377 + $0x10] sm:$0xff] %v382
                  %v384 = vld [vmem:[%s376 + $0x30] sm:$0xff]
                  %385 = vst [vmem:[%s377 + $0x18] sm:$0xff] %v384
                $region86: #{_lambda_.8} parent=80 // loop_footer
                  %s375 = sadd.s32 1, %s371
                $region87: #{_lambda_.8} parent=80 // loop_footer_branch
                  %370 = sbr.rel target = $region83
                $region88: #{_lambda_.8} parent=80 // loop_exit
                  _
              $region81: #{_lambda_.8} parent=65 // pred_fallthru
                _
              // Predicated region
              $region89: #{_lambda_.8} parent=65 // pred_check
                _
              $region90: #{_lambda_.8} parent=65 // pred_check_branch
                %387 = sbr.rel target = $region92
              $region91: #{_lambda_.8} parent=65 // pred_region
                _
              $region92: #{_lambda_.8} parent=65 // pred_fallthru
                _
            $region66: #{_lambda_.8} parent=61 // pred_fallthru
              _
            // Predicated region
            $region67: #{_lambda_.8} parent=61 // pred_check
              _
            $region68: #{_lambda_.8} parent=61 // pred_check_branch
              %350 = sbr.rel target = $region70
            $region69: #{_lambda_.8} parent=61 // pred_region
              loop: start=0, step=1, limit=1
              $region71: #{_lambda_.8} parent=69 // loop_pre_header
                _
              $region72: #{_lambda_.8} parent=69 // loop_header
                %s353 = sphi 0, %s357
                %p354 = scmp.ge.s32.totalorder %s353, 1
                %s358 = sphi %s344, %s344
                %s359 = sphi %s337, %s337
              $region73: #{_lambda_.8} parent=69 // loop_header_branch
                %356 = sbr.rel (%p354) target = $region77
              $region74: #{_lambda_.8} parent=69 // loop_body
                %v360 = vld [vmem:[%s358] sm:$0xff]
                %361 = vst [vmem:[%s359] sm:$0xff] %v360
                %v362 = vld [vmem:[%s358 + $0x10] sm:$0xff]
                %363 = vst [vmem:[%s359 + $0x8] sm:$0xff] %v362
                %v364 = vld [vmem:[%s358 + $0x20] sm:$0xff]
                %365 = vst [vmem:[%s359 + $0x10] sm:$0xff] %v364
                %v366 = vld [vmem:[%s358 + $0x30] sm:$0xff]
                %367 = vst [vmem:[%s359 + $0x18] sm:$0xff] %v366
              $region75: #{_lambda_.8} parent=69 // loop_footer
                %s357 = sadd.s32 1, %s353
              $region76: #{_lambda_.8} parent=69 // loop_footer_branch
                %352 = sbr.rel target = $region72
              $region77: #{_lambda_.8} parent=69 // loop_exit
                _
            $region70: #{_lambda_.8} parent=61 // pred_fallthru
              _
          $region62: #{_lambda_.8} parent=57 // pred_fallthru
            _
          %388 = vnop
        $region58: #{_lambda_.8} parent=15 // pred_fallthru
          _
        // Predicated region
        $region93: #{_lambda_.8} parent=15 // pred_check
          %p389 = pneg %p112
        $region94: #{_lambda_.8} parent=15 // pred_check_branch
          %391 = sbr.rel (%p389) target = $region96
        $region95: #{_lambda_.8} parent=15 // pred_region
          %s392 = sand.u32 %s102, 1
          %s393 = sand.u32 %s102, 1
          %s394 = smul.addr %s393, 16
          %s395 = scalar_lea.vmem [#allocation9], %s394
          %s396 = smul.addr %s21, 8
          %s397 = scalar_lea.vmem %s2, %s396
          // Predicated region
          $region97: #{_lambda_.8} parent=95 // pred_check
            _
          $region98: #{_lambda_.8} parent=95 // pred_check_branch
            %399 = sbr.rel (0) target = $region100
          $region99: #{_lambda_.8} parent=95 // pred_region
            // Predicated region
            $region101: #{_lambda_.8} parent=99 // pred_check
              _
            $region102: #{_lambda_.8} parent=99 // pred_check_branch
              %401 = sbr.rel (0) target = $region104
            $region103: #{_lambda_.8} parent=99 // pred_region
              // Predicated region
              $region116: #{_lambda_.8} parent=103 // pred_check
                _
              $region117: #{_lambda_.8} parent=103 // pred_check_branch
                %418 = sbr.rel (0) target = $region119
              $region118: #{_lambda_.8} parent=103 // pred_region
                loop: start=0, step=1, limit=1
                $region120: #{_lambda_.8} parent=118 // loop_pre_header
                  _
                $region121: #{_lambda_.8} parent=118 // loop_header
                  %s420 = sphi 0, %s424
                  %p421 = scmp.ge.s32.totalorder %s420, 1
                  %s425 = sphi %s397, %s397
                  %s426 = sphi %s395, %s395
                $region122: #{_lambda_.8} parent=118 // loop_header_branch
                  %423 = sbr.rel (%p421) target = $region126
                $region123: #{_lambda_.8} parent=118 // loop_body
                  %v427 = vld [vmem:[%s425] sm:$0xff]
                  %428 = vst [vmem:[%s426] sm:$0xff] %v427
                  %v429 = vld [vmem:[%s425 + $0x10] sm:$0xff]
                  %430 = vst [vmem:[%s426 + $0x8] sm:$0xff] %v429
                $region124: #{_lambda_.8} parent=118 // loop_footer
                  %s424 = sadd.s32 1, %s420
                $region125: #{_lambda_.8} parent=118 // loop_footer_branch
                  %419 = sbr.rel target = $region121
                $region126: #{_lambda_.8} parent=118 // loop_exit
                  _
              $region119: #{_lambda_.8} parent=103 // pred_fallthru
                _
              // Predicated region
              $region127: #{_lambda_.8} parent=103 // pred_check
                _
              $region128: #{_lambda_.8} parent=103 // pred_check_branch
                %432 = sbr.rel target = $region130
              $region129: #{_lambda_.8} parent=103 // pred_region
                _
              $region130: #{_lambda_.8} parent=103 // pred_fallthru
                _
            $region104: #{_lambda_.8} parent=99 // pred_fallthru
              _
            // Predicated region
            $region105: #{_lambda_.8} parent=99 // pred_check
              _
            $region106: #{_lambda_.8} parent=99 // pred_check_branch
              %403 = sbr.rel target = $region108
            $region107: #{_lambda_.8} parent=99 // pred_region
              loop: start=0, step=1, limit=1
              $region109: #{_lambda_.8} parent=107 // loop_pre_header
                _
              $region110: #{_lambda_.8} parent=107 // loop_header
                %s406 = sphi 0, %s410
                %p407 = scmp.ge.s32.totalorder %s406, 1
                %s411 = sphi %s397, %s397
                %s412 = sphi %s395, %s395
              $region111: #{_lambda_.8} parent=107 // loop_header_branch
                %409 = sbr.rel (%p407) target = $region115
              $region112: #{_lambda_.8} parent=107 // loop_body
                %v413 = vld [vmem:[%s411] sm:$0xff]
                %414 = vst [vmem:[%s412] sm:$0xff] %v413
                %v415 = vld [vmem:[%s411 + $0x10] sm:$0xff]
                %416 = vst [vmem:[%s412 + $0x8] sm:$0xff] %v415
              $region113: #{_lambda_.8} parent=107 // loop_footer
                %s410 = sadd.s32 1, %s406
              $region114: #{_lambda_.8} parent=107 // loop_footer_branch
                %405 = sbr.rel target = $region110
              $region115: #{_lambda_.8} parent=107 // loop_exit
                _
            $region108: #{_lambda_.8} parent=99 // pred_fallthru
              _
          $region100: #{_lambda_.8} parent=95 // pred_fallthru
            _
          %433 = vnop
        $region96: #{_lambda_.8} parent=15 // pred_fallthru
          _
        // Predicated region
        $region131: #{_lambda_.8} parent=15 // pred_check
          %p434 = pneg %p140
        $region132: #{_lambda_.8} parent=15 // pred_check_branch
          %436 = sbr.rel (%p434) target = $region134
        $region133: #{_lambda_.8} parent=15 // pred_region
          %s437 = smul.u32 64, %s22
          %p438 = scmp.lt.s32.totalorder %s20, 1
          %s439 = scalar_select %p438, %s20, 1
          %p440 = scmp.lt.s32.totalorder %s437, 127
          %s441 = scalar_select %p440, %s437, 127
          %s442 = smul.addr %s439, 128
          %s443 = sadd.s32 %s441, %s442
          %s444 = smul.addr %s443, 8
          %s445 = scalar_lea.vmem %s3, %s444
          %s446 = smul.u32 64, %s22
        $region134: #{_lambda_.8} parent=15 // pred_fallthru
          _
        // Predicated region
        $region135: #{_lambda_.8} parent=15 // pred_check
          %p447 = pneg %p166
        $region136: #{_lambda_.8} parent=15 // pred_check_branch
          %449 = sbr.rel (%p447) target = $region138
        $region137: #{_lambda_.8} parent=15 // pred_region
          %p450 = scmp.lt.s32.totalorder %s21, 1
          %s451 = scalar_select %p450, %s21, 1
          %s452 = smul.addr %s451, 8
          %s453 = scalar_lea.vmem %s4, %s452
        $region138: #{_lambda_.8} parent=15 // pred_fallthru
          _
        // Predicated region
        $region139: #{_lambda_.8} parent=15 // pred_check
          %p454 = pneg %p192
        $region140: #{_lambda_.8} parent=15 // pred_check_branch
          %456 = sbr.rel (%p454) target = $region142
        $region141: #{_lambda_.8} parent=15 // pred_region
          %p457 = scmp.lt.s32.totalorder %s21, 1
          %s458 = scalar_select %p457, %s21, 1
          %s459 = smul.addr %s458, 8
          %s460 = scalar_lea.vmem %s5, %s459
        $region142: #{_lambda_.8} parent=15 // pred_fallthru
          _
        // Predicated region
        $region143: #{_lambda_.8} parent=15 // pred_check
          %p461 = pneg %p218
        $region144: #{_lambda_.8} parent=15 // pred_check_branch
          %463 = sbr.rel (%p461) target = $region146
        $region145: #{_lambda_.8} parent=15 // pred_region
          %p464 = scmp.lt.s32.totalorder %s21, 1
          %s465 = scalar_select %p464, %s21, 1
          %s466 = scalar_lea.vmem %s6, %s465
        $region146: #{_lambda_.8} parent=15 // pred_fallthru
          _
      $region16: #{_lambda_.8} parent=5 // pred_fallthru
        _
      %p467 = scmp.le.s32.totalorder 1, %s13
      %p468 = scmp.lt.s32.totalorder %s13, 9
      %p469 = pnand %p467, %p468
      %p470 = pneg %p469
      // Predicated region
      $region147: #{_lambda_.8} parent=5 // pred_check
        _
      $region148: #{_lambda_.8} parent=5 // pred_check_branch
        %472 = sbr.rel (%p469) target = $region150
      $region149: #{_lambda_.8} parent=5 // pred_region
        %s473 = ssub.s32 %s13, 1
        %s474 = sand.u32 %s49, 1
        %s475 = sand.u32 %s49, 1
        %s476 = smul.addr %s475, 32
        %s477 = scalar_lea.vmem [#allocation7], %s476
        // Predicated region
        $region151: #{_lambda_.8} parent=149 // pred_check
          %p478 = pneg %p62
        $region152: #{_lambda_.8} parent=149 // pred_check_branch
          %480 = sbr.rel (%p478) target = $region154
        $region153: #{_lambda_.8} parent=149 // pred_region
          _
        $region154: #{_lambda_.8} parent=149 // pred_fallthru
          _
        %s481 = sand.u32 %s79, 1
        %s482 = sand.u32 %s79, 1
        %s483 = smul.addr %s482, 32
        %s484 = scalar_lea.vmem [#allocation8], %s483
        // Predicated region
        $region155: #{_lambda_.8} parent=149 // pred_check
          %p485 = pneg %p92
        $region156: #{_lambda_.8} parent=149 // pred_check_branch
          %487 = sbr.rel (%p485) target = $region158
        $region157: #{_lambda_.8} parent=149 // pred_region
          _
        $region158: #{_lambda_.8} parent=149 // pred_fallthru
          _
        %s488 = sand.u32 %s105, 1
        %s489 = sand.u32 %s105, 1
        %s490 = smul.addr %s489, 16
        %s491 = scalar_lea.vmem [#allocation9], %s490
        // Predicated region
        $region159: #{_lambda_.8} parent=149 // pred_check
          %p492 = pneg %p118
        $region160: #{_lambda_.8} parent=149 // pred_check_branch
          %494 = sbr.rel (%p492) target = $region162
        $region161: #{_lambda_.8} parent=149 // pred_region
          _
        $region162: #{_lambda_.8} parent=149 // pred_fallthru
          _
        %s495 = sand.u32 %s49, 1
        %s496 = sand.u32 %s49, 1
        %s497 = smul.addr %s496, 32
        %s498 = scalar_lea.vmem [#allocation7], %s497
        %p499 = pneg %p62
        %p500 = pneg %p59
        %s501 = sand.u32 %s79, 1
        %s502 = sand.u32 %s79, 1
        %s503 = smul.addr %s502, 32
        %s504 = scalar_lea.vmem [#allocation8], %s503
        %p505 = pneg %p92
        %p506 = pneg %p89
        %s507 = sand.u32 %s105, 1
        %s508 = sand.u32 %s105, 1
        %s509 = smul.addr %s508, 16
        %s510 = scalar_lea.vmem [#allocation9], %s509
        %p511 = pneg %p118
        %p512 = pneg %p115
        %s513 = smul.u32 64, %s25
        %p514 = scmp.lt.s32.totalorder %s23, 1
        %s515 = scalar_select %p514, %s23, 1
        %p516 = scmp.lt.s32.totalorder %s513, 127
        %s517 = scalar_select %p516, %s513, 127
        %s518 = smul.addr %s515, 128
        %s519 = sadd.s32 %s517, %s518
        %s520 = smul.addr %s519, 8
        %s521 = scalar_lea.vmem %s3, %s520
        %p522 = pneg %p146
        %p523 = pneg %p143
        %p524 = scmp.lt.s32.totalorder %s24, 1
        %s525 = scalar_select %p524, %s24, 1
        %s526 = smul.addr %s525, 8
        %s527 = scalar_lea.vmem %s4, %s526
        %p528 = pneg %p172
        %p529 = pneg %p169
        %p530 = scmp.lt.s32.totalorder %s24, 1
        %s531 = scalar_select %p530, %s24, 1
        %s532 = smul.addr %s531, 8
        %s533 = scalar_lea.vmem %s5, %s532
        %p534 = pneg %p198
        %p535 = pneg %p195
        %p536 = scmp.lt.s32.totalorder %s24, 1
        %s537 = scalar_select %p536, %s24, 1
        %s538 = scalar_lea.vmem %s6, %s537
        %p539 = pneg %p224
        %p540 = pneg %p221
        %p541 = pneg %p254
        %p542 = pneg %p251
        %s543 = sand.u32 %s241, 1
        %s544 = sand.u32 %s241, 1
        %s545 = smul.addr %s544, 32
        %s546 = scalar_lea.vmem [#allocation10], %s545
        %s547 = smul.u32 4, %s25
        %s548 = smul.u32 4, %s25
        %s549 = smul.u32 64, %s25
        %p550 = scmp.lt.s32.totalorder %s23, 1
        %s551 = scalar_select %p550, %s23, 1
        %p552 = scmp.lt.s32.totalorder %s549, 127
        %s553 = scalar_select %p552, %s549, 127
        %s554 = smul.addr %s551, 128
        %s555 = sadd.s32 %s553, %s554
        %s556 = smul.addr %s555, 8
        %s557 = scalar_lea.vmem %s3, %s556
        %s558 = smul.u32 64, %s25
        %p559 = scmp.lt.s32.totalorder %s24, 1
        %s560 = scalar_select %p559, %s24, 1
        %s561 = smul.addr %s560, 8
        %s562 = scalar_lea.vmem %s4, %s561
        %p563 = scmp.lt.s32.totalorder %s24, 1
        %s564 = scalar_select %p563, %s24, 1
        %s565 = smul.addr %s564, 8
        %s566 = scalar_lea.vmem %s5, %s565
        %p567 = scmp.lt.s32.totalorder %s24, 1
        %s568 = scalar_select %p567, %s24, 1
        %s569 = scalar_lea.vmem %s6, %s568
        %s570 = smul.u32 4, %s25
        %p571 = scmp.eq.s32.totalorder %s25, 0
        // Predicated region
        $region163: #{_lambda_.8} parent=149 // pred_check
          %p572 = pneg %p571
        $region164: #{_lambda_.8} parent=149 // pred_check_branch
          %574 = sbr.rel (%p572) target = $region166
        $region165: #{_lambda_.8} parent=149 // pred_region
          %575 = vst [vmem:[#allocation2] sm:$0xff] 0.0
          %576 = vst [vmem:[#allocation2 + $0x8] sm:$0xff] 0.0
        $region166: #{_lambda_.8} parent=149 // pred_fallthru
          _
        %v577 = vld [vmem:[%s491] sm:$0xff]
        %v578 = vld [vmem:[%s491 + $0x8] sm:$0xff]
        %v579 = vld [vmem:[%s562] sm:$0xff]
        %v580 = vld [vmem:[%s566] sm:$0xff]
        %v581 = vld [vmem:[%s569] sm:$0x1]
        %v582 = vld [vmem:[%s484] sm:$0xff]
        %v583 = vld [vmem:[%s477] sm:$0xff]
        %vm584 = vcmp.gt.f32.partialorder %v582, 20.0
        %v585 = vmin.f32 %v582, 20.0
        %v586 = vmul.f32 %v585, 1.442695
        %v587 = vpow.pop %v586
        %v588 = vadd.f32 %v587, 1.0
        %v589 = vlog2.pop %v588
        %v590 = vmul.f32 %v589, 0.6931472
        %v591 = vsel %vm584, %v582, %v590
        %v592 = vmul.f32 %v591, %v583
        %593 = vst [vmem:[#allocation6] sm:$0xff] %v592
        %v594 = vld [vmem:[%s557] sm:$0xff]
        %v595 = vld [vmem:[%s557 + $0x8] sm:$0xff]
        %v596 = vld [vmem:[%s557 + $0x10] sm:$0xff]
        %v597 = vld [vmem:[%s557 + $0x18] sm:$0xff]
        %v598 = vld [vmem:[%s557 + $0x20] sm:$0xff]
        %v599 = vld [vmem:[%s557 + $0x28] sm:$0xff]
        %v600 = vld [vmem:[%s557 + $0x30] sm:$0xff]
        %v601 = vld [vmem:[%s557 + $0x38] sm:$0xff]
        %v602 = vld [vmem:[%s557 + $0x40] sm:$0xff]
        %v603 = vld [vmem:[%s557 + $0x48] sm:$0xff]
        %v604 = vld [vmem:[%s557 + $0x50] sm:$0xff]
        %v605 = vld [vmem:[%s557 + $0x58] sm:$0xff]
        %v606 = vld [vmem:[%s557 + $0x60] sm:$0xff]
        %v607 = vld [vmem:[%s557 + $0x68] sm:$0xff]
        %v608 = vld [vmem:[%s557 + $0x70] sm:$0xff]
        %v609 = vld [vmem:[%s557 + $0x78] sm:$0xff]
        %vm610 = vcmask 64512
        %v612 = vsel %vm610, %v594, 0
        %v615 = vsel %vm610, %v595, 0
        %v618 = vsel %vm610, %v596, 0
        %v621 = vsel %vm610, %v597, 0
        %v624 = vsel %vm610, %v598, 0
        %v627 = vsel %vm610, %v599, 0
        %v630 = vsel %vm610, %v600, 0
        %v633 = vsel %vm610, %v601, 0
        %v636 = vsel %vm610, %v602, 0
        %v639 = vsel %vm610, %v603, 0
        %v642 = vsel %vm610, %v604, 0
        %v645 = vsel %vm610, %v605, 0
        %v648 = vsel %vm610, %v606, 0
        %v651 = vsel %vm610, %v607, 0
        %v654 = vsel %vm610, %v608, 0
        %v657 = vsel %vm610, %v609, 0
        %659 = vmatprep.subr.mxu0 0.0
        %660 = vmatpush1.msra.mxu0 %v579
        %661 = vmatprep.subr.mxu0 0.0
        %662 = vmatpush1.msra.mxu0 0.0
        %663 = vmatprep.subr.mxu0 0.0
        %664 = vmatpush1.msra.mxu0 0.0
        %665 = vmatprep.subr.mxu0 0.0
        %666 = vmatpush1.msra.mxu0 0.0
        %667 = vmatprep.subr.mxu0 0.0
        %668 = vmatpush1.msra.mxu0 0.0
        %669 = vmatprep.subr.mxu0 0.0
        %670 = vmatpush1.msra.mxu0 0.0
        %671 = vmatprep.subr.mxu0 0.0
        %672 = vmatpush1.msra.mxu0 0.0
        %673 = vmatprep.subr.mxu0 0.0
        %674 = vmatpush1.msra.mxu0 0.0
        %675 = vmatprep.subr.mxu0 0.0
        %676 = vmatpush1.msra.mxu0 0.0
        %677 = vmatprep.subr.mxu0 0.0
        %678 = vmatpush1.msra.mxu0 0.0
        %679 = vmatprep.subr.mxu0 0.0
        %680 = vmatpush1.msra.mxu0 0.0
        %681 = vmatprep.subr.mxu0 0.0
        %682 = vmatpush1.msra.mxu0 0.0
        %683 = vmatprep.subr.mxu0 0.0
        %684 = vmatpush1.msra.mxu0 0.0
        %685 = vmatprep.subr.mxu0 0.0
        %686 = vmatpush1.msra.mxu0 0.0
        %687 = vmatprep.subr.mxu0 0.0
        %688 = vmatpush1.msra.mxu0 0.0
        %689 = vmatprep.subr.mxu0 0.0
        %690 = vmatpush1.msra.mxu0 0.0
        %691 = vmatprep.subr.mxu0 0.0
        %692 = vmatpush1.msra.mxu0 0.0
        %693 = vmatprep.subr.mxu0 0.0
        %694 = vmatpush1.msra.mxu0 0.0
        %695 = vmatprep.subr.mxu0 0.0
        %696 = vmatpush1.msra.mxu0 0.0
        %697 = vmatprep.subr.mxu0 0.0
        %698 = vmatpush1.msra.mxu0 0.0
        %699 = vmatprep.subr.mxu0 0.0
        %700 = vmatpush1.msra.mxu0 0.0
        %701 = vmatprep.subr.mxu0 0.0
        %702 = vmatpush1.msra.mxu0 0.0
        %703 = vmatprep.subr.mxu0 0.0
        %704 = vmatpush1.msra.mxu0 0.0
        %705 = vmatprep.subr.mxu0 0.0
        %706 = vmatpush1.msra.mxu0 0.0
        %707 = vmatprep.subr.mxu0 0.0
        %708 = vmatpush1.msra.mxu0 0.0
        %709 = vmatprep.subr.mxu0 0.0
        %710 = vmatpush1.msra.mxu0 0.0
        %711 = vmatprep.subr.mxu0 0.0
        %712 = vmatpush1.msra.mxu0 0.0
        %713 = vmatprep.subr.mxu0 0.0
        %714 = vmatpush1.msra.mxu0 0.0
        %715 = vmatprep.subr.mxu0 0.0
        %716 = vmatpush1.msra.mxu0 0.0
        %717 = vmatprep.subr.mxu0 0.0
        %718 = vmatpush1.msra.mxu0 0.0
        %719 = vmatprep.subr.mxu0 0.0
        %720 = vmatpush1.msra.mxu0 0.0
        %721 = vmatprep.subr.mxu0 0.0
        %722 = vmatpush1.msra.mxu0 0.0
        %723 = vmatprep.mubr.f32.mxu0 0.0
        %724 = vmatmul.mubr.f32.gmra.mrb[0].mxu0 %v612
        %v725 = vpop.f32.mrb[0].mxu0
        %v726 = vadd.f32 0.0, %v725
        %v727 = vpop.f32.mrb[0].mxu0
        %728 = vmatprep.mubr.f32.mxu0 0.0
        %729 = vmatmul.mubr.f32.gmra.mrb[0].mxu0 %v615
        %v730 = vpop.f32.mrb[0].mxu0
        %v731 = vadd.f32 0.0, %v730
        %v732 = vpop.f32.mrb[0].mxu0
        %733 = vmatprep.mubr.f32.mxu0 0.0
        %734 = vmatmul.mubr.f32.gmra.mrb[0].mxu0 %v618
        %v735 = vpop.f32.mrb[0].mxu0
        %v736 = vadd.f32 0.0, %v735
        %v737 = vpop.f32.mrb[0].mxu0
        %738 = vmatprep.mubr.f32.mxu0 0.0
        %739 = vmatmul.mubr.f32.gmra.mrb[0].mxu0 %v621
        %v740 = vpop.f32.mrb[0].mxu0
        %v741 = vadd.f32 0.0, %v740
        %v742 = vpop.f32.mrb[0].mxu0
        %743 = vmatprep.mubr.f32.mxu0 0.0
        %744 = vmatmul.mubr.f32.gmra.mrb[0].mxu0 %v624
        %v745 = vpop.f32.mrb[0].mxu0
        %v746 = vadd.f32 0.0, %v745
        %v747 = vpop.f32.mrb[0].mxu0
        %748 = vmatprep.mubr.f32.mxu0 0.0
        %749 = vmatmul.mubr.f32.gmra.mrb[0].mxu0 %v627
        %v750 = vpop.f32.mrb[0].mxu0
        %v751 = vadd.f32 0.0, %v750
        %v752 = vpop.f32.mrb[0].mxu0
        %753 = vmatprep.mubr.f32.mxu0 0.0
        %754 = vmatmul.mubr.f32.gmra.mrb[0].mxu0 %v630
        %v755 = vpop.f32.mrb[0].mxu0
        %v756 = vadd.f32 0.0, %v755
        %v757 = vpop.f32.mrb[0].mxu0
        %758 = vmatprep.mubr.f32.mxu0 0.0
        %759 = vmatmul.mubr.f32.gmra.mrb[0].mxu0 %v633
        %v760 = vpop.f32.mrb[0].mxu0
        %v761 = vadd.f32 0.0, %v760
        %v762 = vpop.f32.mrb[0].mxu0
        %763 = vmatprep.mubr.f32.mxu0 0.0
        %764 = vmatmul.mubr.f32.gmra.mrb[0].mxu0 %v636
        %v765 = vpop.f32.mrb[0].mxu0
        %v766 = vadd.f32 0.0, %v765
        %v767 = vpop.f32.mrb[0].mxu0
        %768 = vmatprep.mubr.f32.mxu0 0.0
        %769 = vmatmul.mubr.f32.gmra.mrb[0].mxu0 %v639
        %v770 = vpop.f32.mrb[0].mxu0
        %v771 = vadd.f32 0.0, %v770
        %v772 = vpop.f32.mrb[0].mxu0
        %773 = vmatprep.mubr.f32.mxu0 0.0
        %774 = vmatmul.mubr.f32.gmra.mrb[0].mxu0 %v642
        %v775 = vpop.f32.mrb[0].mxu0
        %v776 = vadd.f32 0.0, %v775
        %v777 = vpop.f32.mrb[0].mxu0
        %778 = vmatprep.mubr.f32.mxu0 0.0
        %779 = vmatmul.mubr.f32.gmra.mrb[0].mxu0 %v645
        %v780 = vpop.f32.mrb[0].mxu0
        %v781 = vadd.f32 0.0, %v780
        %v782 = vpop.f32.mrb[0].mxu0
        %783 = vmatprep.mubr.f32.mxu0 0.0
        %784 = vmatmul.mubr.f32.gmra.mrb[0].mxu0 %v648
        %v785 = vpop.f32.mrb[0].mxu0
        %v786 = vadd.f32 0.0, %v785
        %v787 = vpop.f32.mrb[0].mxu0
        %788 = vmatprep.mubr.f32.mxu0 0.0
        %789 = vmatmul.mubr.f32.gmra.mrb[0].mxu0 %v651
        %v790 = vpop.f32.mrb[0].mxu0
        %v791 = vadd.f32 0.0, %v790
        %v792 = vpop.f32.mrb[0].mxu0
        %793 = vmatprep.mubr.f32.mxu0 0.0
        %794 = vmatmul.mubr.f32.gmra.mrb[0].mxu0 %v654
        %v795 = vpop.f32.mrb[0].mxu0
        %v796 = vadd.f32 0.0, %v795
        %v797 = vpop.f32.mrb[0].mxu0
        %798 = vmatprep.mubr.f32.mxu0 0.0
        %799 = vmatmul.mubr.f32.gmra.mrb[0].mxu0 %v657
        %v800 = vpop.f32.mrb[0].mxu0
        %v801 = vadd.f32 0.0, %v800
        %v802 = vpop.f32.mrb[0].mxu0
        %803 = vdwg.mxu0
        %804 = vst [vmem:[#allocation4] sm:$0xff] %v726
        %805 = vst [vmem:[#allocation4 + $0x8] sm:$0xff] %v731
        %806 = vst [vmem:[#allocation4 + $0x10] sm:$0xff] %v736
        %807 = vst [vmem:[#allocation4 + $0x18] sm:$0xff] %v741
        %808 = vst [vmem:[#allocation4 + $0x20] sm:$0xff] %v746
        %809 = vst [vmem:[#allocation4 + $0x28] sm:$0xff] %v751
        %810 = vst [vmem:[#allocation4 + $0x30] sm:$0xff] %v756
        %811 = vst [vmem:[#allocation4 + $0x38] sm:$0xff] %v761
        %812 = vst [vmem:[#allocation4 + $0x40] sm:$0xff] %v766
        %813 = vst [vmem:[#allocation4 + $0x48] sm:$0xff] %v771
        %814 = vst [vmem:[#allocation4 + $0x50] sm:$0xff] %v776
        %815 = vst [vmem:[#allocation4 + $0x58] sm:$0xff] %v781
        %816 = vst [vmem:[#allocation4 + $0x60] sm:$0xff] %v786
        %817 = vst [vmem:[#allocation4 + $0x68] sm:$0xff] %v791
        %818 = vst [vmem:[#allocation4 + $0x70] sm:$0xff] %v796
        %819 = vst [vmem:[#allocation4 + $0x78] sm:$0xff] %v801
        %820 = vmatprep.subr.mxu0 0.0
        %821 = vmatpush1.msra.mxu0 %v580
        %822 = vmatprep.subr.mxu0 0.0
        %823 = vmatpush1.msra.mxu0 0.0
        %824 = vmatprep.subr.mxu0 0.0
        %825 = vmatpush1.msra.mxu0 0.0
        %826 = vmatprep.subr.mxu0 0.0
        %827 = vmatpush1.msra.mxu0 0.0
        %828 = vmatprep.subr.mxu0 0.0
        %829 = vmatpush1.msra.mxu0 0.0
        %830 = vmatprep.subr.mxu0 0.0
        %831 = vmatpush1.msra.mxu0 0.0
        %832 = vmatprep.subr.mxu0 0.0
        %833 = vmatpush1.msra.mxu0 0.0
        %834 = vmatprep.subr.mxu0 0.0
        %835 = vmatpush1.msra.mxu0 0.0
        %836 = vmatprep.subr.mxu0 0.0
        %837 = vmatpush1.msra.mxu0 0.0
        %838 = vmatprep.subr.mxu0 0.0
        %839 = vmatpush1.msra.mxu0 0.0
        %840 = vmatprep.subr.mxu0 0.0
        %841 = vmatpush1.msra.mxu0 0.0
        %842 = vmatprep.subr.mxu0 0.0
        %843 = vmatpush1.msra.mxu0 0.0
        %844 = vmatprep.subr.mxu0 0.0
        %845 = vmatpush1.msra.mxu0 0.0
        %846 = vmatprep.subr.mxu0 0.0
        %847 = vmatpush1.msra.mxu0 0.0
        %848 = vmatprep.subr.mxu0 0.0
        %849 = vmatpush1.msra.mxu0 0.0
        %850 = vmatprep.subr.mxu0 0.0
        %851 = vmatpush1.msra.mxu0 0.0
        %852 = vmatprep.subr.mxu0 0.0
        %853 = vmatpush1.msra.mxu0 0.0
        %854 = vmatprep.subr.mxu0 0.0
        %855 = vmatpush1.msra.mxu0 0.0
        %856 = vmatprep.subr.mxu0 0.0
        %857 = vmatpush1.msra.mxu0 0.0
        %858 = vmatprep.subr.mxu0 0.0
        %859 = vmatpush1.msra.mxu0 0.0
        %860 = vmatprep.subr.mxu0 0.0
        %861 = vmatpush1.msra.mxu0 0.0
        %862 = vmatprep.subr.mxu0 0.0
        %863 = vmatpush1.msra.mxu0 0.0
        %864 = vmatprep.subr.mxu0 0.0
        %865 = vmatpush1.msra.mxu0 0.0
        %866 = vmatprep.subr.mxu0 0.0
        %867 = vmatpush1.msra.mxu0 0.0
        %868 = vmatprep.subr.mxu0 0.0
        %869 = vmatpush1.msra.mxu0 0.0
        %870 = vmatprep.subr.mxu0 0.0
        %871 = vmatpush1.msra.mxu0 0.0
        %872 = vmatprep.subr.mxu0 0.0
        %873 = vmatpush1.msra.mxu0 0.0
        %874 = vmatprep.subr.mxu0 0.0
        %875 = vmatpush1.msra.mxu0 0.0
        %876 = vmatprep.subr.mxu0 0.0
        %877 = vmatpush1.msra.mxu0 0.0
        %878 = vmatprep.subr.mxu0 0.0
        %879 = vmatpush1.msra.mxu0 0.0
        %880 = vmatprep.subr.mxu0 0.0
        %881 = vmatpush1.msra.mxu0 0.0
        %882 = vmatprep.subr.mxu0 0.0
        %883 = vmatpush1.msra.mxu0 0.0
        %884 = vmatprep.mubr.f32.mxu0 0.0
        %885 = vmatmul.mubr.f32.gmra.mrb[0].mxu0 %v612
        %v886 = vpop.f32.mrb[0].mxu0
        %v887 = vadd.f32 0.0, %v886
        %v888 = vpop.f32.mrb[0].mxu0
        %889 = vmatprep.mubr.f32.mxu0 0.0
        %890 = vmatmul.mubr.f32.gmra.mrb[0].mxu0 %v615
        %v891 = vpop.f32.mrb[0].mxu0
        %v892 = vadd.f32 0.0, %v891
        %v893 = vpop.f32.mrb[0].mxu0
        %894 = vmatprep.mubr.f32.mxu0 0.0
        %895 = vmatmul.mubr.f32.gmra.mrb[0].mxu0 %v618
        %v896 = vpop.f32.mrb[0].mxu0
        %v897 = vadd.f32 0.0, %v896
        %v898 = vpop.f32.mrb[0].mxu0
        %899 = vmatprep.mubr.f32.mxu0 0.0
        %900 = vmatmul.mubr.f32.gmra.mrb[0].mxu0 %v621
        %v901 = vpop.f32.mrb[0].mxu0
        %v902 = vadd.f32 0.0, %v901
        %v903 = vpop.f32.mrb[0].mxu0
        %904 = vmatprep.mubr.f32.mxu0 0.0
        %905 = vmatmul.mubr.f32.gmra.mrb[0].mxu0 %v624
        %v906 = vpop.f32.mrb[0].mxu0
        %v907 = vadd.f32 0.0, %v906
        %v908 = vpop.f32.mrb[0].mxu0
        %909 = vmatprep.mubr.f32.mxu0 0.0
        %910 = vmatmul.mubr.f32.gmra.mrb[0].mxu0 %v627
        %v911 = vpop.f32.mrb[0].mxu0
        %v912 = vadd.f32 0.0, %v911
        %v913 = vpop.f32.mrb[0].mxu0
        %914 = vmatprep.mubr.f32.mxu0 0.0
        %915 = vmatmul.mubr.f32.gmra.mrb[0].mxu0 %v630
        %v916 = vpop.f32.mrb[0].mxu0
        %v917 = vadd.f32 0.0, %v916
        %v918 = vpop.f32.mrb[0].mxu0
        %919 = vmatprep.mubr.f32.mxu0 0.0
        %920 = vmatmul.mubr.f32.gmra.mrb[0].mxu0 %v633
        %v921 = vpop.f32.mrb[0].mxu0
        %v922 = vadd.f32 0.0, %v921
        %v923 = vpop.f32.mrb[0].mxu0
        %924 = vmatprep.mubr.f32.mxu0 0.0
        %925 = vmatmul.mubr.f32.gmra.mrb[0].mxu0 %v636
        %v926 = vpop.f32.mrb[0].mxu0
        %v927 = vadd.f32 0.0, %v926
        %v928 = vpop.f32.mrb[0].mxu0
        %929 = vmatprep.mubr.f32.mxu0 0.0
        %930 = vmatmul.mubr.f32.gmra.mrb[0].mxu0 %v639
        %v931 = vpop.f32.mrb[0].mxu0
        %v932 = vadd.f32 0.0, %v931
        %v933 = vpop.f32.mrb[0].mxu0
        %934 = vmatprep.mubr.f32.mxu0 0.0
        %935 = vmatmul.mubr.f32.gmra.mrb[0].mxu0 %v642
        %v936 = vpop.f32.mrb[0].mxu0
        %v937 = vadd.f32 0.0, %v936
        %v938 = vpop.f32.mrb[0].mxu0
        %939 = vmatprep.mubr.f32.mxu0 0.0
        %940 = vmatmul.mubr.f32.gmra.mrb[0].mxu0 %v645
        %v941 = vpop.f32.mrb[0].mxu0
        %v942 = vadd.f32 0.0, %v941
        %v943 = vpop.f32.mrb[0].mxu0
        %944 = vmatprep.mubr.f32.mxu0 0.0
        %945 = vmatmul.mubr.f32.gmra.mrb[0].mxu0 %v648
        %v946 = vpop.f32.mrb[0].mxu0
        %v947 = vadd.f32 0.0, %v946
        %v948 = vpop.f32.mrb[0].mxu0
        %949 = vmatprep.mubr.f32.mxu0 0.0
        %950 = vmatmul.mubr.f32.gmra.mrb[0].mxu0 %v651
        %v951 = vpop.f32.mrb[0].mxu0
        %v952 = vadd.f32 0.0, %v951
        %v953 = vpop.f32.mrb[0].mxu0
        %954 = vmatprep.mubr.f32.mxu0 0.0
        %955 = vmatmul.mubr.f32.gmra.mrb[0].mxu0 %v654
        %v956 = vpop.f32.mrb[0].mxu0
        %v957 = vadd.f32 0.0, %v956
        %v958 = vpop.f32.mrb[0].mxu0
        %959 = vmatprep.mubr.f32.mxu0 0.0
        %960 = vmatmul.mubr.f32.gmra.mrb[0].mxu0 %v657
        %v961 = vpop.f32.mrb[0].mxu0
        %v962 = vadd.f32 0.0, %v961
        %v963 = vpop.f32.mrb[0].mxu0
        %964 = vdwg.mxu0
        %965 = vst [vmem:[#allocation5] sm:$0xff] %v887
        %966 = vst [vmem:[#allocation5 + $0x8] sm:$0xff] %v892
        %967 = vst [vmem:[#allocation5 + $0x10] sm:$0xff] %v897
        %968 = vst [vmem:[#allocation5 + $0x18] sm:$0xff] %v902
        %969 = vst [vmem:[#allocation5 + $0x20] sm:$0xff] %v907
        %970 = vst [vmem:[#allocation5 + $0x28] sm:$0xff] %v912
        %971 = vst [vmem:[#allocation5 + $0x30] sm:$0xff] %v917
        %972 = vst [vmem:[#allocation5 + $0x38] sm:$0xff] %v922
        %973 = vst [vmem:[#allocation5 + $0x40] sm:$0xff] %v927
        %974 = vst [vmem:[#allocation5 + $0x48] sm:$0xff] %v932
        %975 = vst [vmem:[#allocation5 + $0x50] sm:$0xff] %v937
        %976 = vst [vmem:[#allocation5 + $0x58] sm:$0xff] %v942
        %977 = vst [vmem:[#allocation5 + $0x60] sm:$0xff] %v947
        %978 = vst [vmem:[#allocation5 + $0x68] sm:$0xff] %v952
        %979 = vst [vmem:[#allocation5 + $0x70] sm:$0xff] %v957
        %980 = vst [vmem:[#allocation5 + $0x78] sm:$0xff] %v962
        %v981 = vlaneseq
        %v982 = vshrl.u32 %v981, 7
        %v983 = vsub.s32 0, %v982
        %v984 = vrot.slane %v591, %v983
        %v985 = vmul.f32 %v984, %v577
        %v986 = vmul.f32 %v984, %v578
        %v987 = vmul.f32 %v985, 1.442695
        %v988 = vpow.pop %v987
        %v989 = vmul.f32 %v986, 1.442695
        %v990 = vpow.pop %v989
        %991 = vst [vmem:[#allocation3] sm:$0xff] %v988
        %992 = vst [vmem:[#allocation3 + $0x8] sm:$0xff] %v990
        %v993 = vlaneseq
        %v994 = vshrl.u32 %v993, 7
        %v995 = vsub.s32 1, %v994
        %v996 = vrot.slane %v591, %v995
        %v997 = vmul.f32 %v996, %v577
        %v998 = vmul.f32 %v996, %v578
        %v999 = vmul.f32 %v997, 1.442695
        %v1000 = vpow.pop %v999
        %v1001 = vmul.f32 %v998, 1.442695
        %v1002 = vpow.pop %v1001
        %1003 = vst [vmem:[#allocation3 + $0x10] sm:$0xff] %v1000
        %1004 = vst [vmem:[#allocation3 + $0x18] sm:$0xff] %v1002
        %v1005 = vlaneseq
        %v1006 = vshrl.u32 %v1005, 7
        %v1007 = vsub.s32 2, %v1006
        %v1008 = vrot.slane %v591, %v1007
        %v1009 = vmul.f32 %v1008, %v577
        %v1010 = vmul.f32 %v1008, %v578
        %v1011 = vmul.f32 %v1009, 1.442695
        %v1012 = vpow.pop %v1011
        %v1013 = vmul.f32 %v1010, 1.442695
        %v1014 = vpow.pop %v1013
        %1015 = vst [vmem:[#allocation3 + $0x20] sm:$0xff] %v1012
        %1016 = vst [vmem:[#allocation3 + $0x28] sm:$0xff] %v1014
        %v1017 = vlaneseq
        %v1018 = vshrl.u32 %v1017, 7
        %v1019 = vsub.s32 3, %v1018
        %v1020 = vrot.slane %v591, %v1019
        %v1021 = vmul.f32 %v1020, %v577
        %v1022 = vmul.f32 %v1020, %v578
        %v1023 = vmul.f32 %v1021, 1.442695
        %v1024 = vpow.pop %v1023
        %v1025 = vmul.f32 %v1022, 1.442695
        %v1026 = vpow.pop %v1025
        %1027 = vst [vmem:[#allocation3 + $0x30] sm:$0xff] %v1024
        %1028 = vst [vmem:[#allocation3 + $0x38] sm:$0xff] %v1026
        %v1029 = vlaneseq
        %v1030 = vshrl.u32 %v1029, 7
        %v1031 = vsub.s32 4, %v1030
        %v1032 = vrot.slane %v591, %v1031
        %v1033 = vmul.f32 %v1032, %v577
        %v1034 = vmul.f32 %v1032, %v578
        %v1035 = vmul.f32 %v1033, 1.442695
        %v1036 = vpow.pop %v1035
        %v1037 = vmul.f32 %v1034, 1.442695
        %v1038 = vpow.pop %v1037
        %1039 = vst [vmem:[#allocation3 + $0x40] sm:$0xff] %v1036
        %1040 = vst [vmem:[#allocation3 + $0x48] sm:$0xff] %v1038
        %v1041 = vlaneseq
        %v1042 = vshrl.u32 %v1041, 7
        %v1043 = vsub.s32 5, %v1042
        %v1044 = vrot.slane %v591, %v1043
        %v1045 = vmul.f32 %v1044, %v577
        %v1046 = vmul.f32 %v1044, %v578
        %v1047 = vmul.f32 %v1045, 1.442695
        %v1048 = vpow.pop %v1047
        %v1049 = vmul.f32 %v1046, 1.442695
        %v1050 = vpow.pop %v1049
        %1051 = vst [vmem:[#allocation3 + $0x50] sm:$0xff] %v1048
        %1052 = vst [vmem:[#allocation3 + $0x58] sm:$0xff] %v1050
        %v1053 = vlaneseq
        %v1054 = vshrl.u32 %v1053, 7
        %v1055 = vsub.s32 6, %v1054
        %v1056 = vrot.slane %v591, %v1055
        %v1057 = vmul.f32 %v1056, %v577
        %v1058 = vmul.f32 %v1056, %v578
        %v1059 = vmul.f32 %v1057, 1.442695
        %v1060 = vpow.pop %v1059
        %v1061 = vmul.f32 %v1058, 1.442695
        %v1062 = vpow.pop %v1061
        %1063 = vst [vmem:[#allocation3 + $0x60] sm:$0xff] %v1060
        %1064 = vst [vmem:[#allocation3 + $0x68] sm:$0xff] %v1062
        %v1065 = vlaneseq
        %v1066 = vshrl.u32 %v1065, 7
        %v1067 = vsub.s32 7, %v1066
        %v1068 = vrot.slane %v591, %v1067
        %v1069 = vmul.f32 %v1068, %v577
        %v1070 = vmul.f32 %v1068, %v578
        %v1071 = vmul.f32 %v1069, 1.442695
        %v1072 = vpow.pop %v1071
        %v1073 = vmul.f32 %v1070, 1.442695
        %v1074 = vpow.pop %v1073
        %1075 = vst [vmem:[#allocation3 + $0x70] sm:$0xff] %v1072
        %1076 = vst [vmem:[#allocation3 + $0x78] sm:$0xff] %v1074
        %v1077 = vld [vmem:[#allocation2] sm:$0xff]
        %v1078 = vld [vmem:[#allocation2 + $0x8] sm:$0xff]
        loop: start=0, step=1, limit=4
        $region167: #{_lambda_.8} parent=149 // loop_pre_header
          _
        $region168: #{_lambda_.8} parent=149 // loop_header
          %s1080 = sphi 0, %s1084
          %p1081 = scmp.ge.s32.totalorder %s1080, 4
          %v1085 = vphi %v1077, %v1840
          %v1086 = vphi %v1078, %v1841
        $region169: #{_lambda_.8} parent=149 // loop_header_branch
          %1083 = sbr.rel (%p1081) target = $region173
        $region170: #{_lambda_.8} parent=149 // loop_body
          %p1087 = scmp.lt.s32.totalorder %s1080, 0
          %s1088 = ssub.s32 0, %s1080
          %s1089 = scalar_select %p1087, %s1088, %s1080
          %s1090 = sand.u32 %s1089, 1
          %s1091 = ssub.s32 0, %s1090
          %s1092 = scalar_select %p1087, %s1091, %s1090
          %s1093 = sadd.s32 %s1080, 1
          %p1094 = scmp.lt.s32.totalorder %s1093, 3
          %s1095 = scalar_select %p1094, %s1093, 3
          %s1096 = ssub.s32 1, %s1092
          %s1097 = smul.u32 %s1095, 8
          %s1098 = smul.u32 %s1096, 128
          %s1099 = scalar_lea.vmem %s484, %s1097 [#allocation8]
          %v1100 = vld [vmem:[%s1099] sm:$0xff]
          %s1101 = scalar_lea.vmem %s477, %s1097 [#allocation7]
          %v1102 = vld [vmem:[%s1101] sm:$0xff]
          %vm1103 = vcmp.gt.f32.partialorder %v1100, 20.0
          %v1104 = vmin.f32 %v1100, 20.0
          %v1105 = vmul.f32 %v1104, 1.442695
          %v1106 = vpow.pop %v1105
          %v1107 = vadd.f32 %v1106, 1.0
          %v1108 = vlog2.pop %v1107
          %v1109 = vmul.f32 %v1108, 0.6931472
          %v1110 = vsel %vm1103, %v1100, %v1109
          %v1111 = vmul.f32 %v1110, %v1102
          %s1112 = smul.u32 %s1096, 8
          %s1113 = scalar_lea.vmem [#allocation6], %s1112
          %1114 = vst [vmem:[%s1113] sm:$0xff] %v1111
          %s1115 = smul.u32 %s1097, 16
          %s1116 = scalar_lea.vmem %s557, %s1115
          %v1117 = vld [vmem:[%s1116] sm:$0xff]
          %v1118 = vld [vmem:[%s1116 + $0x8] sm:$0xff]
          %v1119 = vld [vmem:[%s1116 + $0x10] sm:$0xff]
          %v1120 = vld [vmem:[%s1116 + $0x18] sm:$0xff]
          %v1121 = vld [vmem:[%s1116 + $0x20] sm:$0xff]
          %v1122 = vld [vmem:[%s1116 + $0x28] sm:$0xff]
          %v1123 = vld [vmem:[%s1116 + $0x30] sm:$0xff]
          %v1124 = vld [vmem:[%s1116 + $0x38] sm:$0xff]
          %v1125 = vld [vmem:[%s1116 + $0x40] sm:$0xff]
          %v1126 = vld [vmem:[%s1116 + $0x48] sm:$0xff]
          %v1127 = vld [vmem:[%s1116 + $0x50] sm:$0xff]
          %v1128 = vld [vmem:[%s1116 + $0x58] sm:$0xff]
          %v1129 = vld [vmem:[%s1116 + $0x60] sm:$0xff]
          %v1130 = vld [vmem:[%s1116 + $0x68] sm:$0xff]
          %v1131 = vld [vmem:[%s1116 + $0x70] sm:$0xff]
          %v1132 = vld [vmem:[%s1116 + $0x78] sm:$0xff]
          %v1134 = vsel %vm610, %v1117, 0
          %v1137 = vsel %vm610, %v1118, 0
          %v1140 = vsel %vm610, %v1119, 0
          %v1143 = vsel %vm610, %v1120, 0
          %v1146 = vsel %vm610, %v1121, 0
          %v1149 = vsel %vm610, %v1122, 0
          %v1152 = vsel %vm610, %v1123, 0
          %v1155 = vsel %vm610, %v1124, 0
          %v1158 = vsel %vm610, %v1125, 0
          %v1161 = vsel %vm610, %v1126, 0
          %v1164 = vsel %vm610, %v1127, 0
          %v1167 = vsel %vm610, %v1128, 0
          %v1170 = vsel %vm610, %v1129, 0
          %v1173 = vsel %vm610, %v1130, 0
          %v1176 = vsel %vm610, %v1131, 0
          %v1179 = vsel %vm610, %v1132, 0
          %1181 = vmatprep.subr.mxu0 0.0
          %1182 = vmatpush1.msra.mxu0 %v579
          %1183 = vmatprep.subr.mxu0 0.0
          %1184 = vmatpush1.msra.mxu0 0.0
          %1185 = vmatprep.subr.mxu0 0.0
          %1186 = vmatpush1.msra.mxu0 0.0
          %1187 = vmatprep.subr.mxu0 0.0
          %1188 = vmatpush1.msra.mxu0 0.0
          %1189 = vmatprep.subr.mxu0 0.0
          %1190 = vmatpush1.msra.mxu0 0.0
          %1191 = vmatprep.subr.mxu0 0.0
          %1192 = vmatpush1.msra.mxu0 0.0
          %1193 = vmatprep.subr.mxu0 0.0
          %1194 = vmatpush1.msra.mxu0 0.0
          %1195 = vmatprep.subr.mxu0 0.0
          %1196 = vmatpush1.msra.mxu0 0.0
          %1197 = vmatprep.subr.mxu0 0.0
          %1198 = vmatpush1.msra.mxu0 0.0
          %1199 = vmatprep.subr.mxu0 0.0
          %1200 = vmatpush1.msra.mxu0 0.0
          %1201 = vmatprep.subr.mxu0 0.0
          %1202 = vmatpush1.msra.mxu0 0.0
          %1203 = vmatprep.subr.mxu0 0.0
          %1204 = vmatpush1.msra.mxu0 0.0
          %1205 = vmatprep.subr.mxu0 0.0
          %1206 = vmatpush1.msra.mxu0 0.0
          %1207 = vmatprep.subr.mxu0 0.0
          %1208 = vmatpush1.msra.mxu0 0.0
          %1209 = vmatprep.subr.mxu0 0.0
          %1210 = vmatpush1.msra.mxu0 0.0
          %1211 = vmatprep.subr.mxu0 0.0
          %1212 = vmatpush1.msra.mxu0 0.0
          %1213 = vmatprep.subr.mxu0 0.0
          %1214 = vmatpush1.msra.mxu0 0.0
          %1215 = vmatprep.subr.mxu0 0.0
          %1216 = vmatpush1.msra.mxu0 0.0
          %1217 = vmatprep.subr.mxu0 0.0
          %1218 = vmatpush1.msra.mxu0 0.0
          %1219 = vmatprep.subr.mxu0 0.0
          %1220 = vmatpush1.msra.mxu0 0.0
          %1221 = vmatprep.subr.mxu0 0.0
          %1222 = vmatpush1.msra.mxu0 0.0
          %1223 = vmatprep.subr.mxu0 0.0
          %1224 = vmatpush1.msra.mxu0 0.0
          %1225 = vmatprep.subr.mxu0 0.0
          %1226 = vmatpush1.msra.mxu0 0.0
          %1227 = vmatprep.subr.mxu0 0.0
          %1228 = vmatpush1.msra.mxu0 0.0
          %1229 = vmatprep.subr.mxu0 0.0
          %1230 = vmatpush1.msra.mxu0 0.0
          %1231 = vmatprep.subr.mxu0 0.0
          %1232 = vmatpush1.msra.mxu0 0.0
          %1233 = vmatprep.subr.mxu0 0.0
          %1234 = vmatpush1.msra.mxu0 0.0
          %1235 = vmatprep.subr.mxu0 0.0
          %1236 = vmatpush1.msra.mxu0 0.0
          %1237 = vmatprep.subr.mxu0 0.0
          %1238 = vmatpush1.msra.mxu0 0.0
          %1239 = vmatprep.subr.mxu0 0.0
          %1240 = vmatpush1.msra.mxu0 0.0
          %1241 = vmatprep.subr.mxu0 0.0
          %1242 = vmatpush1.msra.mxu0 0.0
          %1243 = vmatprep.subr.mxu0 0.0
          %1244 = vmatpush1.msra.mxu0 0.0
          %1245 = vmatprep.mubr.f32.mxu0 0.0
          %1246 = vmatmul.mubr.f32.gmra.mrb[0].mxu0 %v1134
          %v1247 = vpop.f32.mrb[0].mxu0
          %v1248 = vadd.f32 0.0, %v1247
          %v1249 = vpop.f32.mrb[0].mxu0
          %1250 = vmatprep.mubr.f32.mxu0 0.0
          %1251 = vmatmul.mubr.f32.gmra.mrb[0].mxu0 %v1137
          %v1252 = vpop.f32.mrb[0].mxu0
          %v1253 = vadd.f32 0.0, %v1252
          %v1254 = vpop.f32.mrb[0].mxu0
          %1255 = vmatprep.mubr.f32.mxu0 0.0
          %1256 = vmatmul.mubr.f32.gmra.mrb[0].mxu0 %v1140
          %v1257 = vpop.f32.mrb[0].mxu0
          %v1258 = vadd.f32 0.0, %v1257
          %v1259 = vpop.f32.mrb[0].mxu0
          %1260 = vmatprep.mubr.f32.mxu0 0.0
          %1261 = vmatmul.mubr.f32.gmra.mrb[0].mxu0 %v1143
          %v1262 = vpop.f32.mrb[0].mxu0
          %v1263 = vadd.f32 0.0, %v1262
          %v1264 = vpop.f32.mrb[0].mxu0
          %1265 = vmatprep.mubr.f32.mxu0 0.0
          %1266 = vmatmul.mubr.f32.gmra.mrb[0].mxu0 %v1146
          %v1267 = vpop.f32.mrb[0].mxu0
          %v1268 = vadd.f32 0.0, %v1267
          %v1269 = vpop.f32.mrb[0].mxu0
          %1270 = vmatprep.mubr.f32.mxu0 0.0
          %1271 = vmatmul.mubr.f32.gmra.mrb[0].mxu0 %v1149
          %v1272 = vpop.f32.mrb[0].mxu0
          %v1273 = vadd.f32 0.0, %v1272
          %v1274 = vpop.f32.mrb[0].mxu0
          %1275 = vmatprep.mubr.f32.mxu0 0.0
          %1276 = vmatmul.mubr.f32.gmra.mrb[0].mxu0 %v1152
          %v1277 = vpop.f32.mrb[0].mxu0
          %v1278 = vadd.f32 0.0, %v1277
          %v1279 = vpop.f32.mrb[0].mxu0
          %1280 = vmatprep.mubr.f32.mxu0 0.0
          %1281 = vmatmul.mubr.f32.gmra.mrb[0].mxu0 %v1155
          %v1282 = vpop.f32.mrb[0].mxu0
          %v1283 = vadd.f32 0.0, %v1282
          %v1284 = vpop.f32.mrb[0].mxu0
          %1285 = vmatprep.mubr.f32.mxu0 0.0
          %1286 = vmatmul.mubr.f32.gmra.mrb[0].mxu0 %v1158
          %v1287 = vpop.f32.mrb[0].mxu0
          %v1288 = vadd.f32 0.0, %v1287
          %v1289 = vpop.f32.mrb[0].mxu0
          %1290 = vmatprep.mubr.f32.mxu0 0.0
          %1291 = vmatmul.mubr.f32.gmra.mrb[0].mxu0 %v1161
          %v1292 = vpop.f32.mrb[0].mxu0
          %v1293 = vadd.f32 0.0, %v1292
          %v1294 = vpop.f32.mrb[0].mxu0
          %1295 = vmatprep.mubr.f32.mxu0 0.0
          %1296 = vmatmul.mubr.f32.gmra.mrb[0].mxu0 %v1164
          %v1297 = vpop.f32.mrb[0].mxu0
          %v1298 = vadd.f32 0.0, %v1297
          %v1299 = vpop.f32.mrb[0].mxu0
          %1300 = vmatprep.mubr.f32.mxu0 0.0
          %1301 = vmatmul.mubr.f32.gmra.mrb[0].mxu0 %v1167
          %v1302 = vpop.f32.mrb[0].mxu0
          %v1303 = vadd.f32 0.0, %v1302
          %v1304 = vpop.f32.mrb[0].mxu0
          %1305 = vmatprep.mubr.f32.mxu0 0.0
          %1306 = vmatmul.mubr.f32.gmra.mrb[0].mxu0 %v1170
          %v1307 = vpop.f32.mrb[0].mxu0
          %v1308 = vadd.f32 0.0, %v1307
          %v1309 = vpop.f32.mrb[0].mxu0
          %1310 = vmatprep.mubr.f32.mxu0 0.0
          %1311 = vmatmul.mubr.f32.gmra.mrb[0].mxu0 %v1173
          %v1312 = vpop.f32.mrb[0].mxu0
          %v1313 = vadd.f32 0.0, %v1312
          %v1314 = vpop.f32.mrb[0].mxu0
          %1315 = vmatprep.mubr.f32.mxu0 0.0
          %1316 = vmatmul.mubr.f32.gmra.mrb[0].mxu0 %v1176
          %v1317 = vpop.f32.mrb[0].mxu0
          %v1318 = vadd.f32 0.0, %v1317
          %v1319 = vpop.f32.mrb[0].mxu0
          %1320 = vmatprep.mubr.f32.mxu0 0.0
          %1321 = vmatmul.mubr.f32.gmra.mrb[0].mxu0 %v1179
          %v1322 = vpop.f32.mrb[0].mxu0
          %v1323 = vadd.f32 0.0, %v1322
          %v1324 = vpop.f32.mrb[0].mxu0
          %1325 = vdwg.mxu0
          %s1326 = scalar_lea.vmem [#allocation4], %s1098
          %1327 = vst [vmem:[%s1326] sm:$0xff] %v1248
          %1328 = vst [vmem:[%s1326 + $0x8] sm:$0xff] %v1253
          %1329 = vst [vmem:[%s1326 + $0x10] sm:$0xff] %v1258
          %1330 = vst [vmem:[%s1326 + $0x18] sm:$0xff] %v1263
          %1331 = vst [vmem:[%s1326 + $0x20] sm:$0xff] %v1268
          %1332 = vst [vmem:[%s1326 + $0x28] sm:$0xff] %v1273
          %1333 = vst [vmem:[%s1326 + $0x30] sm:$0xff] %v1278
          %1334 = vst [vmem:[%s1326 + $0x38] sm:$0xff] %v1283
          %1335 = vst [vmem:[%s1326 + $0x40] sm:$0xff] %v1288
          %1336 = vst [vmem:[%s1326 + $0x48] sm:$0xff] %v1293
          %1337 = vst [vmem:[%s1326 + $0x50] sm:$0xff] %v1298
          %1338 = vst [vmem:[%s1326 + $0x58] sm:$0xff] %v1303
          %1339 = vst [vmem:[%s1326 + $0x60] sm:$0xff] %v1308
          %1340 = vst [vmem:[%s1326 + $0x68] sm:$0xff] %v1313
          %1341 = vst [vmem:[%s1326 + $0x70] sm:$0xff] %v1318
          %1342 = vst [vmem:[%s1326 + $0x78] sm:$0xff] %v1323
          %1343 = vmatprep.subr.mxu0 0.0
          %1344 = vmatpush1.msra.mxu0 %v580
          %1345 = vmatprep.subr.mxu0 0.0
          %1346 = vmatpush1.msra.mxu0 0.0
          %1347 = vmatprep.subr.mxu0 0.0
          %1348 = vmatpush1.msra.mxu0 0.0
          %1349 = vmatprep.subr.mxu0 0.0
          %1350 = vmatpush1.msra.mxu0 0.0
          %1351 = vmatprep.subr.mxu0 0.0
          %1352 = vmatpush1.msra.mxu0 0.0
          %1353 = vmatprep.subr.mxu0 0.0
          %1354 = vmatpush1.msra.mxu0 0.0
          %1355 = vmatprep.subr.mxu0 0.0
          %1356 = vmatpush1.msra.mxu0 0.0
          %1357 = vmatprep.subr.mxu0 0.0
          %1358 = vmatpush1.msra.mxu0 0.0
          %1359 = vmatprep.subr.mxu0 0.0
          %1360 = vmatpush1.msra.mxu0 0.0
          %1361 = vmatprep.subr.mxu0 0.0
          %1362 = vmatpush1.msra.mxu0 0.0
          %1363 = vmatprep.subr.mxu0 0.0
          %1364 = vmatpush1.msra.mxu0 0.0
          %1365 = vmatprep.subr.mxu0 0.0
          %1366 = vmatpush1.msra.mxu0 0.0
          %1367 = vmatprep.subr.mxu0 0.0
          %1368 = vmatpush1.msra.mxu0 0.0
          %1369 = vmatprep.subr.mxu0 0.0
          %1370 = vmatpush1.msra.mxu0 0.0
          %1371 = vmatprep.subr.mxu0 0.0
          %1372 = vmatpush1.msra.mxu0 0.0
          %1373 = vmatprep.subr.mxu0 0.0
          %1374 = vmatpush1.msra.mxu0 0.0
          %1375 = vmatprep.subr.mxu0 0.0
          %1376 = vmatpush1.msra.mxu0 0.0
          %1377 = vmatprep.subr.mxu0 0.0
          %1378 = vmatpush1.msra.mxu0 0.0
          %1379 = vmatprep.subr.mxu0 0.0
          %1380 = vmatpush1.msra.mxu0 0.0
          %1381 = vmatprep.subr.mxu0 0.0
          %1382 = vmatpush1.msra.mxu0 0.0
          %1383 = vmatprep.subr.mxu0 0.0
          %1384 = vmatpush1.msra.mxu0 0.0
          %1385 = vmatprep.subr.mxu0 0.0
          %1386 = vmatpush1.msra.mxu0 0.0
          %1387 = vmatprep.subr.mxu0 0.0
          %1388 = vmatpush1.msra.mxu0 0.0
          %1389 = vmatprep.subr.mxu0 0.0
          %1390 = vmatpush1.msra.mxu0 0.0
          %1391 = vmatprep.subr.mxu0 0.0
          %1392 = vmatpush1.msra.mxu0 0.0
          %1393 = vmatprep.subr.mxu0 0.0
          %1394 = vmatpush1.msra.mxu0 0.0
          %1395 = vmatprep.subr.mxu0 0.0
          %1396 = vmatpush1.msra.mxu0 0.0
          %1397 = vmatprep.subr.mxu0 0.0
          %1398 = vmatpush1.msra.mxu0 0.0
          %1399 = vmatprep.subr.mxu0 0.0
          %1400 = vmatpush1.msra.mxu0 0.0
          %1401 = vmatprep.subr.mxu0 0.0
          %1402 = vmatpush1.msra.mxu0 0.0
          %1403 = vmatprep.subr.mxu0 0.0
          %1404 = vmatpush1.msra.mxu0 0.0
          %1405 = vmatprep.subr.mxu0 0.0
          %1406 = vmatpush1.msra.mxu0 0.0
          %1407 = vmatprep.mubr.f32.mxu0 0.0
          %1408 = vmatmul.mubr.f32.gmra.mrb[0].mxu0 %v1134
          %v1409 = vpop.f32.mrb[0].mxu0
          %v1410 = vadd.f32 0.0, %v1409
          %v1411 = vpop.f32.mrb[0].mxu0
          %1412 = vmatprep.mubr.f32.mxu0 0.0
          %1413 = vmatmul.mubr.f32.gmra.mrb[0].mxu0 %v1137
          %v1414 = vpop.f32.mrb[0].mxu0
          %v1415 = vadd.f32 0.0, %v1414
          %v1416 = vpop.f32.mrb[0].mxu0
          %1417 = vmatprep.mubr.f32.mxu0 0.0
          %1418 = vmatmul.mubr.f32.gmra.mrb[0].mxu0 %v1140
          %v1419 = vpop.f32.mrb[0].mxu0
          %v1420 = vadd.f32 0.0, %v1419
          %v1421 = vpop.f32.mrb[0].mxu0
          %1422 = vmatprep.mubr.f32.mxu0 0.0
          %1423 = vmatmul.mubr.f32.gmra.mrb[0].mxu0 %v1143
          %v1424 = vpop.f32.mrb[0].mxu0
          %v1425 = vadd.f32 0.0, %v1424
          %v1426 = vpop.f32.mrb[0].mxu0
          %1427 = vmatprep.mubr.f32.mxu0 0.0
          %1428 = vmatmul.mubr.f32.gmra.mrb[0].mxu0 %v1146
          %v1429 = vpop.f32.mrb[0].mxu0
          %v1430 = vadd.f32 0.0, %v1429
          %v1431 = vpop.f32.mrb[0].mxu0
          %1432 = vmatprep.mubr.f32.mxu0 0.0
          %1433 = vmatmul.mubr.f32.gmra.mrb[0].mxu0 %v1149
          %v1434 = vpop.f32.mrb[0].mxu0
          %v1435 = vadd.f32 0.0, %v1434
          %v1436 = vpop.f32.mrb[0].mxu0
          %1437 = vmatprep.mubr.f32.mxu0 0.0
          %1438 = vmatmul.mubr.f32.gmra.mrb[0].mxu0 %v1152
          %v1439 = vpop.f32.mrb[0].mxu0
          %v1440 = vadd.f32 0.0, %v1439
          %v1441 = vpop.f32.mrb[0].mxu0
          %1442 = vmatprep.mubr.f32.mxu0 0.0
          %1443 = vmatmul.mubr.f32.gmra.mrb[0].mxu0 %v1155
          %v1444 = vpop.f32.mrb[0].mxu0
          %v1445 = vadd.f32 0.0, %v1444
          %v1446 = vpop.f32.mrb[0].mxu0
          %1447 = vmatprep.mubr.f32.mxu0 0.0
          %1448 = vmatmul.mubr.f32.gmra.mrb[0].mxu0 %v1158
          %v1449 = vpop.f32.mrb[0].mxu0
          %v1450 = vadd.f32 0.0, %v1449
          %v1451 = vpop.f32.mrb[0].mxu0
          %1452 = vmatprep.mubr.f32.mxu0 0.0
          %1453 = vmatmul.mubr.f32.gmra.mrb[0].mxu0 %v1161
          %v1454 = vpop.f32.mrb[0].mxu0
          %v1455 = vadd.f32 0.0, %v1454
          %v1456 = vpop.f32.mrb[0].mxu0
          %1457 = vmatprep.mubr.f32.mxu0 0.0
          %1458 = vmatmul.mubr.f32.gmra.mrb[0].mxu0 %v1164
          %v1459 = vpop.f32.mrb[0].mxu0
          %v1460 = vadd.f32 0.0, %v1459
          %v1461 = vpop.f32.mrb[0].mxu0
          %1462 = vmatprep.mubr.f32.mxu0 0.0
          %1463 = vmatmul.mubr.f32.gmra.mrb[0].mxu0 %v1167
          %v1464 = vpop.f32.mrb[0].mxu0
          %v1465 = vadd.f32 0.0, %v1464
          %v1466 = vpop.f32.mrb[0].mxu0
          %1467 = vmatprep.mubr.f32.mxu0 0.0
          %1468 = vmatmul.mubr.f32.gmra.mrb[0].mxu0 %v1170
          %v1469 = vpop.f32.mrb[0].mxu0
          %v1470 = vadd.f32 0.0, %v1469
          %v1471 = vpop.f32.mrb[0].mxu0
          %1472 = vmatprep.mubr.f32.mxu0 0.0
          %1473 = vmatmul.mubr.f32.gmra.mrb[0].mxu0 %v1173
          %v1474 = vpop.f32.mrb[0].mxu0
          %v1475 = vadd.f32 0.0, %v1474
          %v1476 = vpop.f32.mrb[0].mxu0
          %1477 = vmatprep.mubr.f32.mxu0 0.0
          %1478 = vmatmul.mubr.f32.gmra.mrb[0].mxu0 %v1176
          %v1479 = vpop.f32.mrb[0].mxu0
          %v1480 = vadd.f32 0.0, %v1479
          %v1481 = vpop.f32.mrb[0].mxu0
          %1482 = vmatprep.mubr.f32.mxu0 0.0
          %1483 = vmatmul.mubr.f32.gmra.mrb[0].mxu0 %v1179
          %v1484 = vpop.f32.mrb[0].mxu0
          %v1485 = vadd.f32 0.0, %v1484
          %v1486 = vpop.f32.mrb[0].mxu0
          %1487 = vdwg.mxu0
          %s1488 = scalar_lea.vmem [#allocation5], %s1098
          %1489 = vst [vmem:[%s1488] sm:$0xff] %v1410
          %1490 = vst [vmem:[%s1488 + $0x8] sm:$0xff] %v1415
          %1491 = vst [vmem:[%s1488 + $0x10] sm:$0xff] %v1420
          %1492 = vst [vmem:[%s1488 + $0x18] sm:$0xff] %v1425
          %1493 = vst [vmem:[%s1488 + $0x20] sm:$0xff] %v1430
          %1494 = vst [vmem:[%s1488 + $0x28] sm:$0xff] %v1435
          %1495 = vst [vmem:[%s1488 + $0x30] sm:$0xff] %v1440
          %1496 = vst [vmem:[%s1488 + $0x38] sm:$0xff] %v1445
          %1497 = vst [vmem:[%s1488 + $0x40] sm:$0xff] %v1450
          %1498 = vst [vmem:[%s1488 + $0x48] sm:$0xff] %v1455
          %1499 = vst [vmem:[%s1488 + $0x50] sm:$0xff] %v1460
          %1500 = vst [vmem:[%s1488 + $0x58] sm:$0xff] %v1465
          %1501 = vst [vmem:[%s1488 + $0x60] sm:$0xff] %v1470
          %1502 = vst [vmem:[%s1488 + $0x68] sm:$0xff] %v1475
          %1503 = vst [vmem:[%s1488 + $0x70] sm:$0xff] %v1480
          %1504 = vst [vmem:[%s1488 + $0x78] sm:$0xff] %v1485
          %v1505 = vlaneseq
          %v1506 = vshrl.u32 %v1505, 7
          %v1507 = vsub.s32 0, %v1506
          %v1508 = vrot.slane %v1110, %v1507
          %v1509 = vmul.f32 %v1508, %v577
          %v1510 = vmul.f32 %v1508, %v578
          %v1511 = vmul.f32 %v1509, 1.442695
          %v1512 = vpow.pop %v1511
          %v1513 = vmul.f32 %v1510, 1.442695
          %v1514 = vpow.pop %v1513
          %s1515 = scalar_lea.vmem [#allocation3], %s1098
          %1516 = vst [vmem:[%s1515] sm:$0xff] %v1512
          %1517 = vst [vmem:[%s1515 + $0x8] sm:$0xff] %v1514
          %v1518 = vlaneseq
          %v1519 = vshrl.u32 %v1518, 7
          %v1520 = vsub.s32 1, %v1519
          %v1521 = vrot.slane %v1110, %v1520
          %v1522 = vmul.f32 %v1521, %v577
          %v1523 = vmul.f32 %v1521, %v578
          %v1524 = vmul.f32 %v1522, 1.442695
          %v1525 = vpow.pop %v1524
          %v1526 = vmul.f32 %v1523, 1.442695
          %v1527 = vpow.pop %v1526
          %s1528 = sadd.s32 %s1098, 16
          %s1529 = scalar_lea.vmem [#allocation3], %s1528
          %1530 = vst [vmem:[%s1529] sm:$0xff] %v1525
          %1531 = vst [vmem:[%s1529 + $0x8] sm:$0xff] %v1527
          %v1532 = vlaneseq
          %v1533 = vshrl.u32 %v1532, 7
          %v1534 = vsub.s32 2, %v1533
          %v1535 = vrot.slane %v1110, %v1534
          %v1536 = vmul.f32 %v1535, %v577
          %v1537 = vmul.f32 %v1535, %v578
          %v1538 = vmul.f32 %v1536, 1.442695
          %v1539 = vpow.pop %v1538
          %v1540 = vmul.f32 %v1537, 1.442695
          %v1541 = vpow.pop %v1540
          %s1542 = sadd.s32 %s1098, 32
          %s1543 = scalar_lea.vmem [#allocation3], %s1542
          %1544 = vst [vmem:[%s1543] sm:$0xff] %v1539
          %1545 = vst [vmem:[%s1543 + $0x8] sm:$0xff] %v1541
          %v1546 = vlaneseq
          %v1547 = vshrl.u32 %v1546, 7
          %v1548 = vsub.s32 3, %v1547
          %v1549 = vrot.slane %v1110, %v1548
          %v1550 = vmul.f32 %v1549, %v577
          %v1551 = vmul.f32 %v1549, %v578
          %v1552 = vmul.f32 %v1550, 1.442695
          %v1553 = vpow.pop %v1552
          %v1554 = vmul.f32 %v1551, 1.442695
          %v1555 = vpow.pop %v1554
          %s1556 = sadd.s32 %s1098, 48
          %s1557 = scalar_lea.vmem [#allocation3], %s1556
          %1558 = vst [vmem:[%s1557] sm:$0xff] %v1553
          %1559 = vst [vmem:[%s1557 + $0x8] sm:$0xff] %v1555
          %v1560 = vlaneseq
          %v1561 = vshrl.u32 %v1560, 7
          %v1562 = vsub.s32 4, %v1561
          %v1563 = vrot.slane %v1110, %v1562
          %v1564 = vmul.f32 %v1563, %v577
          %v1565 = vmul.f32 %v1563, %v578
          %v1566 = vmul.f32 %v1564, 1.442695
          %v1567 = vpow.pop %v1566
          %v1568 = vmul.f32 %v1565, 1.442695
          %v1569 = vpow.pop %v1568
          %s1570 = sadd.s32 %s1098, 64
          %s1571 = scalar_lea.vmem [#allocation3], %s1570
          %1572 = vst [vmem:[%s1571] sm:$0xff] %v1567
          %1573 = vst [vmem:[%s1571 + $0x8] sm:$0xff] %v1569
          %v1574 = vlaneseq
          %v1575 = vshrl.u32 %v1574, 7
          %v1576 = vsub.s32 5, %v1575
          %v1577 = vrot.slane %v1110, %v1576
          %v1578 = vmul.f32 %v1577, %v577
          %v1579 = vmul.f32 %v1577, %v578
          %v1580 = vmul.f32 %v1578, 1.442695
          %v1581 = vpow.pop %v1580
          %v1582 = vmul.f32 %v1579, 1.442695
          %v1583 = vpow.pop %v1582
          %s1584 = sadd.s32 %s1098, 80
          %s1585 = scalar_lea.vmem [#allocation3], %s1584
          %1586 = vst [vmem:[%s1585] sm:$0xff] %v1581
          %1587 = vst [vmem:[%s1585 + $0x8] sm:$0xff] %v1583
          %v1588 = vlaneseq
          %v1589 = vshrl.u32 %v1588, 7
          %v1590 = vsub.s32 6, %v1589
          %v1591 = vrot.slane %v1110, %v1590
          %v1592 = vmul.f32 %v1591, %v577
          %v1593 = vmul.f32 %v1591, %v578
          %v1594 = vmul.f32 %v1592, 1.442695
          %v1595 = vpow.pop %v1594
          %v1596 = vmul.f32 %v1593, 1.442695
          %v1597 = vpow.pop %v1596
          %s1598 = sadd.s32 %s1098, 96
          %s1599 = scalar_lea.vmem [#allocation3], %s1598
          %1600 = vst [vmem:[%s1599] sm:$0xff] %v1595
          %1601 = vst [vmem:[%s1599 + $0x8] sm:$0xff] %v1597
          %v1602 = vlaneseq
          %v1603 = vshrl.u32 %v1602, 7
          %v1604 = vsub.s32 7, %v1603
          %v1605 = vrot.slane %v1110, %v1604
          %v1606 = vmul.f32 %v1605, %v577
          %v1607 = vmul.f32 %v1605, %v578
          %v1608 = vmul.f32 %v1606, 1.442695
          %v1609 = vpow.pop %v1608
          %v1610 = vmul.f32 %v1607, 1.442695
          %v1611 = vpow.pop %v1610
          %s1612 = sadd.s32 %s1098, 112
          %s1613 = scalar_lea.vmem [#allocation3], %s1612
          %1614 = vst [vmem:[%s1613] sm:$0xff] %v1609
          %1615 = vst [vmem:[%s1613 + $0x8] sm:$0xff] %v1611
          %s1616 = smul.u32 %s1080, 8
          %s1617 = scalar_lea.vmem %s477, %s1616 [#allocation7]
          %v1618 = vld [vmem:[%s1617] sm:$0xff]
          %s1619 = smul.u32 %s1092, 8
          %s1620 = scalar_lea.vmem [#allocation6], %s1619
          %v1621 = vld [vmem:[%s1620] sm:$0xff]
          %s1622 = smul.u32 %s1092, 128
          %s1623 = scalar_lea.vmem [#allocation3], %s1622
          %v1624 = vld [vmem:[%s1623] sm:$0xff]
          %v1625 = vld [vmem:[%s1623 + $0x8] sm:$0xff]
          %s1626 = scalar_lea.vmem [#allocation4], %s1622
          %v1627 = vld [vmem:[%s1626] sm:$0xff]
          %v1628 = vld [vmem:[%s1626 + $0x8] sm:$0xff]
          %v1629 = vlaneseq
          %v1630 = vshrl.u32 %v1629, 7
          %v1631 = vsub.s32 0, %v1630
          %v1632 = vrot.slane %v1621, %v1631
          %v1633 = vmul.f32 %v1632, %v1627
          %v1634 = vmul.f32 %v1632, %v1628
          %v1635 = vmul.f32 %v1624, %v1085
          %v1636 = vmul.f32 %v1625, %v1086
          %v1637 = vadd.f32 %v1635, %v1633
          %v1638 = vadd.f32 %v1636, %v1634
          %s1639 = scalar_lea.vmem [#allocation5], %s1622
          %v1640 = vld [vmem:[%s1639] sm:$0xff]
          %v1641 = vld [vmem:[%s1639 + $0x8] sm:$0xff]
          %v1642 = vmul.f32 %v1637, %v1640
          %v1643 = vmul.f32 %v1638, %v1641
          %v1644 = vadd.f32 %v1642, %v1643
          %v1645 = vrot.slane %v1644, 4
          %v1646 = vadd.f32 %v1644, %v1645
          %v1647 = vrot.slane %v1646, 2
          %v1648 = vadd.f32 %v1646, %v1647
          %v1649 = vrot.slane %v1648, 1
          %v1650 = vadd.f32 %v1648, %v1649
          %s1651 = sadd.s32 %s1622, 16
          %s1652 = scalar_lea.vmem [#allocation3], %s1651
          %v1653 = vld [vmem:[%s1652] sm:$0xff]
          %v1654 = vld [vmem:[%s1652 + $0x8] sm:$0xff]
          %s1655 = scalar_lea.vmem [#allocation4], %s1651
          %v1656 = vld [vmem:[%s1655] sm:$0xff]
          %v1657 = vld [vmem:[%s1655 + $0x8] sm:$0xff]
          %v1658 = vlaneseq
          %v1659 = vshrl.u32 %v1658, 7
          %v1660 = vsub.s32 1, %v1659
          %v1661 = vrot.slane %v1621, %v1660
          %v1662 = vmul.f32 %v1661, %v1656
          %v1663 = vmul.f32 %v1661, %v1657
          %v1664 = vmul.f32 %v1653, %v1637
          %v1665 = vmul.f32 %v1654, %v1638
          %v1666 = vadd.f32 %v1664, %v1662
          %v1667 = vadd.f32 %v1665, %v1663
          %s1668 = scalar_lea.vmem [#allocation5], %s1651
          %v1669 = vld [vmem:[%s1668] sm:$0xff]
          %v1670 = vld [vmem:[%s1668 + $0x8] sm:$0xff]
          %v1671 = vmul.f32 %v1666, %v1669
          %v1672 = vmul.f32 %v1667, %v1670
          %v1673 = vadd.f32 %v1671, %v1672
          %v1674 = vrot.slane %v1673, 4
          %v1675 = vadd.f32 %v1673, %v1674
          %v1676 = vrot.slane %v1675, 2
          %v1677 = vadd.f32 %v1675, %v1676
          %v1678 = vrot.slane %v1677, 1
          %v1679 = vadd.f32 %v1677, %v1678
          %s1680 = sadd.s32 %s1622, 32
          %s1681 = scalar_lea.vmem [#allocation3], %s1680
          %v1682 = vld [vmem:[%s1681] sm:$0xff]
          %v1683 = vld [vmem:[%s1681 + $0x8] sm:$0xff]
          %s1684 = scalar_lea.vmem [#allocation4], %s1680
          %v1685 = vld [vmem:[%s1684] sm:$0xff]
          %v1686 = vld [vmem:[%s1684 + $0x8] sm:$0xff]
          %v1687 = vlaneseq
          %v1688 = vshrl.u32 %v1687, 7
          %v1689 = vsub.s32 2, %v1688
          %v1690 = vrot.slane %v1621, %v1689
          %v1691 = vmul.f32 %v1690, %v1685
          %v1692 = vmul.f32 %v1690, %v1686
          %v1693 = vmul.f32 %v1682, %v1666
          %v1694 = vmul.f32 %v1683, %v1667
          %v1695 = vadd.f32 %v1693, %v1691
          %v1696 = vadd.f32 %v1694, %v1692
          %s1697 = scalar_lea.vmem [#allocation5], %s1680
          %v1698 = vld [vmem:[%s1697] sm:$0xff]
          %v1699 = vld [vmem:[%s1697 + $0x8] sm:$0xff]
          %v1700 = vmul.f32 %v1695, %v1698
          %v1701 = vmul.f32 %v1696, %v1699
          %v1702 = vadd.f32 %v1700, %v1701
          %v1703 = vrot.slane %v1702, 4
          %v1704 = vadd.f32 %v1702, %v1703
          %v1705 = vrot.slane %v1704, 2
          %v1706 = vadd.f32 %v1704, %v1705
          %v1707 = vrot.slane %v1706, 1
          %v1708 = vadd.f32 %v1706, %v1707
          %s1709 = sadd.s32 %s1622, 48
          %s1710 = scalar_lea.vmem [#allocation3], %s1709
          %v1711 = vld [vmem:[%s1710] sm:$0xff]
          %v1712 = vld [vmem:[%s1710 + $0x8] sm:$0xff]
          %s1713 = scalar_lea.vmem [#allocation4], %s1709
          %v1714 = vld [vmem:[%s1713] sm:$0xff]
          %v1715 = vld [vmem:[%s1713 + $0x8] sm:$0xff]
          %v1716 = vlaneseq
          %v1717 = vshrl.u32 %v1716, 7
          %v1718 = vsub.s32 3, %v1717
          %v1719 = vrot.slane %v1621, %v1718
          %v1720 = vmul.f32 %v1719, %v1714
          %v1721 = vmul.f32 %v1719, %v1715
          %v1722 = vmul.f32 %v1711, %v1695
          %v1723 = vmul.f32 %v1712, %v1696
          %v1724 = vadd.f32 %v1722, %v1720
          %v1725 = vadd.f32 %v1723, %v1721
          %s1726 = scalar_lea.vmem [#allocation5], %s1709
          %v1727 = vld [vmem:[%s1726] sm:$0xff]
          %v1728 = vld [vmem:[%s1726 + $0x8] sm:$0xff]
          %v1729 = vmul.f32 %v1724, %v1727
          %v1730 = vmul.f32 %v1725, %v1728
          %v1731 = vadd.f32 %v1729, %v1730
          %v1732 = vrot.slane %v1731, 4
          %v1733 = vadd.f32 %v1731, %v1732
          %v1734 = vrot.slane %v1733, 2
          %v1735 = vadd.f32 %v1733, %v1734
          %v1736 = vrot.slane %v1735, 1
          %v1737 = vadd.f32 %v1735, %v1736
          %s1738 = sadd.s32 %s1622, 64
          %s1739 = scalar_lea.vmem [#allocation3], %s1738
          %v1740 = vld [vmem:[%s1739] sm:$0xff]
          %v1741 = vld [vmem:[%s1739 + $0x8] sm:$0xff]
          %s1742 = scalar_lea.vmem [#allocation4], %s1738
          %v1743 = vld [vmem:[%s1742] sm:$0xff]
          %v1744 = vld [vmem:[%s1742 + $0x8] sm:$0xff]
          %v1745 = vlaneseq
          %v1746 = vshrl.u32 %v1745, 7
          %v1747 = vsub.s32 4, %v1746
          %v1748 = vrot.slane %v1621, %v1747
          %v1749 = vmul.f32 %v1748, %v1743
          %v1750 = vmul.f32 %v1748, %v1744
          %v1751 = vmul.f32 %v1740, %v1724
          %v1752 = vmul.f32 %v1741, %v1725
          %v1753 = vadd.f32 %v1751, %v1749
          %v1754 = vadd.f32 %v1752, %v1750
          %s1755 = scalar_lea.vmem [#allocation5], %s1738
          %v1756 = vld [vmem:[%s1755] sm:$0xff]
          %v1757 = vld [vmem:[%s1755 + $0x8] sm:$0xff]
          %v1758 = vmul.f32 %v1753, %v1756
          %v1759 = vmul.f32 %v1754, %v1757
          %v1760 = vadd.f32 %v1758, %v1759
          %v1761 = vrot.slane %v1760, 4
          %v1762 = vadd.f32 %v1760, %v1761
          %v1763 = vrot.slane %v1762, 2
          %v1764 = vadd.f32 %v1762, %v1763
          %v1765 = vrot.slane %v1764, 1
          %v1766 = vadd.f32 %v1764, %v1765
          %s1767 = sadd.s32 %s1622, 80
          %s1768 = scalar_lea.vmem [#allocation3], %s1767
          %v1769 = vld [vmem:[%s1768] sm:$0xff]
          %v1770 = vld [vmem:[%s1768 + $0x8] sm:$0xff]
          %s1771 = scalar_lea.vmem [#allocation4], %s1767
          %v1772 = vld [vmem:[%s1771] sm:$0xff]
          %v1773 = vld [vmem:[%s1771 + $0x8] sm:$0xff]
          %v1774 = vlaneseq
          %v1775 = vshrl.u32 %v1774, 7
          %v1776 = vsub.s32 5, %v1775
          %v1777 = vrot.slane %v1621, %v1776
          %v1778 = vmul.f32 %v1777, %v1772
          %v1779 = vmul.f32 %v1777, %v1773
          %v1780 = vmul.f32 %v1769, %v1753
          %v1781 = vmul.f32 %v1770, %v1754
          %v1782 = vadd.f32 %v1780, %v1778
          %v1783 = vadd.f32 %v1781, %v1779
          %s1784 = scalar_lea.vmem [#allocation5], %s1767
          %v1785 = vld [vmem:[%s1784] sm:$0xff]
          %v1786 = vld [vmem:[%s1784 + $0x8] sm:$0xff]
          %v1787 = vmul.f32 %v1782, %v1785
          %v1788 = vmul.f32 %v1783, %v1786
          %v1789 = vadd.f32 %v1787, %v1788
          %v1790 = vrot.slane %v1789, 4
          %v1791 = vadd.f32 %v1789, %v1790
          %v1792 = vrot.slane %v1791, 2
          %v1793 = vadd.f32 %v1791, %v1792
          %v1794 = vrot.slane %v1793, 1
          %v1795 = vadd.f32 %v1793, %v1794
          %s1796 = sadd.s32 %s1622, 96
          %s1797 = scalar_lea.vmem [#allocation3], %s1796
          %v1798 = vld [vmem:[%s1797] sm:$0xff]
          %v1799 = vld [vmem:[%s1797 + $0x8] sm:$0xff]
          %s1800 = scalar_lea.vmem [#allocation4], %s1796
          %v1801 = vld [vmem:[%s1800] sm:$0xff]
          %v1802 = vld [vmem:[%s1800 + $0x8] sm:$0xff]
          %v1803 = vlaneseq
          %v1804 = vshrl.u32 %v1803, 7
          %v1805 = vsub.s32 6, %v1804
          %v1806 = vrot.slane %v1621, %v1805
          %v1807 = vmul.f32 %v1806, %v1801
          %v1808 = vmul.f32 %v1806, %v1802
          %v1809 = vmul.f32 %v1798, %v1782
          %v1810 = vmul.f32 %v1799, %v1783
          %v1811 = vadd.f32 %v1809, %v1807
          %v1812 = vadd.f32 %v1810, %v1808
          %s1813 = scalar_lea.vmem [#allocation5], %s1796
          %v1814 = vld [vmem:[%s1813] sm:$0xff]
          %v1815 = vld [vmem:[%s1813 + $0x8] sm:$0xff]
          %v1816 = vmul.f32 %v1811, %v1814
          %v1817 = vmul.f32 %v1812, %v1815
          %v1818 = vadd.f32 %v1816, %v1817
          %v1819 = vrot.slane %v1818, 4
          %v1820 = vadd.f32 %v1818, %v1819
          %v1821 = vrot.slane %v1820, 2
          %v1822 = vadd.f32 %v1820, %v1821
          %v1823 = vrot.slane %v1822, 1
          %v1824 = vadd.f32 %v1822, %v1823
          %s1825 = sadd.s32 %s1622, 112
          %s1826 = scalar_lea.vmem [#allocation3], %s1825
          %v1827 = vld [vmem:[%s1826] sm:$0xff]
          %v1828 = vld [vmem:[%s1826 + $0x8] sm:$0xff]
          %s1829 = scalar_lea.vmem [#allocation4], %s1825
          %v1830 = vld [vmem:[%s1829] sm:$0xff]
          %v1831 = vld [vmem:[%s1829 + $0x8] sm:$0xff]
          %v1832 = vlaneseq
          %v1833 = vshrl.u32 %v1832, 7
          %v1834 = vsub.s32 7, %v1833
          %v1835 = vrot.slane %v1621, %v1834
          %v1836 = vmul.f32 %v1835, %v1830
          %v1837 = vmul.f32 %v1835, %v1831
          %v1838 = vmul.f32 %v1827, %v1811
          %v1839 = vmul.f32 %v1828, %v1812
          %v1840 = vadd.f32 %v1838, %v1836
          %v1841 = vadd.f32 %v1839, %v1837
          %s1842 = scalar_lea.vmem [#allocation5], %s1825
          %v1843 = vld [vmem:[%s1842] sm:$0xff]
          %v1844 = vld [vmem:[%s1842 + $0x8] sm:$0xff]
          %v1845 = vmul.f32 %v1840, %v1843
          %v1846 = vmul.f32 %v1841, %v1844
          %v1847 = vadd.f32 %v1845, %v1846
          %v1848 = vrot.slane %v1847, 4
          %v1849 = vadd.f32 %v1847, %v1848
          %v1850 = vrot.slane %v1849, 2
          %v1851 = vadd.f32 %v1849, %v1850
          %v1852 = vrot.slane %v1851, 1
          %v1853 = vadd.f32 %v1851, %v1852
          %vm1854 = vcmask 1040384
          %v1855 = vsel %vm1854, %v1650, %v1679
          %vm1856 = vcmask 1041408
          %v1857 = vsel %vm1856, %v1855, %v1708
          %vm1858 = vcmask 1042432
          %v1859 = vsel %vm1858, %v1857, %v1737
          %vm1860 = vcmask 1043456
          %v1861 = vsel %vm1860, %v1859, %v1766
          %vm1862 = vcmask 1044480
          %v1863 = vsel %vm1862, %v1861, %v1795
          %vm1864 = vcmask 1045504
          %v1865 = vsel %vm1864, %v1863, %v1824
          %vm1866 = vcmask 1046528
          %v1867 = vsel %vm1866, %v1865, %v1853
          %v1869 = vlaneseq
          %v1870 = vshrl.u32 %v1869, 7
          %v1871 = vsub.s32 0, %v1870
          %v1872 = vrot.slane %v581, %v1871
          %v1874 = vmul.f32 %v1872, %v1618
          %v1875 = vadd.f32 %v1867, %v1874
          %s1876 = scalar_lea.vmem %s546, %s1616 [#allocation10]
          %1877 = vst [vmem:[%s1876] sm:$0xff] %v1875
        $region171: #{_lambda_.8} parent=149 // loop_footer
          %s1084 = sadd.s32 1, %s1080
        $region172: #{_lambda_.8} parent=149 // loop_footer_branch
          %1079 = sbr.rel target = $region168
        $region173: #{_lambda_.8} parent=149 // loop_exit
          _
        %1878 = vst [vmem:[#allocation2] sm:$0xff] %v1085
        %1879 = vst [vmem:[#allocation2 + $0x8] sm:$0xff] %v1086
        %s1880 = sand.u32 %s241, 1
        %s1881 = sand.u32 %s241, 1
        %s1882 = smul.addr %s1881, 32
        %s1883 = scalar_lea.vmem [#allocation10], %s1882
        // Predicated region
        $region174: #{_lambda_.8} parent=149 // pred_check
          %p1884 = pneg %p251
        $region175: #{_lambda_.8} parent=149 // pred_check_branch
          %1886 = sbr.rel (%p1884) target = $region177
        $region176: #{_lambda_.8} parent=149 // pred_region
          %s1887 = smul.u32 4, %s25
          %s1888 = smul.addr %s1887, 2
          %s1889 = sadd.s32 %s24, %s1888
          %s1890 = smul.addr %s23, 16
          %s1891 = sadd.s32 %s1889, %s1890
          %s1892 = smul.addr %s1891, 8
          %s1893 = scalar_lea.vmem %s7, %s1892
          // Predicated region
          $region178: #{_lambda_.8} parent=176 // pred_check
            _
          $region179: #{_lambda_.8} parent=176 // pred_check_branch
            %1895 = sbr.rel (0) target = $region181
          $region180: #{_lambda_.8} parent=176 // pred_region
            // Predicated region
            $region182: #{_lambda_.8} parent=180 // pred_check
              _
            $region183: #{_lambda_.8} parent=180 // pred_check_branch
              %1897 = sbr.rel (0) target = $region185
            $region184: #{_lambda_.8} parent=180 // pred_region
              // Predicated region
              $region197: #{_lambda_.8} parent=184 // pred_check
                _
              $region198: #{_lambda_.8} parent=184 // pred_check_branch
                %1918 = sbr.rel (0) target = $region200
              $region199: #{_lambda_.8} parent=184 // pred_region
                loop: start=0, step=1, limit=1
                $region201: #{_lambda_.8} parent=199 // loop_pre_header
                  _
                $region202: #{_lambda_.8} parent=199 // loop_header
                  %s1920 = sphi 0, %s1924
                  %p1921 = scmp.ge.s32.totalorder %s1920, 1
                  %s1925 = sphi %s1883, %s1883
                  %s1926 = sphi %s1893, %s1893
                $region203: #{_lambda_.8} parent=199 // loop_header_branch
                  %1923 = sbr.rel (%p1921) target = $region207
                $region204: #{_lambda_.8} parent=199 // loop_body
                  %v1927 = vld [vmem:[%s1925] sm:$0xff]
                  %1928 = vst [vmem:[%s1926] sm:$0xff] %v1927
                  %v1929 = vld [vmem:[%s1925 + $0x8] sm:$0xff]
                  %1930 = vst [vmem:[%s1926 + $0x10] sm:$0xff] %v1929
                  %v1931 = vld [vmem:[%s1925 + $0x10] sm:$0xff]
                  %1932 = vst [vmem:[%s1926 + $0x20] sm:$0xff] %v1931
                  %v1933 = vld [vmem:[%s1925 + $0x18] sm:$0xff]
                  %1934 = vst [vmem:[%s1926 + $0x30] sm:$0xff] %v1933
                $region205: #{_lambda_.8} parent=199 // loop_footer
                  %s1924 = sadd.s32 1, %s1920
                $region206: #{_lambda_.8} parent=199 // loop_footer_branch
                  %1919 = sbr.rel target = $region202
                $region207: #{_lambda_.8} parent=199 // loop_exit
                  _
              $region200: #{_lambda_.8} parent=184 // pred_fallthru
                _
              // Predicated region
              $region208: #{_lambda_.8} parent=184 // pred_check
                _
              $region209: #{_lambda_.8} parent=184 // pred_check_branch
                %1936 = sbr.rel target = $region211
              $region210: #{_lambda_.8} parent=184 // pred_region
                _
              $region211: #{_lambda_.8} parent=184 // pred_fallthru
                _
            $region185: #{_lambda_.8} parent=180 // pred_fallthru
              _
            // Predicated region
            $region186: #{_lambda_.8} parent=180 // pred_check
              _
            $region187: #{_lambda_.8} parent=180 // pred_check_branch
              %1899 = sbr.rel target = $region189
            $region188: #{_lambda_.8} parent=180 // pred_region
              loop: start=0, step=1, limit=1
              $region190: #{_lambda_.8} parent=188 // loop_pre_header
                _
              $region191: #{_lambda_.8} parent=188 // loop_header
                %s1902 = sphi 0, %s1906
                %p1903 = scmp.ge.s32.totalorder %s1902, 1
                %s1907 = sphi %s1883, %s1883
                %s1908 = sphi %s1893, %s1893
              $region192: #{_lambda_.8} parent=188 // loop_header_branch
                %1905 = sbr.rel (%p1903) target = $region196
              $region193: #{_lambda_.8} parent=188 // loop_body
                %v1909 = vld [vmem:[%s1907] sm:$0xff]
                %1910 = vst [vmem:[%s1908] sm:$0xff] %v1909
                %v1911 = vld [vmem:[%s1907 + $0x8] sm:$0xff]
                %1912 = vst [vmem:[%s1908 + $0x10] sm:$0xff] %v1911
                %v1913 = vld [vmem:[%s1907 + $0x10] sm:$0xff]
                %1914 = vst [vmem:[%s1908 + $0x20] sm:$0xff] %v1913
                %v1915 = vld [vmem:[%s1907 + $0x18] sm:$0xff]
                %1916 = vst [vmem:[%s1908 + $0x30] sm:$0xff] %v1915
              $region194: #{_lambda_.8} parent=188 // loop_footer
                %s1906 = sadd.s32 1, %s1902
              $region195: #{_lambda_.8} parent=188 // loop_footer_branch
                %1901 = sbr.rel target = $region191
              $region196: #{_lambda_.8} parent=188 // loop_exit
                _
            $region189: #{_lambda_.8} parent=180 // pred_fallthru
              _
          $region181: #{_lambda_.8} parent=176 // pred_fallthru
            _
          %1937 = vnop
        $region177: #{_lambda_.8} parent=149 // pred_fallthru
          _
      $region150: #{_lambda_.8} parent=5 // pred_fallthru
        _
      %p1938 = scmp.le.s32.totalorder 2, %s13
      // Predicated region
      $region212: #{_lambda_.8} parent=5 // pred_check
        %p1939 = pneg %p1938
      $region213: #{_lambda_.8} parent=5 // pred_check_branch
        %1941 = sbr.rel (%p1939) target = $region215
      $region214: #{_lambda_.8} parent=5 // pred_region
        %s1942 = ssub.s32 %s13, 2
        // Predicated region
        $region216: #{_lambda_.8} parent=214 // pred_check
          %p1943 = pneg %p257
        $region217: #{_lambda_.8} parent=214 // pred_check_branch
          %1945 = sbr.rel (%p1943) target = $region219
        $region218: #{_lambda_.8} parent=214 // pred_region
          %s1946 = sand.u32 %s242, 1
          %s1947 = sand.u32 %s242, 1
          %s1948 = smul.addr %s1947, 32
          %s1949 = scalar_lea.vmem [#allocation10], %s1948
        $region219: #{_lambda_.8} parent=214 // pred_fallthru
          _
      $region215: #{_lambda_.8} parent=5 // pred_fallthru
        _
    $region6: #{_lambda_.8} parent=1 // loop_footer
      %s17 = sadd.s32 1, %s13
    $region7: #{_lambda_.8} parent=1 // loop_footer_branch
      %12 = sbr.rel target = $region3
    $region8: #{_lambda_.8} parent=1 // loop_exit
      _

// kernel: _lambda_.9
$region0: #{_lambda_.9}
  #allocation0 [shape = 'u32[]', space=smem, size = 0x4, offset = 0x4, fixed_abs, tag = 'smem constant byte address 0x4 - core index']
  #allocation1 [shape = 'u32[144,128]{1,0:T(1,128)}', space=vmem, size = 0x12000, scoped, tag = 'internal scratch']
  %s0 = inlined_call_operand.vmem [shape: f32[128,64], index: 0, kind: input, shape index: {}]
  %s1 = inlined_call_operand.vmem [shape: f32[128,64], index: 1, kind: input, shape index: {}]
  %s2 = inlined_call_operand.vmem [shape: f32[1,64], index: 2, kind: input, shape index: {}]
  %s3 = inlined_call_operand.vmem [shape: f32[1,64], index: 3, kind: input, shape index: {}]
  %s4 = inlined_call_operand.vmem [shape: bf16[64,128], index: 4, kind: input, shape index: {}]
  %s5 = inlined_call_operand.hbm [shape: f32[128,128], index: 5, kind: output, shape index: {}]
  %s6 = sld [smem:[#allocation0]]
  $region30: #{_lambda_.9} parent=0
    _
  %s8 = ssub.s32 1, %s6
  %s9 = scalar_select 0, %s8, %s6
  $region1: #{_lambda_.9} parent=0
    #allocation2 [shape = 'u8[65536]{0}', space=vmem, size = 0x10000, scoped, tag = 'output window, operand 0, single buffered']
    #allocation3 [shape = 's32[1]{0}', space=sflag, size = 0x4, scoped, tag = 'scoped memory for _lambda_.9']
    %10 = vsyncpa [#allocation3], 0
    // Predicated region
    $region2: #{_lambda_.9} parent=1 // pred_check
      _
    $region3: #{_lambda_.9} parent=1 // pred_check_branch
      %12 = sbr.rel (0) target = $region5
    $region4: #{_lambda_.9} parent=1 // pred_region
      _
    $region5: #{_lambda_.9} parent=1 // pred_fallthru
      _
    // Predicated region
    $region6: #{_lambda_.9} parent=1 // pred_check
      _
    $region7: #{_lambda_.9} parent=1 // pred_check_branch
      %14 = sbr.rel (0) target = $region9
    $region8: #{_lambda_.9} parent=1 // pred_region
      _
    $region9: #{_lambda_.9} parent=1 // pred_fallthru
      _
    // Predicated region
    $region10: #{_lambda_.9} parent=1 // pred_check
      _
    $region11: #{_lambda_.9} parent=1 // pred_check_branch
      %16 = sbr.rel (0) target = $region13
    $region12: #{_lambda_.9} parent=1 // pred_region
      _
    $region13: #{_lambda_.9} parent=1 // pred_fallthru
      _
    // Predicated region
    $region14: #{_lambda_.9} parent=1 // pred_check
      _
    $region15: #{_lambda_.9} parent=1 // pred_check_branch
      %18 = sbr.rel (0) target = $region17
    $region16: #{_lambda_.9} parent=1 // pred_region
      _
    $region17: #{_lambda_.9} parent=1 // pred_fallthru
      _
    // Predicated region
    $region18: #{_lambda_.9} parent=1 // pred_check
      _
    $region19: #{_lambda_.9} parent=1 // pred_check_branch
      %20 = sbr.rel (0) target = $region21
    $region20: #{_lambda_.9} parent=1 // pred_region
      _
    $region21: #{_lambda_.9} parent=1 // pred_fallthru
      _
    %v22 = vld [vmem:[%s0] sm:$0xff]
    %v23 = vld [vmem:[%s0 + $0x8] sm:$0xff]
    %v24 = vld [vmem:[%s0 + $0x10] sm:$0xff]
    %v25 = vld [vmem:[%s0 + $0x18] sm:$0xff]
    %v26 = vld [vmem:[%s0 + $0x20] sm:$0xff]
    %v27 = vld [vmem:[%s0 + $0x28] sm:$0xff]
    %v28 = vld [vmem:[%s0 + $0x30] sm:$0xff]
    %v29 = vld [vmem:[%s0 + $0x38] sm:$0xff]
    %v30 = vld [vmem:[%s0 + $0x40] sm:$0xff]
    %v31 = vld [vmem:[%s0 + $0x48] sm:$0xff]
    %v32 = vld [vmem:[%s0 + $0x50] sm:$0xff]
    %v33 = vld [vmem:[%s0 + $0x58] sm:$0xff]
    %v34 = vld [vmem:[%s0 + $0x60] sm:$0xff]
    %v35 = vld [vmem:[%s0 + $0x68] sm:$0xff]
    %v36 = vld [vmem:[%s0 + $0x70] sm:$0xff]
    %v37 = vld [vmem:[%s0 + $0x78] sm:$0xff]
    %vm38 = vcmask 523264
    %v39 = vsel %vm38, %v22, 0.0
    %40 = vadd.xlane.f32.xlu0 %v39
    %v41 = vpop.xlane.xlu0 %40
    %v42 = vsel %vm38, %v23, 0.0
    %43 = vadd.xlane.f32.xlu0 %v42
    %v44 = vpop.xlane.xlu0 %43
    %v45 = vsel %vm38, %v24, 0.0
    %46 = vadd.xlane.f32.xlu0 %v45
    %v47 = vpop.xlane.xlu0 %46
    %v48 = vsel %vm38, %v25, 0.0
    %49 = vadd.xlane.f32.xlu0 %v48
    %v50 = vpop.xlane.xlu0 %49
    %v51 = vsel %vm38, %v26, 0.0
    %52 = vadd.xlane.f32.xlu0 %v51
    %v53 = vpop.xlane.xlu0 %52
    %v54 = vsel %vm38, %v27, 0.0
    %55 = vadd.xlane.f32.xlu0 %v54
    %v56 = vpop.xlane.xlu0 %55
    %v57 = vsel %vm38, %v28, 0.0
    %58 = vadd.xlane.f32.xlu0 %v57
    %v59 = vpop.xlane.xlu0 %58
    %v60 = vsel %vm38, %v29, 0.0
    %61 = vadd.xlane.f32.xlu0 %v60
    %v62 = vpop.xlane.xlu0 %61
    %v63 = vsel %vm38, %v30, 0.0
    %64 = vadd.xlane.f32.xlu0 %v63
    %v65 = vpop.xlane.xlu0 %64
    %v66 = vsel %vm38, %v31, 0.0
    %67 = vadd.xlane.f32.xlu0 %v66
    %v68 = vpop.xlane.xlu0 %67
    %v69 = vsel %vm38, %v32, 0.0
    %70 = vadd.xlane.f32.xlu0 %v69
    %v71 = vpop.xlane.xlu0 %70
    %v72 = vsel %vm38, %v33, 0.0
    %73 = vadd.xlane.f32.xlu0 %v72
    %v74 = vpop.xlane.xlu0 %73
    %v75 = vsel %vm38, %v34, 0.0
    %76 = vadd.xlane.f32.xlu0 %v75
    %v77 = vpop.xlane.xlu0 %76
    %v78 = vsel %vm38, %v35, 0.0
    %79 = vadd.xlane.f32.xlu0 %v78
    %v80 = vpop.xlane.xlu0 %79
    %v81 = vsel %vm38, %v36, 0.0
    %82 = vadd.xlane.f32.xlu0 %v81
    %v83 = vpop.xlane.xlu0 %82
    %v84 = vsel %vm38, %v37, 0.0
    %85 = vadd.xlane.f32.xlu0 %v84
    %v86 = vpop.xlane.xlu0 %85
    %v87 = vrcp.pop 64.0
    %v88 = vmul.f32 %v41, %v87
    %v89 = vmul.f32 %v44, %v87
    %v90 = vmul.f32 %v47, %v87
    %v91 = vmul.f32 %v50, %v87
    %v92 = vmul.f32 %v53, %v87
    %v93 = vmul.f32 %v56, %v87
    %v94 = vmul.f32 %v59, %v87
    %v95 = vmul.f32 %v62, %v87
    %v96 = vmul.f32 %v65, %v87
    %v97 = vmul.f32 %v68, %v87
    %v98 = vmul.f32 %v71, %v87
    %v99 = vmul.f32 %v74, %v87
    %v100 = vmul.f32 %v77, %v87
    %v101 = vmul.f32 %v80, %v87
    %v102 = vmul.f32 %v83, %v87
    %v103 = vmul.f32 %v86, %v87
    %v104 = vsub.f32 %v22, %v88
    %v105 = vsub.f32 %v23, %v89
    %v106 = vsub.f32 %v24, %v90
    %v107 = vsub.f32 %v25, %v91
    %v108 = vsub.f32 %v26, %v92
    %v109 = vsub.f32 %v27, %v93
    %v110 = vsub.f32 %v28, %v94
    %v111 = vsub.f32 %v29, %v95
    %v112 = vsub.f32 %v30, %v96
    %v113 = vsub.f32 %v31, %v97
    %v114 = vsub.f32 %v32, %v98
    %v115 = vsub.f32 %v33, %v99
    %v116 = vsub.f32 %v34, %v100
    %v117 = vsub.f32 %v35, %v101
    %v118 = vsub.f32 %v36, %v102
    %v119 = vsub.f32 %v37, %v103
    %v120 = vmul.f32 %v104, %v104
    %v121 = vmul.f32 %v105, %v105
    %v122 = vmul.f32 %v106, %v106
    %v123 = vmul.f32 %v107, %v107
    %v124 = vmul.f32 %v108, %v108
    %v125 = vmul.f32 %v109, %v109
    %v126 = vmul.f32 %v110, %v110
    %v127 = vmul.f32 %v111, %v111
    %v128 = vmul.f32 %v112, %v112
    %v129 = vmul.f32 %v113, %v113
    %v130 = vmul.f32 %v114, %v114
    %v131 = vmul.f32 %v115, %v115
    %v132 = vmul.f32 %v116, %v116
    %v133 = vmul.f32 %v117, %v117
    %v134 = vmul.f32 %v118, %v118
    %v135 = vmul.f32 %v119, %v119
    %v136 = vsel %vm38, %v120, 0.0
    %137 = vadd.xlane.f32.xlu0 %v136
    %v138 = vpop.xlane.xlu0 %137
    %v139 = vsel %vm38, %v121, 0.0
    %140 = vadd.xlane.f32.xlu0 %v139
    %v141 = vpop.xlane.xlu0 %140
    %v142 = vsel %vm38, %v122, 0.0
    %143 = vadd.xlane.f32.xlu0 %v142
    %v144 = vpop.xlane.xlu0 %143
    %v145 = vsel %vm38, %v123, 0.0
    %146 = vadd.xlane.f32.xlu0 %v145
    %v147 = vpop.xlane.xlu0 %146
    %v148 = vsel %vm38, %v124, 0.0
    %149 = vadd.xlane.f32.xlu0 %v148
    %v150 = vpop.xlane.xlu0 %149
    %v151 = vsel %vm38, %v125, 0.0
    %152 = vadd.xlane.f32.xlu0 %v151
    %v153 = vpop.xlane.xlu0 %152
    %v154 = vsel %vm38, %v126, 0.0
    %155 = vadd.xlane.f32.xlu0 %v154
    %v156 = vpop.xlane.xlu0 %155
    %v157 = vsel %vm38, %v127, 0.0
    %158 = vadd.xlane.f32.xlu0 %v157
    %v159 = vpop.xlane.xlu0 %158
    %v160 = vsel %vm38, %v128, 0.0
    %161 = vadd.xlane.f32.xlu0 %v160
    %v162 = vpop.xlane.xlu0 %161
    %v163 = vsel %vm38, %v129, 0.0
    %164 = vadd.xlane.f32.xlu0 %v163
    %v165 = vpop.xlane.xlu0 %164
    %v166 = vsel %vm38, %v130, 0.0
    %167 = vadd.xlane.f32.xlu0 %v166
    %v168 = vpop.xlane.xlu0 %167
    %v169 = vsel %vm38, %v131, 0.0
    %170 = vadd.xlane.f32.xlu0 %v169
    %v171 = vpop.xlane.xlu0 %170
    %v172 = vsel %vm38, %v132, 0.0
    %173 = vadd.xlane.f32.xlu0 %v172
    %v174 = vpop.xlane.xlu0 %173
    %v175 = vsel %vm38, %v133, 0.0
    %176 = vadd.xlane.f32.xlu0 %v175
    %v177 = vpop.xlane.xlu0 %176
    %v178 = vsel %vm38, %v134, 0.0
    %179 = vadd.xlane.f32.xlu0 %v178
    %v180 = vpop.xlane.xlu0 %179
    %v181 = vsel %vm38, %v135, 0.0
    %182 = vadd.xlane.f32.xlu0 %v181
    %v183 = vpop.xlane.xlu0 %182
    %v184 = vmul.f32 %v138, %v87
    %v185 = vmul.f32 %v141, %v87
    %v186 = vmul.f32 %v144, %v87
    %v187 = vmul.f32 %v147, %v87
    %v188 = vmul.f32 %v150, %v87
    %v189 = vmul.f32 %v153, %v87
    %v190 = vmul.f32 %v156, %v87
    %v191 = vmul.f32 %v159, %v87
    %v192 = vmul.f32 %v162, %v87
    %v193 = vmul.f32 %v165, %v87
    %v194 = vmul.f32 %v168, %v87
    %v195 = vmul.f32 %v171, %v87
    %v196 = vmul.f32 %v174, %v87
    %v197 = vmul.f32 %v177, %v87
    %v198 = vmul.f32 %v180, %v87
    %v199 = vmul.f32 %v183, %v87
    %v200 = vadd.f32 %v184, 1e-05
    %v201 = vadd.f32 %v185, 1e-05
    %v202 = vadd.f32 %v186, 1e-05
    %v203 = vadd.f32 %v187, 1e-05
    %v204 = vadd.f32 %v188, 1e-05
    %v205 = vadd.f32 %v189, 1e-05
    %v206 = vadd.f32 %v190, 1e-05
    %v207 = vadd.f32 %v191, 1e-05
    %v208 = vadd.f32 %v192, 1e-05
    %v209 = vadd.f32 %v193, 1e-05
    %v210 = vadd.f32 %v194, 1e-05
    %v211 = vadd.f32 %v195, 1e-05
    %v212 = vadd.f32 %v196, 1e-05
    %v213 = vadd.f32 %v197, 1e-05
    %v214 = vadd.f32 %v198, 1e-05
    %v215 = vadd.f32 %v199, 1e-05
    %v216 = vrsqrt.pop %v200
    %v217 = vrsqrt.pop %v201
    %v218 = vrsqrt.pop %v202
    %v219 = vrsqrt.pop %v203
    %v220 = vrsqrt.pop %v204
    %v221 = vrsqrt.pop %v205
    %v222 = vrsqrt.pop %v206
    %v223 = vrsqrt.pop %v207
    %v224 = vrsqrt.pop %v208
    %v225 = vrsqrt.pop %v209
    %v226 = vrsqrt.pop %v210
    %v227 = vrsqrt.pop %v211
    %v228 = vrsqrt.pop %v212
    %v229 = vrsqrt.pop %v213
    %v230 = vrsqrt.pop %v214
    %v231 = vrsqrt.pop %v215
    %v232 = vmul.f32 %v104, %v216
    %v233 = vmul.f32 %v105, %v217
    %v234 = vmul.f32 %v106, %v218
    %v235 = vmul.f32 %v107, %v219
    %v236 = vmul.f32 %v108, %v220
    %v237 = vmul.f32 %v109, %v221
    %v238 = vmul.f32 %v110, %v222
    %v239 = vmul.f32 %v111, %v223
    %v240 = vmul.f32 %v112, %v224
    %v241 = vmul.f32 %v113, %v225
    %v242 = vmul.f32 %v114, %v226
    %v243 = vmul.f32 %v115, %v227
    %v244 = vmul.f32 %v116, %v228
    %v245 = vmul.f32 %v117, %v229
    %v246 = vmul.f32 %v118, %v230
    %v247 = vmul.f32 %v119, %v231
    %v248 = vld [vmem:[%s2] sm:$0x1]
    %v250 = vlaneseq
    %v251 = vshrl.u32 %v250, 7
    %v252 = vsub.s32 0, %v251
    %v253 = vrot.slane %v248, %v252
    %v255 = vmul.f32 %v232, %v253
    %v256 = vmul.f32 %v233, %v253
    %v257 = vmul.f32 %v234, %v253
    %v258 = vmul.f32 %v235, %v253
    %v259 = vmul.f32 %v236, %v253
    %v260 = vmul.f32 %v237, %v253
    %v261 = vmul.f32 %v238, %v253
    %v262 = vmul.f32 %v239, %v253
    %v263 = vmul.f32 %v240, %v253
    %v264 = vmul.f32 %v241, %v253
    %v265 = vmul.f32 %v242, %v253
    %v266 = vmul.f32 %v243, %v253
    %v267 = vmul.f32 %v244, %v253
    %v268 = vmul.f32 %v245, %v253
    %v269 = vmul.f32 %v246, %v253
    %v270 = vmul.f32 %v247, %v253
    %v271 = vld [vmem:[%s3] sm:$0x1]
    %v273 = vlaneseq
    %v274 = vshrl.u32 %v273, 7
    %v275 = vsub.s32 0, %v274
    %v276 = vrot.slane %v271, %v275
    %v278 = vadd.f32 %v255, %v276
    %v279 = vadd.f32 %v256, %v276
    %v280 = vadd.f32 %v257, %v276
    %v281 = vadd.f32 %v258, %v276
    %v282 = vadd.f32 %v259, %v276
    %v283 = vadd.f32 %v260, %v276
    %v284 = vadd.f32 %v261, %v276
    %v285 = vadd.f32 %v262, %v276
    %v286 = vadd.f32 %v263, %v276
    %v287 = vadd.f32 %v264, %v276
    %v288 = vadd.f32 %v265, %v276
    %v289 = vadd.f32 %v266, %v276
    %v290 = vadd.f32 %v267, %v276
    %v291 = vadd.f32 %v268, %v276
    %v292 = vadd.f32 %v269, %v276
    %v293 = vadd.f32 %v270, %v276
    %v294 = vld [vmem:[%s1] sm:$0xff]
    %v295 = vld [vmem:[%s1 + $0x8] sm:$0xff]
    %v296 = vld [vmem:[%s1 + $0x10] sm:$0xff]
    %v297 = vld [vmem:[%s1 + $0x18] sm:$0xff]
    %v298 = vld [vmem:[%s1 + $0x20] sm:$0xff]
    %v299 = vld [vmem:[%s1 + $0x28] sm:$0xff]
    %v300 = vld [vmem:[%s1 + $0x30] sm:$0xff]
    %v301 = vld [vmem:[%s1 + $0x38] sm:$0xff]
    %v302 = vld [vmem:[%s1 + $0x40] sm:$0xff]
    %v303 = vld [vmem:[%s1 + $0x48] sm:$0xff]
    %v304 = vld [vmem:[%s1 + $0x50] sm:$0xff]
    %v305 = vld [vmem:[%s1 + $0x58] sm:$0xff]
    %v306 = vld [vmem:[%s1 + $0x60] sm:$0xff]
    %v307 = vld [vmem:[%s1 + $0x68] sm:$0xff]
    %v308 = vld [vmem:[%s1 + $0x70] sm:$0xff]
    %v309 = vld [vmem:[%s1 + $0x78] sm:$0xff]
    %v310 = vsub.f32 0.0, %v294
    %v311 = vsub.f32 0.0, %v295
    %v312 = vsub.f32 0.0, %v296
    %v313 = vsub.f32 0.0, %v297
    %v314 = vsub.f32 0.0, %v298
    %v315 = vsub.f32 0.0, %v299
    %v316 = vsub.f32 0.0, %v300
    %v317 = vsub.f32 0.0, %v301
    %v318 = vsub.f32 0.0, %v302
    %v319 = vsub.f32 0.0, %v303
    %v320 = vsub.f32 0.0, %v304
    %v321 = vsub.f32 0.0, %v305
    %v322 = vsub.f32 0.0, %v306
    %v323 = vsub.f32 0.0, %v307
    %v324 = vsub.f32 0.0, %v308
    %v325 = vsub.f32 0.0, %v309
    %v326 = vmul.f32 %v310, 1.442695
    %v327 = vpow.pop %v326
    %v328 = vmul.f32 %v311, 1.442695
    %v329 = vpow.pop %v328
    %v330 = vmul.f32 %v312, 1.442695
    %v331 = vpow.pop %v330
    %v332 = vmul.f32 %v313, 1.442695
    %v333 = vpow.pop %v332
    %v334 = vmul.f32 %v314, 1.442695
    %v335 = vpow.pop %v334
    %v336 = vmul.f32 %v315, 1.442695
    %v337 = vpow.pop %v336
    %v338 = vmul.f32 %v316, 1.442695
    %v339 = vpow.pop %v338
    %v340 = vmul.f32 %v317, 1.442695
    %v341 = vpow.pop %v340
    %v342 = vmul.f32 %v318, 1.442695
    %v343 = vpow.pop %v342
    %v344 = vmul.f32 %v319, 1.442695
    %v345 = vpow.pop %v344
    %v346 = vmul.f32 %v320, 1.442695
    %v347 = vpow.pop %v346
    %v348 = vmul.f32 %v321, 1.442695
    %v349 = vpow.pop %v348
    %v350 = vmul.f32 %v322, 1.442695
    %v351 = vpow.pop %v350
    %v352 = vmul.f32 %v323, 1.442695
    %v353 = vpow.pop %v352
    %v354 = vmul.f32 %v324, 1.442695
    %v355 = vpow.pop %v354
    %v356 = vmul.f32 %v325, 1.442695
    %v357 = vpow.pop %v356
    %v358 = vadd.f32 %v327, 1.0
    %v359 = vadd.f32 %v329, 1.0
    %v360 = vadd.f32 %v331, 1.0
    %v361 = vadd.f32 %v333, 1.0
    %v362 = vadd.f32 %v335, 1.0
    %v363 = vadd.f32 %v337, 1.0
    %v364 = vadd.f32 %v339, 1.0
    %v365 = vadd.f32 %v341, 1.0
    %v366 = vadd.f32 %v343, 1.0
    %v367 = vadd.f32 %v345, 1.0
    %v368 = vadd.f32 %v347, 1.0
    %v369 = vadd.f32 %v349, 1.0
    %v370 = vadd.f32 %v351, 1.0
    %v371 = vadd.f32 %v353, 1.0
    %v372 = vadd.f32 %v355, 1.0
    %v373 = vadd.f32 %v357, 1.0
    %v374 = vrcp.pop %v358
    %v375 = vmul.f32 %v294, %v374
    %v376 = vrcp.pop %v359
    %v377 = vmul.f32 %v295, %v376
    %v378 = vrcp.pop %v360
    %v379 = vmul.f32 %v296, %v378
    %v380 = vrcp.pop %v361
    %v381 = vmul.f32 %v297, %v380
    %v382 = vrcp.pop %v362
    %v383 = vmul.f32 %v298, %v382
    %v384 = vrcp.pop %v363
    %v385 = vmul.f32 %v299, %v384
    %v386 = vrcp.pop %v364
    %v387 = vmul.f32 %v300, %v386
    %v388 = vrcp.pop %v365
    %v389 = vmul.f32 %v301, %v388
    %v390 = vrcp.pop %v366
    %v391 = vmul.f32 %v302, %v390
    %v392 = vrcp.pop %v367
    %v393 = vmul.f32 %v303, %v392
    %v394 = vrcp.pop %v368
    %v395 = vmul.f32 %v304, %v394
    %v396 = vrcp.pop %v369
    %v397 = vmul.f32 %v305, %v396
    %v398 = vrcp.pop %v370
    %v399 = vmul.f32 %v306, %v398
    %v400 = vrcp.pop %v371
    %v401 = vmul.f32 %v307, %v400
    %v402 = vrcp.pop %v372
    %v403 = vmul.f32 %v308, %v402
    %v404 = vrcp.pop %v373
    %v405 = vmul.f32 %v309, %v404
    %v406 = vmul.f32 %v278, %v375
    %v407 = vmul.f32 %v279, %v377
    %v408 = vmul.f32 %v280, %v379
    %v409 = vmul.f32 %v281, %v381
    %v410 = vmul.f32 %v282, %v383
    %v411 = vmul.f32 %v283, %v385
    %v412 = vmul.f32 %v284, %v387
    %v413 = vmul.f32 %v285, %v389
    %v414 = vmul.f32 %v286, %v391
    %v415 = vmul.f32 %v287, %v393
    %v416 = vmul.f32 %v288, %v395
    %v417 = vmul.f32 %v289, %v397
    %v418 = vmul.f32 %v290, %v399
    %v419 = vmul.f32 %v291, %v401
    %v420 = vmul.f32 %v292, %v403
    %v421 = vmul.f32 %v293, %v405
    %v422 = vpack.c.bf16 %v407, %v406
    %v423 = vpack.c.bf16 %v409, %v408
    %v424 = vpack.c.bf16 %v411, %v410
    %v425 = vpack.c.bf16 %v413, %v412
    %v426 = vpack.c.bf16 %v415, %v414
    %v427 = vpack.c.bf16 %v417, %v416
    %v428 = vpack.c.bf16 %v419, %v418
    %v429 = vpack.c.bf16 %v421, %v420
    %v430 = vld [vmem:[%s4] sm:$0xf]
    %v431 = vld [vmem:[%s4 + $0x4] sm:$0xf]
    %v432 = vld [vmem:[%s4 + $0x8] sm:$0xf]
    %v433 = vld [vmem:[%s4 + $0xc] sm:$0xf]
    %v434 = vld [vmem:[%s4 + $0x10] sm:$0xf]
    %v435 = vld [vmem:[%s4 + $0x14] sm:$0xf]
    %v436 = vld [vmem:[%s4 + $0x18] sm:$0xf]
    %v437 = vld [vmem:[%s4 + $0x1c] sm:$0xf]
    %v446 = vunpack.c.l.b16 %v430
    %v447 = vunpack.c.l.b16 %v431
    %v448 = vunpack.c.l.b16 %v432
    %v449 = vunpack.c.l.b16 %v433
    %v450 = vunpack.c.l.b16 %v434
    %v451 = vunpack.c.l.b16 %v435
    %v452 = vunpack.c.l.b16 %v436
    %v453 = vunpack.c.l.b16 %v437
    %v454 = vpack.c.b16 %v447, %v446
    %v455 = vpack.c.b16 %v449, %v448
    %v456 = vpack.c.b16 %v451, %v450
    %v457 = vpack.c.b16 %v453, %v452
    %v463 = vsel %vm38, %v422, 0
    %v466 = vsel %vm38, %v423, 0
    %v469 = vsel %vm38, %v424, 0
    %v472 = vsel %vm38, %v425, 0
    %v475 = vsel %vm38, %v426, 0
    %v478 = vsel %vm38, %v427, 0
    %v481 = vsel %vm38, %v428, 0
    %v484 = vsel %vm38, %v429, 0
    %486 = vmatprep.subr.bf16.mxu0 0
    %487 = vmatpush1.bf16.msra.mxu0 %v454
    %488 = vmatprep.subr.bf16.mxu0 0
    %489 = vmatpush1.bf16.msra.mxu0 %v455
    %490 = vmatprep.subr.bf16.mxu0 0
    %491 = vmatpush1.bf16.msra.mxu0 %v456
    %492 = vmatprep.subr.bf16.mxu0 0
    %493 = vmatpush1.bf16.msra.mxu0 %v457
    %494 = vmatprep.subr.bf16.mxu0 0
    %495 = vmatpush1.bf16.msra.mxu0 0
    %496 = vmatprep.subr.bf16.mxu0 0
    %497 = vmatpush1.bf16.msra.mxu0 0
    %498 = vmatprep.subr.bf16.mxu0 0
    %499 = vmatpush1.bf16.msra.mxu0 0
    %500 = vmatprep.subr.bf16.mxu0 0
    %501 = vmatpush1.bf16.msra.mxu0 0
    %502 = vmatprep.subr.bf16.mxu0 0
    %503 = vmatpush1.bf16.msra.mxu0 0
    %504 = vmatprep.subr.bf16.mxu0 0
    %505 = vmatpush1.bf16.msra.mxu0 0
    %506 = vmatprep.subr.bf16.mxu0 0
    %507 = vmatpush1.bf16.msra.mxu0 0
    %508 = vmatprep.subr.bf16.mxu0 0
    %509 = vmatpush1.bf16.msra.mxu0 0
    %510 = vmatprep.subr.bf16.mxu0 0
    %511 = vmatpush1.bf16.msra.mxu0 0
    %512 = vmatprep.subr.bf16.mxu0 0
    %513 = vmatpush1.bf16.msra.mxu0 0
    %514 = vmatprep.subr.bf16.mxu0 0
    %515 = vmatpush1.bf16.msra.mxu0 0
    %516 = vmatprep.subr.bf16.mxu0 0
    %517 = vmatpush1.bf16.msra.mxu0 0
    %518 = vmatprep.mubr.bf16.mxu0 0
    %519 = vmatmul.mubr.bf16.gmra.mrb[0].mxu0 %v463
    %v520 = vpop.f32.mrb[0].mxu0
    %v521 = vadd.f32 0.0, %v520
    %v522 = vpop.f32.mrb[0].mxu0
    %v523 = vpop.f32.mrb[0].mxu0
    %v524 = vadd.f32 0.0, %v523
    %v525 = vpop.f32.mrb[0].mxu0
    %526 = vmatprep.mubr.bf16.mxu0 0
    %527 = vmatmul.mubr.bf16.gmra.mrb[0].mxu0 %v466
    %v528 = vpop.f32.mrb[0].mxu0
    %v529 = vadd.f32 0.0, %v528
    %v530 = vpop.f32.mrb[0].mxu0
    %v531 = vpop.f32.mrb[0].mxu0
    %v532 = vadd.f32 0.0, %v531
    %v533 = vpop.f32.mrb[0].mxu0
    %534 = vmatprep.mubr.bf16.mxu0 0
    %535 = vmatmul.mubr.bf16.gmra.mrb[0].mxu0 %v469
    %v536 = vpop.f32.mrb[0].mxu0
    %v537 = vadd.f32 0.0, %v536
    %v538 = vpop.f32.mrb[0].mxu0
    %v539 = vpop.f32.mrb[0].mxu0
    %v540 = vadd.f32 0.0, %v539
    %v541 = vpop.f32.mrb[0].mxu0
    %542 = vmatprep.mubr.bf16.mxu0 0
    %543 = vmatmul.mubr.bf16.gmra.mrb[0].mxu0 %v472
    %v544 = vpop.f32.mrb[0].mxu0
    %v545 = vadd.f32 0.0, %v544
    %v546 = vpop.f32.mrb[0].mxu0
    %v547 = vpop.f32.mrb[0].mxu0
    %v548 = vadd.f32 0.0, %v547
    %v549 = vpop.f32.mrb[0].mxu0
    %550 = vmatprep.mubr.bf16.mxu0 0
    %551 = vmatmul.mubr.bf16.gmra.mrb[0].mxu0 %v475
    %v552 = vpop.f32.mrb[0].mxu0
    %v553 = vadd.f32 0.0, %v552
    %v554 = vpop.f32.mrb[0].mxu0
    %v555 = vpop.f32.mrb[0].mxu0
    %v556 = vadd.f32 0.0, %v555
    %v557 = vpop.f32.mrb[0].mxu0
    %558 = vmatprep.mubr.bf16.mxu0 0
    %559 = vmatmul.mubr.bf16.gmra.mrb[0].mxu0 %v478
    %v560 = vpop.f32.mrb[0].mxu0
    %v561 = vadd.f32 0.0, %v560
    %v562 = vpop.f32.mrb[0].mxu0
    %v563 = vpop.f32.mrb[0].mxu0
    %v564 = vadd.f32 0.0, %v563
    %v565 = vpop.f32.mrb[0].mxu0
    %566 = vmatprep.mubr.bf16.mxu0 0
    %567 = vmatmul.mubr.bf16.gmra.mrb[0].mxu0 %v481
    %v568 = vpop.f32.mrb[0].mxu0
    %v569 = vadd.f32 0.0, %v568
    %v570 = vpop.f32.mrb[0].mxu0
    %v571 = vpop.f32.mrb[0].mxu0
    %v572 = vadd.f32 0.0, %v571
    %v573 = vpop.f32.mrb[0].mxu0
    %574 = vmatprep.mubr.bf16.mxu0 0
    %575 = vmatmul.mubr.bf16.gmra.mrb[0].mxu0 %v484
    %v576 = vpop.f32.mrb[0].mxu0
    %v577 = vadd.f32 0.0, %v576
    %v578 = vpop.f32.mrb[0].mxu0
    %v579 = vpop.f32.mrb[0].mxu0
    %v580 = vadd.f32 0.0, %v579
    %v581 = vpop.f32.mrb[0].mxu0
    %582 = vdwg.mxu0
    %583 = vst [vmem:[#allocation2] sm:$0xff] %v521
    %584 = vst [vmem:[#allocation2 + $0x8] sm:$0xff] %v524
    %585 = vst [vmem:[#allocation2 + $0x10] sm:$0xff] %v529
    %586 = vst [vmem:[#allocation2 + $0x18] sm:$0xff] %v532
    %587 = vst [vmem:[#allocation2 + $0x20] sm:$0xff] %v537
    %588 = vst [vmem:[#allocation2 + $0x28] sm:$0xff] %v540
    %589 = vst [vmem:[#allocation2 + $0x30] sm:$0xff] %v545
    %590 = vst [vmem:[#allocation2 + $0x38] sm:$0xff] %v548
    %591 = vst [vmem:[#allocation2 + $0x40] sm:$0xff] %v553
    %592 = vst [vmem:[#allocation2 + $0x48] sm:$0xff] %v556
    %593 = vst [vmem:[#allocation2 + $0x50] sm:$0xff] %v561
    %594 = vst [vmem:[#allocation2 + $0x58] sm:$0xff] %v564
    %595 = vst [vmem:[#allocation2 + $0x60] sm:$0xff] %v569
    %596 = vst [vmem:[#allocation2 + $0x68] sm:$0xff] %v572
    %597 = vst [vmem:[#allocation2 + $0x70] sm:$0xff] %v577
    %598 = vst [vmem:[#allocation2 + $0x78] sm:$0xff] %v580
    // Predicated region
    $region22: #{_lambda_.9} parent=1 // pred_check
      _
    $region23: #{_lambda_.9} parent=1 // pred_check_branch
      %600 = sbr.rel (0) target = $region25
    $region24: #{_lambda_.9} parent=1 // pred_region
      %s602 = ssub.s32 2048, 2048
      %603 = vsyncadd [#allocation3], %s602
      %s604 = sshll.u32 [#allocation2], 4
      %s605 = int_to_ptr.vmem [resolvable:$true] %s604
      %610 = dma.vmem_to_hbm [thread:$0]  %s605, 2048, %s5, [#allocation3], 128, 128, 8
    $region25: #{_lambda_.9} parent=1 // pred_fallthru
      _
    // Predicated region
    $region26: #{_lambda_.9} parent=1 // pred_check
      _
    $region27: #{_lambda_.9} parent=1 // pred_check_branch
      %612 = sbr.rel (0) target = $region29
    $region28: #{_lambda_.9} parent=1 // pred_region
      %613 = dma.done [#allocation3], 2048
    $region29: #{_lambda_.9} parent=1 // pred_fallthru
      _
    %614 = vsyncpa [#allocation3], 1

</llo_original>
